<compile_context>
chip_gen: v6e
topology: v6e:2x2x1
jax: 0.10.0
libtpu: 0.0.40
codegen_flags: <defaults>
</compile_context>

<pallas_src>
import functools

import jax
import jax.numpy as jnp
from jax.experimental import pallas as pl
from jax.experimental.pallas import tpu as pltpu


# ------------------------------ Pallas kernel -------------------------------

def _attention_network_kernel(
    # inputs
    x_ref,      # (B*N, F)   f32  input features, zero-padded to F lanes
    bias_ref,   # (B, N)     f32  additive key mask bias (0 present / -1e9 absent)
    perm_ref,   # (B*N, B*N) f32  block-diag row permutation (scramble order)
    w_ref,      # (8, F, F)  bf16 packed square weights
                #            [we1, we2, we3, wc, wo1, wo2, wo3, wp_pad]
    wqkv_ref,   # (F, 3F)    bf16 fused Q|K|V projection weights
    b_ref,      # (7, F)     f32  packed biases [be1,be2,be3,bo1,bo2,bo3,bp_pad]
    # outputs
    out_ref,    # (B*N, F)   f32  lane-dense (padded) network output
    # scratch
    vc_ref,     # (B*N, F)   f32  scrambled attention values (fully overwritten)
    *, batch: int, entities: int, heads: int,
):
    B, N, H = batch, entities, heads
    F = w_ref.shape[1]
    Fh = F // H
    r = N // H                      # rows of the scramble each head produces
    scale = 1.0 / float(Fh) ** 0.5

    def dot_bf16(a_f32, w_bf16):
        # bf16 x bf16 -> f32 accumulate on the MXU
        return jnp.dot(a_f32.astype(jnp.bfloat16), w_bf16,
                       preferred_element_type=jnp.float32)

    def mlp_layer(a, wi, bi):
        return jnp.maximum(dot_bf16(a, w_ref[wi]) + b_ref[bi:bi + 1, :], 0.0)

    # ---- shared embedding MLP (Linear + ReLU, x3) applied to every entity ----
    x = x_ref[...]
    h1 = mlp_layer(x, 0, 0)
    h2 = mlp_layer(h1, 1, 1)
    input_all = mlp_layer(h2, 2, 2)                       # (B*N, F) f32

    # ---- fused Q|K|V projection (bias-free) ----
    qkv = dot_bf16(input_all, wqkv_ref[...])              # (B*N, 3F) f32
    q = qkv[:, :F]
    k = qkv[:, F:2 * F]
    v = qkv[:, 2 * F:]

    # Pre-permute Q's entity rows (per batch) so each head's attention output
    # already emerges in torch's scrambled reshape order (softmax/mask are
    # row-independent, so permuting query rows just permutes output rows).
    q = jnp.dot(perm_ref[...], q, preferred_element_type=jnp.float32)

    # ---- scaled dot-product attention, per (batch, head); B*H small & static ----
    for b in range(B):
        bias_b = bias_ref[b:b + 1, :]                     # (1, N)
        q_b = q[b * N:(b + 1) * N, :]
        k_b = k[b * N:(b + 1) * N, :]
        v_b = v[b * N:(b + 1) * N, :]
        for h in range(H):
            c0, c1 = h * Fh, (h + 1) * Fh
            q_bh, k_bh, v_bh = q_b[:, c0:c1], k_b[:, c0:c1], v_b[:, c0:c1]
            s = jax.lax.dot_general(
                q_bh, k_bh, (((1,), (1,)), ((), ())),
                preferred_element_type=jnp.float32) * scale          # (N, N)
            s = s + bias_b                                 # -1e9 on absent keys
            m = jnp.max(s, axis=-1, keepdims=True)
            e = jnp.exp(s - m)
            p = e * pl.reciprocal(jnp.sum(e, axis=-1, keepdims=True), approx=True)
            o = jnp.dot(p, v_bh, preferred_element_type=jnp.float32)  # (N, Fh)
            # o's rows are already in scrambled order (row m*r+j == torch row
            # j*H+m); the (N, Fh)->(r, F) reshape is just r contiguous row
            # groups concatenated along lanes.
            block = jnp.concatenate(
                [o[mm * r:(mm + 1) * r, :] for mm in range(H)], axis=1)  # (r, F)
            vc_ref[b * N + h * r: b * N + (h + 1) * r, :] = block
    # Every row of vc_ref is written above (H blocks of r rows per batch cover
    # all N rows), so no stale VMEM is ever read back.

    # ---- attention_combine + residual, halved ----
    att = (dot_bf16(vc_ref[...], w_ref[3]) + input_all) * 0.5

    # ---- output MLP (Linear + ReLU x3, then lane-padded predict head) ----
    g1 = mlp_layer(att, 4, 3)
    g2 = mlp_layer(g1, 5, 4)
    g3 = mlp_layer(g2, 6, 5)
    out_ref[...] = (dot_bf16(g3, w_ref[7]) + b_ref[6:7, :]).astype(out_ref.dtype)


# ------------------------------ JAX wrapper ---------------------------------

def attention_network_forward(params, x, *, heads, out_features, presence_idx=0):
    """AttentionNetwork.forward: split_input -> embedding -> SelfAttention -> output MLP."""
    B, N, Fin = x.shape
    F = params["wq"].shape[0]
    H = heads
    assert F % H == 0, "feature_size must be divisible by heads"
    assert N % H == 0, "this kernel's scramble path needs entities % heads == 0"
    r = N // H

    x = x.astype(jnp.float32)
    # Pad per-entity features to F lanes (extra weight rows are zero).
    x_pad = jnp.zeros((B * N, F), jnp.float32).at[:, :Fin].set(x.reshape(B * N, Fin))
    # split_input(): additive bias, -1e9 where presence feature < 0.5 (absent).
    mask_bias = jnp.where(x[:, :, presence_idx] < 0.5, -1e9, 0.0).astype(jnp.float32)

    # Block-diagonal row permutation implementing torch's (B,H,N,Fh)->(B,N,F)
    # scramble: within each batch, new row i = old row sigma(i), sigma(m*r+j)=j*H+m.
    perm_cols = []
    for b in range(B):
        for i in range(N):
            m_, j_ = divmod(i, r)
            perm_cols.append(b * N + j_ * H + m_)
    perm = jnp.zeros((B * N, B * N), jnp.float32).at[
        jnp.arange(B * N), jnp.array(perm_cols)].set(1.0)

    # ---- pack weights (bf16) and biases (f32) into a few large operands ----
    we1_pad = jnp.zeros((F, F), jnp.float32).at[:Fin, :].set(params["we1"])
    wp_pad = jnp.zeros((F, F), jnp.float32).at[:, :out_features].set(params["wp"])
    bp_pad = jnp.zeros((F,), jnp.float32).at[:out_features].set(params["bp"])

    w_pack = jnp.stack(
        [we1_pad, params["we2"], params["we3"], params["wc"],
         params["wo1"], params["wo2"], params["wo3"], wp_pad]
    ).astype(jnp.bfloat16)                                         # (8, F, F)
    wqkv = jnp.concatenate(
        [params["wq"], params["wk"], params["wv"]], axis=1
    ).astype(jnp.bfloat16)                                         # (F, 3F)
    b_pack = jnp.stack(
        [params["be1"], params["be2"], params["be3"],
         params["bo1"], params["bo2"], params["bo3"], bp_pad]
    ).astype(jnp.float32)                                          # (7, F)

    operands = (x_pad, mask_bias, perm, w_pack, wqkv, b_pack)

    def _vmem_spec(a):
        return pl.BlockSpec(a.shape, lambda: (0,) * a.ndim,
                            memory_space=pltpu.MemorySpace.VMEM)

    kernel = functools.partial(_attention_network_kernel,
                               batch=B, entities=N, heads=H)

    y_pad = pl.pallas_call(
        kernel,
        out_shape=jax.ShapeDtypeStruct((B * N, F), jnp.float32),
        in_specs=[_vmem_spec(a) for a in operands],
        out_specs=pl.BlockSpec((B * N, F), lambda: (0, 0),
                               memory_space=pltpu.MemorySpace.VMEM),
        scratch_shapes=[pltpu.VMEM((B * N, F), jnp.float32)],
    )(*operands)

    # Head columns >= out_features are zero-padded (lane-dense store); drop them.
    return y_pad[:, :out_features].reshape(B, N, out_features)


# ------------------------------ Param init ----------------------------------

def xavier_uniform(key, fan_in, fan_out, dtype=jnp.float32):
    """torch.nn.init.xavier_uniform_ equivalent, stored as (in, out)."""
    limit = (6.0 / (fan_in + fan_out)) ** 0.5
    return jax.random.uniform(key, (fan_in, fan_out), dtype, -limit, limit)


def init_attention_network_params(key, in_features, feature_size, out_features):
    F = feature_size
    ks = jax.random.split(key, 11)
    zeros = lambda: jnp.zeros((F,), jnp.float32)
    return {
        # embedding MLP: in -> F -> F -> F (biases zero, per _init_weights)
        "we1": xavier_uniform(ks[0], in_features, F), "be1": zeros(),
        "we2": xavier_uniform(ks[1], F, F), "be2": zeros(),
        "we3": xavier_uniform(ks[2], F, F), "be3": zeros(),
        # SelfAttention (bias-free)
        "wq": xavier_uniform(ks[3], F, F),
        "wk": xavier_uniform(ks[4], F, F),
        "wv": xavier_uniform(ks[5], F, F),
        "wc": xavier_uniform(ks[6], F, F),
        # output MLP: F -> F -> F -> F -> out
        "wo1": xavier_uniform(ks[7], F, F), "bo1": zeros(),
        "wo2": xavier_uniform(ks[8], F, F), "bo2": zeros(),
        "wo3": xavier_uniform(ks[9], F, F), "bo3": zeros(),
        "wp": xavier_uniform(ks[10], F, out_features),
        "bp": jnp.zeros((out_features,), jnp.float32),
    }


# --------------------------------- Main --------------------------------------

if __name__ == "__main__":
    key = jax.random.PRNGKey(0)
    k_params, k_x = jax.random.split(key)

    # Small config consistent with the module defaults:
    #   per-entity input features = 7, entities = 8 (1 ego + 7 others),
    #   feature_size = 128, heads = 4, out = 5 actions, batch = 2.
    BATCH, ENTITIES, IN_FEATURES = 2, 8, 7
    FEATURE_SIZE, HEADS, OUT = 128, 4, 5

    params = init_attention_network_params(
        k_params, IN_FEATURES, FEATURE_SIZE, OUT)

    x = jax.random.normal(k_x, (BATCH, ENTITIES, IN_FEATURES), dtype=jnp.float32)

    fwd = jax.jit(functools.partial(
        attention_network_forward, heads=HEADS, out_features=OUT, presence_idx=0))

    y = fwd(params, x)
    jax.block_until_ready(y)

    assert y.shape == (BATCH, ENTITIES, OUT), y.shape
    assert y.dtype == jnp.float32
    assert bool(jnp.all(jnp.isfinite(y)))
    print("KERNEL_OK")
</pallas_src>

<mosaic_0001>
module attributes {stable_mosaic.version = 11 : i64} {
  func.func @_attention_network_kernel(%arg0: memref<16x128xf32, #tpu.memory_space<vmem>>, %arg1: memref<2x8xf32, #tpu.memory_space<vmem>>, %arg2: memref<16x16xf32, #tpu.memory_space<vmem>>, %arg3: memref<8x128x128xbf16, #tpu.memory_space<vmem>>, %arg4: memref<128x384xbf16, #tpu.memory_space<vmem>>, %arg5: memref<7x128xf32, #tpu.memory_space<vmem>>, %arg6: memref<16x128xf32, #tpu.memory_space<vmem>>, %arg7: memref<16x128xf32, #tpu.memory_space<vmem>>) attributes {dimension_semantics = [], scalar_prefetch = 0 : i64, scratch_operands = 1 : i64, tpu.core_type = #tpu.core_type<tc>} {
    %c0 = arith.constant 0 : index
    %c0_0 = arith.constant 0 : index
    %0 = vector.load %arg0[%c0, %c0_0] : memref<16x128xf32, #tpu.memory_space<vmem>>, vector<16x128xf32>
    %c0_1 = arith.constant 0 : index
    %c0_2 = arith.constant 0 : index
    %c0_3 = arith.constant 0 : index
    %1 = vector.load %arg3[%c0_1, %c0_2, %c0_3] : memref<8x128x128xbf16, #tpu.memory_space<vmem>>, vector<1x128x128xbf16>
    %2 = vector.shape_cast %1 : vector<1x128x128xbf16> to vector<128x128xbf16>
    %3 = arith.truncf %0 : vector<16x128xf32> to vector<16x128xbf16>
    %cst = arith.constant dense<0.000000e+00> : vector<16x128xf32>
    %4 = tpu.matmul %3, %2, %cst {dimension_numbers = #tpu.dot_dimension_numbers<[1], [0], [0], [1], [0, 0, 1, 1], [], []>} : vector<16x128xbf16>, vector<128x128xbf16>, vector<16x128xf32> -> vector<16x128xf32>
    %c0_4 = arith.constant 0 : index
    %c0_5 = arith.constant 0 : index
    %5 = vector.load %arg5[%c0_4, %c0_5] : memref<7x128xf32, #tpu.memory_space<vmem>>, vector<1x128xf32>
    %6 = vector.broadcast %5 : vector<1x128xf32> to vector<16x128xf32>
    %7 = arith.addf %4, %6 : vector<16x128xf32>
    %cst_6 = arith.constant 0.000000e+00 : f32
    %8 = vector.broadcast %cst_6 : f32 to vector<16x128xf32>
    %9 = arith.maximumf %7, %8 : vector<16x128xf32>
    %c1 = arith.constant 1 : index
    %c0_7 = arith.constant 0 : index
    %c0_8 = arith.constant 0 : index
    %10 = vector.load %arg3[%c1, %c0_7, %c0_8] : memref<8x128x128xbf16, #tpu.memory_space<vmem>>, vector<1x128x128xbf16>
    %11 = vector.shape_cast %10 : vector<1x128x128xbf16> to vector<128x128xbf16>
    %12 = arith.truncf %9 : vector<16x128xf32> to vector<16x128xbf16>
    %cst_9 = arith.constant dense<0.000000e+00> : vector<16x128xf32>
    %13 = tpu.matmul %12, %11, %cst_9 {dimension_numbers = #tpu.dot_dimension_numbers<[1], [0], [0], [1], [0, 0, 1, 1], [], []>} : vector<16x128xbf16>, vector<128x128xbf16>, vector<16x128xf32> -> vector<16x128xf32>
    %c1_10 = arith.constant 1 : index
    %c0_11 = arith.constant 0 : index
    %14 = vector.load %arg5[%c1_10, %c0_11] : memref<7x128xf32, #tpu.memory_space<vmem>>, vector<1x128xf32>
    %15 = vector.broadcast %14 : vector<1x128xf32> to vector<16x128xf32>
    %16 = arith.addf %13, %15 : vector<16x128xf32>
    %cst_12 = arith.constant 0.000000e+00 : f32
    %17 = vector.broadcast %cst_12 : f32 to vector<16x128xf32>
    %18 = arith.maximumf %16, %17 : vector<16x128xf32>
    %c2 = arith.constant 2 : index
    %c0_13 = arith.constant 0 : index
    %c0_14 = arith.constant 0 : index
    %19 = vector.load %arg3[%c2, %c0_13, %c0_14] : memref<8x128x128xbf16, #tpu.memory_space<vmem>>, vector<1x128x128xbf16>
    %20 = vector.shape_cast %19 : vector<1x128x128xbf16> to vector<128x128xbf16>
    %21 = arith.truncf %18 : vector<16x128xf32> to vector<16x128xbf16>
    %cst_15 = arith.constant dense<0.000000e+00> : vector<16x128xf32>
    %22 = tpu.matmul %21, %20, %cst_15 {dimension_numbers = #tpu.dot_dimension_numbers<[1], [0], [0], [1], [0, 0, 1, 1], [], []>} : vector<16x128xbf16>, vector<128x128xbf16>, vector<16x128xf32> -> vector<16x128xf32>
    %c2_16 = arith.constant 2 : index
    %c0_17 = arith.constant 0 : index
    %23 = vector.load %arg5[%c2_16, %c0_17] : memref<7x128xf32, #tpu.memory_space<vmem>>, vector<1x128xf32>
    %24 = vector.broadcast %23 : vector<1x128xf32> to vector<16x128xf32>
    %25 = arith.addf %22, %24 : vector<16x128xf32>
    %cst_18 = arith.constant 0.000000e+00 : f32
    %26 = vector.broadcast %cst_18 : f32 to vector<16x128xf32>
    %27 = arith.maximumf %25, %26 : vector<16x128xf32>
    %c0_19 = arith.constant 0 : index
    %c0_20 = arith.constant 0 : index
    %28 = vector.load %arg4[%c0_19, %c0_20] : memref<128x384xbf16, #tpu.memory_space<vmem>>, vector<128x384xbf16>
    %29 = arith.truncf %27 : vector<16x128xf32> to vector<16x128xbf16>
    %cst_21 = arith.constant dense<0.000000e+00> : vector<16x384xf32>
    %30 = tpu.matmul %29, %28, %cst_21 {dimension_numbers = #tpu.dot_dimension_numbers<[1], [0], [0], [1], [0, 0, 1, 1], [], []>} : vector<16x128xbf16>, vector<128x384xbf16>, vector<16x384xf32> -> vector<16x384xf32>
    %31 = vector.extract_strided_slice %30 {offsets = [0, 0], sizes = [16, 128], strides = [1, 1]} : vector<16x384xf32> to vector<16x128xf32>
    %32 = vector.extract_strided_slice %30 {offsets = [0, 128], sizes = [16, 128], strides = [1, 1]} : vector<16x384xf32> to vector<16x128xf32>
    %33 = vector.extract_strided_slice %30 {offsets = [0, 256], sizes = [16, 128], strides = [1, 1]} : vector<16x384xf32> to vector<16x128xf32>
    %c0_22 = arith.constant 0 : index
    %c0_23 = arith.constant 0 : index
    %34 = vector.load %arg2[%c0_22, %c0_23] : memref<16x16xf32, #tpu.memory_space<vmem>>, vector<16x16xf32>
    %cst_24 = arith.constant dense<0.000000e+00> : vector<16x128xf32>
    %35 = tpu.matmul %34, %31, %cst_24 {dimension_numbers = #tpu.dot_dimension_numbers<[1], [0], [0], [1], [0, 0, 1, 1], [], []>} : vector<16x16xf32>, vector<16x128xf32>, vector<16x128xf32> -> vector<16x128xf32>
    %c0_25 = arith.constant 0 : index
    %c0_26 = arith.constant 0 : index
    %36 = vector.load %arg1[%c0_25, %c0_26] : memref<2x8xf32, #tpu.memory_space<vmem>>, vector<1x8xf32>
    %37 = vector.extract_strided_slice %35 {offsets = [0, 0], sizes = [8, 128], strides = [1, 1]} : vector<16x128xf32> to vector<8x128xf32>
    %38 = vector.extract_strided_slice %32 {offsets = [0, 0], sizes = [8, 128], strides = [1, 1]} : vector<16x128xf32> to vector<8x128xf32>
    %39 = vector.extract_strided_slice %33 {offsets = [0, 0], sizes = [8, 128], strides = [1, 1]} : vector<16x128xf32> to vector<8x128xf32>
    %40 = vector.extract_strided_slice %37 {offsets = [0, 0], sizes = [8, 32], strides = [1, 1]} : vector<8x128xf32> to vector<8x32xf32>
    %41 = vector.extract_strided_slice %38 {offsets = [0, 0], sizes = [8, 32], strides = [1, 1]} : vector<8x128xf32> to vector<8x32xf32>
    %42 = vector.extract_strided_slice %39 {offsets = [0, 0], sizes = [8, 32], strides = [1, 1]} : vector<8x128xf32> to vector<8x32xf32>
    %cst_27 = arith.constant dense<0.000000e+00> : vector<8x8xf32>
    %43 = tpu.matmul %40, %41, %cst_27 {dimension_numbers = #tpu.dot_dimension_numbers<[1], [1], [0], [0], [0, 0, 1, 0], [], []>} : vector<8x32xf32>, vector<8x32xf32>, vector<8x8xf32> -> vector<8x8xf32>
    %cst_28 = arith.constant 0.176776692 : f32
    %44 = vector.broadcast %cst_28 : f32 to vector<8x8xf32>
    %45 = arith.mulf %43, %44 : vector<8x8xf32>
    %46 = vector.broadcast %36 : vector<1x8xf32> to vector<8x8xf32>
    %47 = arith.addf %45, %46 : vector<8x8xf32>
    %cst_29 = arith.constant dense<0xFF800000> : vector<8xf32>
    %48 = vector.multi_reduction <maximumf>, %47, %cst_29 [1] : vector<8x8xf32> to vector<8xf32>
    %49 = vector.shape_cast %48 : vector<8xf32> to vector<8x1xf32>
    %50 = vector.broadcast %49 : vector<8x1xf32> to vector<8x8xf32>
    %51 = arith.subf %47, %50 : vector<8x8xf32>
    %52 = math.exp %51 : vector<8x8xf32>
    %cst_30 = arith.constant dense<0.000000e+00> : vector<8xf32>
    %53 = vector.multi_reduction <add>, %52, %cst_30 [1] : vector<8x8xf32> to vector<8xf32>
    %54 = vector.shape_cast %53 : vector<8xf32> to vector<8x1xf32>
    %55 = tpu.reciprocal %54 {approx = true} : vector<8x1xf32> -> vector<8x1xf32>
    %56 = vector.broadcast %55 : vector<8x1xf32> to vector<8x8xf32>
    %57 = arith.mulf %52, %56 : vector<8x8xf32>
    %cst_31 = arith.constant dense<0.000000e+00> : vector<8x32xf32>
    %58 = tpu.matmul %57, %42, %cst_31 {dimension_numbers = #tpu.dot_dimension_numbers<[1], [0], [0], [1], [0, 0, 1, 1], [], []>} : vector<8x8xf32>, vector<8x32xf32>, vector<8x32xf32> -> vector<8x32xf32>
    %59 = vector.extract_strided_slice %58 {offsets = [0, 0], sizes = [2, 32], strides = [1, 1]} : vector<8x32xf32> to vector<2x32xf32>
    %60 = vector.extract_strided_slice %58 {offsets = [2, 0], sizes = [2, 32], strides = [1, 1]} : vector<8x32xf32> to vector<2x32xf32>
    %61 = vector.extract_strided_slice %58 {offsets = [4, 0], sizes = [2, 32], strides = [1, 1]} : vector<8x32xf32> to vector<2x32xf32>
    %62 = vector.extract_strided_slice %58 {offsets = [6, 0], sizes = [2, 32], strides = [1, 1]} : vector<8x32xf32> to vector<2x32xf32>
    %63 = tpu.concatenate %59, %60, %61, %62 in 1 : vector<2x32xf32>, vector<2x32xf32>, vector<2x32xf32>, vector<2x32xf32> -> vector<2x128xf32>
    %c0_32 = arith.constant 0 : index
    %c0_33 = arith.constant 0 : index
    %64 = vector.load %arg7[%c0_32, %c0_33] : memref<16x128xf32, #tpu.memory_space<vmem>>, vector<2x128xf32>
    tpu.vector_store %arg7[%c0_32, %c0_33], %63 {strides = array<i32>} : memref<16x128xf32, #tpu.memory_space<vmem>>, vector<2x128xf32>,
    %65 = vector.extract_strided_slice %37 {offsets = [0, 32], sizes = [8, 32], strides = [1, 1]} : vector<8x128xf32> to vector<8x32xf32>
    %66 = vector.extract_strided_slice %38 {offsets = [0, 32], sizes = [8, 32], strides = [1, 1]} : vector<8x128xf32> to vector<8x32xf32>
    %67 = vector.extract_strided_slice %39 {offsets = [0, 32], sizes = [8, 32], strides = [1, 1]} : vector<8x128xf32> to vector<8x32xf32>
    %cst_34 = arith.constant dense<0.000000e+00> : vector<8x8xf32>
    %68 = tpu.matmul %65, %66, %cst_34 {dimension_numbers = #tpu.dot_dimension_numbers<[1], [1], [0], [0], [0, 0, 1, 0], [], []>} : vector<8x32xf32>, vector<8x32xf32>, vector<8x8xf32> -> vector<8x8xf32>
    %cst_35 = arith.constant 0.176776692 : f32
    %69 = vector.broadcast %cst_35 : f32 to vector<8x8xf32>
    %70 = arith.mulf %68, %69 : vector<8x8xf32>
    %71 = vector.broadcast %36 : vector<1x8xf32> to vector<8x8xf32>
    %72 = arith.addf %70, %71 : vector<8x8xf32>
    %cst_36 = arith.constant dense<0xFF800000> : vector<8xf32>
    %73 = vector.multi_reduction <maximumf>, %72, %cst_36 [1] : vector<8x8xf32> to vector<8xf32>
    %74 = vector.shape_cast %73 : vector<8xf32> to vector<8x1xf32>
    %75 = vector.broadcast %74 : vector<8x1xf32> to vector<8x8xf32>
    %76 = arith.subf %72, %75 : vector<8x8xf32>
    %77 = math.exp %76 : vector<8x8xf32>
    %cst_37 = arith.constant dense<0.000000e+00> : vector<8xf32>
    %78 = vector.multi_reduction <add>, %77, %cst_37 [1] : vector<8x8xf32> to vector<8xf32>
    %79 = vector.shape_cast %78 : vector<8xf32> to vector<8x1xf32>
    %80 = tpu.reciprocal %79 {approx = true} : vector<8x1xf32> -> vector<8x1xf32>
    %81 = vector.broadcast %80 : vector<8x1xf32> to vector<8x8xf32>
    %82 = arith.mulf %77, %81 : vector<8x8xf32>
    %cst_38 = arith.constant dense<0.000000e+00> : vector<8x32xf32>
    %83 = tpu.matmul %82, %67, %cst_38 {dimension_numbers = #tpu.dot_dimension_numbers<[1], [0], [0], [1], [0, 0, 1, 1], [], []>} : vector<8x8xf32>, vector<8x32xf32>, vector<8x32xf32> -> vector<8x32xf32>
    %84 = vector.extract_strided_slice %83 {offsets = [0, 0], sizes = [2, 32], strides = [1, 1]} : vector<8x32xf32> to vector<2x32xf32>
    %85 = vector.extract_strided_slice %83 {offsets = [2, 0], sizes = [2, 32], strides = [1, 1]} : vector<8x32xf32> to vector<2x32xf32>
    %86 = vector.extract_strided_slice %83 {offsets = [4, 0], sizes = [2, 32], strides = [1, 1]} : vector<8x32xf32> to vector<2x32xf32>
    %87 = vector.extract_strided_slice %83 {offsets = [6, 0], sizes = [2, 32], strides = [1, 1]} : vector<8x32xf32> to vector<2x32xf32>
    %88 = tpu.concatenate %84, %85, %86, %87 in 1 : vector<2x32xf32>, vector<2x32xf32>, vector<2x32xf32>, vector<2x32xf32> -> vector<2x128xf32>
    %c2_39 = arith.constant 2 : index
    %c0_40 = arith.constant 0 : index
    %89 = vector.load %arg7[%c2_39, %c0_40] : memref<16x128xf32, #tpu.memory_space<vmem>>, vector<2x128xf32>
    tpu.vector_store %arg7[%c2_39, %c0_40], %88 {strides = array<i32>} : memref<16x128xf32, #tpu.memory_space<vmem>>, vector<2x128xf32>,
    %90 = vector.extract_strided_slice %37 {offsets = [0, 64], sizes = [8, 32], strides = [1, 1]} : vector<8x128xf32> to vector<8x32xf32>
    %91 = vector.extract_strided_slice %38 {offsets = [0, 64], sizes = [8, 32], strides = [1, 1]} : vector<8x128xf32> to vector<8x32xf32>
    %92 = vector.extract_strided_slice %39 {offsets = [0, 64], sizes = [8, 32], strides = [1, 1]} : vector<8x128xf32> to vector<8x32xf32>
    %cst_41 = arith.constant dense<0.000000e+00> : vector<8x8xf32>
    %93 = tpu.matmul %90, %91, %cst_41 {dimension_numbers = #tpu.dot_dimension_numbers<[1], [1], [0], [0], [0, 0, 1, 0], [], []>} : vector<8x32xf32>, vector<8x32xf32>, vector<8x8xf32> -> vector<8x8xf32>
    %cst_42 = arith.constant 0.176776692 : f32
    %94 = vector.broadcast %cst_42 : f32 to vector<8x8xf32>
    %95 = arith.mulf %93, %94 : vector<8x8xf32>
    %96 = vector.broadcast %36 : vector<1x8xf32> to vector<8x8xf32>
    %97 = arith.addf %95, %96 : vector<8x8xf32>
    %cst_43 = arith.constant dense<0xFF800000> : vector<8xf32>
    %98 = vector.multi_reduction <maximumf>, %97, %cst_43 [1] : vector<8x8xf32> to vector<8xf32>
    %99 = vector.shape_cast %98 : vector<8xf32> to vector<8x1xf32>
    %100 = vector.broadcast %99 : vector<8x1xf32> to vector<8x8xf32>
    %101 = arith.subf %97, %100 : vector<8x8xf32>
    %102 = math.exp %101 : vector<8x8xf32>
    %cst_44 = arith.constant dense<0.000000e+00> : vector<8xf32>
    %103 = vector.multi_reduction <add>, %102, %cst_44 [1] : vector<8x8xf32> to vector<8xf32>
    %104 = vector.shape_cast %103 : vector<8xf32> to vector<8x1xf32>
    %105 = tpu.reciprocal %104 {approx = true} : vector<8x1xf32> -> vector<8x1xf32>
    %106 = vector.broadcast %105 : vector<8x1xf32> to vector<8x8xf32>
    %107 = arith.mulf %102, %106 : vector<8x8xf32>
    %cst_45 = arith.constant dense<0.000000e+00> : vector<8x32xf32>
    %108 = tpu.matmul %107, %92, %cst_45 {dimension_numbers = #tpu.dot_dimension_numbers<[1], [0], [0], [1], [0, 0, 1, 1], [], []>} : vector<8x8xf32>, vector<8x32xf32>, vector<8x32xf32> -> vector<8x32xf32>
    %109 = vector.extract_strided_slice %108 {offsets = [0, 0], sizes = [2, 32], strides = [1, 1]} : vector<8x32xf32> to vector<2x32xf32>
    %110 = vector.extract_strided_slice %108 {offsets = [2, 0], sizes = [2, 32], strides = [1, 1]} : vector<8x32xf32> to vector<2x32xf32>
    %111 = vector.extract_strided_slice %108 {offsets = [4, 0], sizes = [2, 32], strides = [1, 1]} : vector<8x32xf32> to vector<2x32xf32>
    %112 = vector.extract_strided_slice %108 {offsets = [6, 0], sizes = [2, 32], strides = [1, 1]} : vector<8x32xf32> to vector<2x32xf32>
    %113 = tpu.concatenate %109, %110, %111, %112 in 1 : vector<2x32xf32>, vector<2x32xf32>, vector<2x32xf32>, vector<2x32xf32> -> vector<2x128xf32>
    %c4 = arith.constant 4 : index
    %c0_46 = arith.constant 0 : index
    %114 = vector.load %arg7[%c4, %c0_46] : memref<16x128xf32, #tpu.memory_space<vmem>>, vector<2x128xf32>
    tpu.vector_store %arg7[%c4, %c0_46], %113 {strides = array<i32>} : memref<16x128xf32, #tpu.memory_space<vmem>>, vector<2x128xf32>,
    %115 = vector.extract_strided_slice %37 {offsets = [0, 96], sizes = [8, 32], strides = [1, 1]} : vector<8x128xf32> to vector<8x32xf32>
    %116 = vector.extract_strided_slice %38 {offsets = [0, 96], sizes = [8, 32], strides = [1, 1]} : vector<8x128xf32> to vector<8x32xf32>
    %117 = vector.extract_strided_slice %39 {offsets = [0, 96], sizes = [8, 32], strides = [1, 1]} : vector<8x128xf32> to vector<8x32xf32>
    %cst_47 = arith.constant dense<0.000000e+00> : vector<8x8xf32>
    %118 = tpu.matmul %115, %116, %cst_47 {dimension_numbers = #tpu.dot_dimension_numbers<[1], [1], [0], [0], [0, 0, 1, 0], [], []>} : vector<8x32xf32>, vector<8x32xf32>, vector<8x8xf32> -> vector<8x8xf32>
    %cst_48 = arith.constant 0.176776692 : f32
    %119 = vector.broadcast %cst_48 : f32 to vector<8x8xf32>
    %120 = arith.mulf %118, %119 : vector<8x8xf32>
    %121 = vector.broadcast %36 : vector<1x8xf32> to vector<8x8xf32>
    %122 = arith.addf %120, %121 : vector<8x8xf32>
    %cst_49 = arith.constant dense<0xFF800000> : vector<8xf32>
    %123 = vector.multi_reduction <maximumf>, %122, %cst_49 [1] : vector<8x8xf32> to vector<8xf32>
    %124 = vector.shape_cast %123 : vector<8xf32> to vector<8x1xf32>
    %125 = vector.broadcast %124 : vector<8x1xf32> to vector<8x8xf32>
    %126 = arith.subf %122, %125 : vector<8x8xf32>
    %127 = math.exp %126 : vector<8x8xf32>
    %cst_50 = arith.constant dense<0.000000e+00> : vector<8xf32>
    %128 = vector.multi_reduction <add>, %127, %cst_50 [1] : vector<8x8xf32> to vector<8xf32>
    %129 = vector.shape_cast %128 : vector<8xf32> to vector<8x1xf32>
    %130 = tpu.reciprocal %129 {approx = true} : vector<8x1xf32> -> vector<8x1xf32>
    %131 = vector.broadcast %130 : vector<8x1xf32> to vector<8x8xf32>
    %132 = arith.mulf %127, %131 : vector<8x8xf32>
    %cst_51 = arith.constant dense<0.000000e+00> : vector<8x32xf32>
    %133 = tpu.matmul %132, %117, %cst_51 {dimension_numbers = #tpu.dot_dimension_numbers<[1], [0], [0], [1], [0, 0, 1, 1], [], []>} : vector<8x8xf32>, vector<8x32xf32>, vector<8x32xf32> -> vector<8x32xf32>
    %134 = vector.extract_strided_slice %133 {offsets = [0, 0], sizes = [2, 32], strides = [1, 1]} : vector<8x32xf32> to vector<2x32xf32>
    %135 = vector.extract_strided_slice %133 {offsets = [2, 0], sizes = [2, 32], strides = [1, 1]} : vector<8x32xf32> to vector<2x32xf32>
    %136 = vector.extract_strided_slice %133 {offsets = [4, 0], sizes = [2, 32], strides = [1, 1]} : vector<8x32xf32> to vector<2x32xf32>
    %137 = vector.extract_strided_slice %133 {offsets = [6, 0], sizes = [2, 32], strides = [1, 1]} : vector<8x32xf32> to vector<2x32xf32>
    %138 = tpu.concatenate %134, %135, %136, %137 in 1 : vector<2x32xf32>, vector<2x32xf32>, vector<2x32xf32>, vector<2x32xf32> -> vector<2x128xf32>
    %c6 = arith.constant 6 : index
    %c0_52 = arith.constant 0 : index
    %139 = vector.load %arg7[%c6, %c0_52] : memref<16x128xf32, #tpu.memory_space<vmem>>, vector<2x128xf32>
    tpu.vector_store %arg7[%c6, %c0_52], %138 {strides = array<i32>} : memref<16x128xf32, #tpu.memory_space<vmem>>, vector<2x128xf32>,
    %c1_53 = arith.constant 1 : index
    %c0_54 = arith.constant 0 : index
    %140 = vector.load %arg1[%c1_53, %c0_54] : memref<2x8xf32, #tpu.memory_space<vmem>>, vector<1x8xf32>
    %141 = vector.extract_strided_slice %35 {offsets = [8, 0], sizes = [8, 128], strides = [1, 1]} : vector<16x128xf32> to vector<8x128xf32>
    %142 = vector.extract_strided_slice %32 {offsets = [8, 0], sizes = [8, 128], strides = [1, 1]} : vector<16x128xf32> to vector<8x128xf32>
    %143 = vector.extract_strided_slice %33 {offsets = [8, 0], sizes = [8, 128], strides = [1, 1]} : vector<16x128xf32> to vector<8x128xf32>
    %144 = vector.extract_strided_slice %141 {offsets = [0, 0], sizes = [8, 32], strides = [1, 1]} : vector<8x128xf32> to vector<8x32xf32>
    %145 = vector.extract_strided_slice %142 {offsets = [0, 0], sizes = [8, 32], strides = [1, 1]} : vector<8x128xf32> to vector<8x32xf32>
    %146 = vector.extract_strided_slice %143 {offsets = [0, 0], sizes = [8, 32], strides = [1, 1]} : vector<8x128xf32> to vector<8x32xf32>
    %cst_55 = arith.constant dense<0.000000e+00> : vector<8x8xf32>
    %147 = tpu.matmul %144, %145, %cst_55 {dimension_numbers = #tpu.dot_dimension_numbers<[1], [1], [0], [0], [0, 0, 1, 0], [], []>} : vector<8x32xf32>, vector<8x32xf32>, vector<8x8xf32> -> vector<8x8xf32>
    %cst_56 = arith.constant 0.176776692 : f32
    %148 = vector.broadcast %cst_56 : f32 to vector<8x8xf32>
    %149 = arith.mulf %147, %148 : vector<8x8xf32>
    %150 = vector.broadcast %140 : vector<1x8xf32> to vector<8x8xf32>
    %151 = arith.addf %149, %150 : vector<8x8xf32>
    %cst_57 = arith.constant dense<0xFF800000> : vector<8xf32>
    %152 = vector.multi_reduction <maximumf>, %151, %cst_57 [1] : vector<8x8xf32> to vector<8xf32>
    %153 = vector.shape_cast %152 : vector<8xf32> to vector<8x1xf32>
    %154 = vector.broadcast %153 : vector<8x1xf32> to vector<8x8xf32>
    %155 = arith.subf %151, %154 : vector<8x8xf32>
    %156 = math.exp %155 : vector<8x8xf32>
    %cst_58 = arith.constant dense<0.000000e+00> : vector<8xf32>
    %157 = vector.multi_reduction <add>, %156, %cst_58 [1] : vector<8x8xf32> to vector<8xf32>
    %158 = vector.shape_cast %157 : vector<8xf32> to vector<8x1xf32>
    %159 = tpu.reciprocal %158 {approx = true} : vector<8x1xf32> -> vector<8x1xf32>
    %160 = vector.broadcast %159 : vector<8x1xf32> to vector<8x8xf32>
    %161 = arith.mulf %156, %160 : vector<8x8xf32>
    %cst_59 = arith.constant dense<0.000000e+00> : vector<8x32xf32>
    %162 = tpu.matmul %161, %146, %cst_59 {dimension_numbers = #tpu.dot_dimension_numbers<[1], [0], [0], [1], [0, 0, 1, 1], [], []>} : vector<8x8xf32>, vector<8x32xf32>, vector<8x32xf32> -> vector<8x32xf32>
    %163 = vector.extract_strided_slice %162 {offsets = [0, 0], sizes = [2, 32], strides = [1, 1]} : vector<8x32xf32> to vector<2x32xf32>
    %164 = vector.extract_strided_slice %162 {offsets = [2, 0], sizes = [2, 32], strides = [1, 1]} : vector<8x32xf32> to vector<2x32xf32>
    %165 = vector.extract_strided_slice %162 {offsets = [4, 0], sizes = [2, 32], strides = [1, 1]} : vector<8x32xf32> to vector<2x32xf32>
    %166 = vector.extract_strided_slice %162 {offsets = [6, 0], sizes = [2, 32], strides = [1, 1]} : vector<8x32xf32> to vector<2x32xf32>
    %167 = tpu.concatenate %163, %164, %165, %166 in 1 : vector<2x32xf32>, vector<2x32xf32>, vector<2x32xf32>, vector<2x32xf32> -> vector<2x128xf32>
    %c8 = arith.constant 8 : index
    %c0_60 = arith.constant 0 : index
    %168 = vector.load %arg7[%c8, %c0_60] : memref<16x128xf32, #tpu.memory_space<vmem>>, vector<2x128xf32>
    tpu.vector_store %arg7[%c8, %c0_60], %167 {strides = array<i32>} : memref<16x128xf32, #tpu.memory_space<vmem>>, vector<2x128xf32>,
    %169 = vector.extract_strided_slice %141 {offsets = [0, 32], sizes = [8, 32], strides = [1, 1]} : vector<8x128xf32> to vector<8x32xf32>
    %170 = vector.extract_strided_slice %142 {offsets = [0, 32], sizes = [8, 32], strides = [1, 1]} : vector<8x128xf32> to vector<8x32xf32>
    %171 = vector.extract_strided_slice %143 {offsets = [0, 32], sizes = [8, 32], strides = [1, 1]} : vector<8x128xf32> to vector<8x32xf32>
    %cst_61 = arith.constant dense<0.000000e+00> : vector<8x8xf32>
    %172 = tpu.matmul %169, %170, %cst_61 {dimension_numbers = #tpu.dot_dimension_numbers<[1], [1], [0], [0], [0, 0, 1, 0], [], []>} : vector<8x32xf32>, vector<8x32xf32>, vector<8x8xf32> -> vector<8x8xf32>
    %cst_62 = arith.constant 0.176776692 : f32
    %173 = vector.broadcast %cst_62 : f32 to vector<8x8xf32>
    %174 = arith.mulf %172, %173 : vector<8x8xf32>
    %175 = vector.broadcast %140 : vector<1x8xf32> to vector<8x8xf32>
    %176 = arith.addf %174, %175 : vector<8x8xf32>
    %cst_63 = arith.constant dense<0xFF800000> : vector<8xf32>
    %177 = vector.multi_reduction <maximumf>, %176, %cst_63 [1] : vector<8x8xf32> to vector<8xf32>
    %178 = vector.shape_cast %177 : vector<8xf32> to vector<8x1xf32>
    %179 = vector.broadcast %178 : vector<8x1xf32> to vector<8x8xf32>
    %180 = arith.subf %176, %179 : vector<8x8xf32>
    %181 = math.exp %180 : vector<8x8xf32>
    %cst_64 = arith.constant dense<0.000000e+00> : vector<8xf32>
    %182 = vector.multi_reduction <add>, %181, %cst_64 [1] : vector<8x8xf32> to vector<8xf32>
    %183 = vector.shape_cast %182 : vector<8xf32> to vector<8x1xf32>
    %184 = tpu.reciprocal %183 {approx = true} : vector<8x1xf32> -> vector<8x1xf32>
    %185 = vector.broadcast %184 : vector<8x1xf32> to vector<8x8xf32>
    %186 = arith.mulf %181, %185 : vector<8x8xf32>
    %cst_65 = arith.constant dense<0.000000e+00> : vector<8x32xf32>
    %187 = tpu.matmul %186, %171, %cst_65 {dimension_numbers = #tpu.dot_dimension_numbers<[1], [0], [0], [1], [0, 0, 1, 1], [], []>} : vector<8x8xf32>, vector<8x32xf32>, vector<8x32xf32> -> vector<8x32xf32>
    %188 = vector.extract_strided_slice %187 {offsets = [0, 0], sizes = [2, 32], strides = [1, 1]} : vector<8x32xf32> to vector<2x32xf32>
    %189 = vector.extract_strided_slice %187 {offsets = [2, 0], sizes = [2, 32], strides = [1, 1]} : vector<8x32xf32> to vector<2x32xf32>
    %190 = vector.extract_strided_slice %187 {offsets = [4, 0], sizes = [2, 32], strides = [1, 1]} : vector<8x32xf32> to vector<2x32xf32>
    %191 = vector.extract_strided_slice %187 {offsets = [6, 0], sizes = [2, 32], strides = [1, 1]} : vector<8x32xf32> to vector<2x32xf32>
    %192 = tpu.concatenate %188, %189, %190, %191 in 1 : vector<2x32xf32>, vector<2x32xf32>, vector<2x32xf32>, vector<2x32xf32> -> vector<2x128xf32>
    %c10 = arith.constant 10 : index
    %c0_66 = arith.constant 0 : index
    %193 = vector.load %arg7[%c10, %c0_66] : memref<16x128xf32, #tpu.memory_space<vmem>>, vector<2x128xf32>
    tpu.vector_store %arg7[%c10, %c0_66], %192 {strides = array<i32>} : memref<16x128xf32, #tpu.memory_space<vmem>>, vector<2x128xf32>,
    %194 = vector.extract_strided_slice %141 {offsets = [0, 64], sizes = [8, 32], strides = [1, 1]} : vector<8x128xf32> to vector<8x32xf32>
    %195 = vector.extract_strided_slice %142 {offsets = [0, 64], sizes = [8, 32], strides = [1, 1]} : vector<8x128xf32> to vector<8x32xf32>
    %196 = vector.extract_strided_slice %143 {offsets = [0, 64], sizes = [8, 32], strides = [1, 1]} : vector<8x128xf32> to vector<8x32xf32>
    %cst_67 = arith.constant dense<0.000000e+00> : vector<8x8xf32>
    %197 = tpu.matmul %194, %195, %cst_67 {dimension_numbers = #tpu.dot_dimension_numbers<[1], [1], [0], [0], [0, 0, 1, 0], [], []>} : vector<8x32xf32>, vector<8x32xf32>, vector<8x8xf32> -> vector<8x8xf32>
    %cst_68 = arith.constant 0.176776692 : f32
    %198 = vector.broadcast %cst_68 : f32 to vector<8x8xf32>
    %199 = arith.mulf %197, %198 : vector<8x8xf32>
    %200 = vector.broadcast %140 : vector<1x8xf32> to vector<8x8xf32>
    %201 = arith.addf %199, %200 : vector<8x8xf32>
    %cst_69 = arith.constant dense<0xFF800000> : vector<8xf32>
    %202 = vector.multi_reduction <maximumf>, %201, %cst_69 [1] : vector<8x8xf32> to vector<8xf32>
    %203 = vector.shape_cast %202 : vector<8xf32> to vector<8x1xf32>
    %204 = vector.broadcast %203 : vector<8x1xf32> to vector<8x8xf32>
    %205 = arith.subf %201, %204 : vector<8x8xf32>
    %206 = math.exp %205 : vector<8x8xf32>
    %cst_70 = arith.constant dense<0.000000e+00> : vector<8xf32>
    %207 = vector.multi_reduction <add>, %206, %cst_70 [1] : vector<8x8xf32> to vector<8xf32>
    %208 = vector.shape_cast %207 : vector<8xf32> to vector<8x1xf32>
    %209 = tpu.reciprocal %208 {approx = true} : vector<8x1xf32> -> vector<8x1xf32>
    %210 = vector.broadcast %209 : vector<8x1xf32> to vector<8x8xf32>
    %211 = arith.mulf %206, %210 : vector<8x8xf32>
    %cst_71 = arith.constant dense<0.000000e+00> : vector<8x32xf32>
    %212 = tpu.matmul %211, %196, %cst_71 {dimension_numbers = #tpu.dot_dimension_numbers<[1], [0], [0], [1], [0, 0, 1, 1], [], []>} : vector<8x8xf32>, vector<8x32xf32>, vector<8x32xf32> -> vector<8x32xf32>
    %213 = vector.extract_strided_slice %212 {offsets = [0, 0], sizes = [2, 32], strides = [1, 1]} : vector<8x32xf32> to vector<2x32xf32>
    %214 = vector.extract_strided_slice %212 {offsets = [2, 0], sizes = [2, 32], strides = [1, 1]} : vector<8x32xf32> to vector<2x32xf32>
    %215 = vector.extract_strided_slice %212 {offsets = [4, 0], sizes = [2, 32], strides = [1, 1]} : vector<8x32xf32> to vector<2x32xf32>
    %216 = vector.extract_strided_slice %212 {offsets = [6, 0], sizes = [2, 32], strides = [1, 1]} : vector<8x32xf32> to vector<2x32xf32>
    %217 = tpu.concatenate %213, %214, %215, %216 in 1 : vector<2x32xf32>, vector<2x32xf32>, vector<2x32xf32>, vector<2x32xf32> -> vector<2x128xf32>
    %c12 = arith.constant 12 : index
    %c0_72 = arith.constant 0 : index
    %218 = vector.load %arg7[%c12, %c0_72] : memref<16x128xf32, #tpu.memory_space<vmem>>, vector<2x128xf32>
    tpu.vector_store %arg7[%c12, %c0_72], %217 {strides = array<i32>} : memref<16x128xf32, #tpu.memory_space<vmem>>, vector<2x128xf32>,
    %219 = vector.extract_strided_slice %141 {offsets = [0, 96], sizes = [8, 32], strides = [1, 1]} : vector<8x128xf32> to vector<8x32xf32>
    %220 = vector.extract_strided_slice %142 {offsets = [0, 96], sizes = [8, 32], strides = [1, 1]} : vector<8x128xf32> to vector<8x32xf32>
    %221 = vector.extract_strided_slice %143 {offsets = [0, 96], sizes = [8, 32], strides = [1, 1]} : vector<8x128xf32> to vector<8x32xf32>
    %cst_73 = arith.constant dense<0.000000e+00> : vector<8x8xf32>
    %222 = tpu.matmul %219, %220, %cst_73 {dimension_numbers = #tpu.dot_dimension_numbers<[1], [1], [0], [0], [0, 0, 1, 0], [], []>} : vector<8x32xf32>, vector<8x32xf32>, vector<8x8xf32> -> vector<8x8xf32>
    %cst_74 = arith.constant 0.176776692 : f32
    %223 = vector.broadcast %cst_74 : f32 to vector<8x8xf32>
    %224 = arith.mulf %222, %223 : vector<8x8xf32>
    %225 = vector.broadcast %140 : vector<1x8xf32> to vector<8x8xf32>
    %226 = arith.addf %224, %225 : vector<8x8xf32>
    %cst_75 = arith.constant dense<0xFF800000> : vector<8xf32>
    %227 = vector.multi_reduction <maximumf>, %226, %cst_75 [1] : vector<8x8xf32> to vector<8xf32>
    %228 = vector.shape_cast %227 : vector<8xf32> to vector<8x1xf32>
    %229 = vector.broadcast %228 : vector<8x1xf32> to vector<8x8xf32>
    %230 = arith.subf %226, %229 : vector<8x8xf32>
    %231 = math.exp %230 : vector<8x8xf32>
    %cst_76 = arith.constant dense<0.000000e+00> : vector<8xf32>
    %232 = vector.multi_reduction <add>, %231, %cst_76 [1] : vector<8x8xf32> to vector<8xf32>
    %233 = vector.shape_cast %232 : vector<8xf32> to vector<8x1xf32>
    %234 = tpu.reciprocal %233 {approx = true} : vector<8x1xf32> -> vector<8x1xf32>
    %235 = vector.broadcast %234 : vector<8x1xf32> to vector<8x8xf32>
    %236 = arith.mulf %231, %235 : vector<8x8xf32>
    %cst_77 = arith.constant dense<0.000000e+00> : vector<8x32xf32>
    %237 = tpu.matmul %236, %221, %cst_77 {dimension_numbers = #tpu.dot_dimension_numbers<[1], [0], [0], [1], [0, 0, 1, 1], [], []>} : vector<8x8xf32>, vector<8x32xf32>, vector<8x32xf32> -> vector<8x32xf32>
    %238 = vector.extract_strided_slice %237 {offsets = [0, 0], sizes = [2, 32], strides = [1, 1]} : vector<8x32xf32> to vector<2x32xf32>
    %239 = vector.extract_strided_slice %237 {offsets = [2, 0], sizes = [2, 32], strides = [1, 1]} : vector<8x32xf32> to vector<2x32xf32>
    %240 = vector.extract_strided_slice %237 {offsets = [4, 0], sizes = [2, 32], strides = [1, 1]} : vector<8x32xf32> to vector<2x32xf32>
    %241 = vector.extract_strided_slice %237 {offsets = [6, 0], sizes = [2, 32], strides = [1, 1]} : vector<8x32xf32> to vector<2x32xf32>
    %242 = tpu.concatenate %238, %239, %240, %241 in 1 : vector<2x32xf32>, vector<2x32xf32>, vector<2x32xf32>, vector<2x32xf32> -> vector<2x128xf32>
    %c14 = arith.constant 14 : index
    %c0_78 = arith.constant 0 : index
    %243 = vector.load %arg7[%c14, %c0_78] : memref<16x128xf32, #tpu.memory_space<vmem>>, vector<2x128xf32>
    tpu.vector_store %arg7[%c14, %c0_78], %242 {strides = array<i32>} : memref<16x128xf32, #tpu.memory_space<vmem>>, vector<2x128xf32>,
    %c0_79 = arith.constant 0 : index
    %c0_80 = arith.constant 0 : index
    %244 = vector.load %arg7[%c0_79, %c0_80] : memref<16x128xf32, #tpu.memory_space<vmem>>, vector<16x128xf32>
    %c3 = arith.constant 3 : index
    %c0_81 = arith.constant 0 : index
    %c0_82 = arith.constant 0 : index
    %245 = vector.load %arg3[%c3, %c0_81, %c0_82] : memref<8x128x128xbf16, #tpu.memory_space<vmem>>, vector<1x128x128xbf16>
    %246 = vector.shape_cast %245 : vector<1x128x128xbf16> to vector<128x128xbf16>
    %247 = arith.truncf %244 : vector<16x128xf32> to vector<16x128xbf16>
    %cst_83 = arith.constant dense<0.000000e+00> : vector<16x128xf32>
    %248 = tpu.matmul %247, %246, %cst_83 {dimension_numbers = #tpu.dot_dimension_numbers<[1], [0], [0], [1], [0, 0, 1, 1], [], []>} : vector<16x128xbf16>, vector<128x128xbf16>, vector<16x128xf32> -> vector<16x128xf32>
    %249 = arith.addf %248, %27 : vector<16x128xf32>
    %cst_84 = arith.constant 5.000000e-01 : f32
    %250 = vector.broadcast %cst_84 : f32 to vector<16x128xf32>
    %251 = arith.mulf %249, %250 : vector<16x128xf32>
    %c4_85 = arith.constant 4 : index
    %c0_86 = arith.constant 0 : index
    %c0_87 = arith.constant 0 : index
    %252 = vector.load %arg3[%c4_85, %c0_86, %c0_87] : memref<8x128x128xbf16, #tpu.memory_space<vmem>>, vector<1x128x128xbf16>
    %253 = vector.shape_cast %252 : vector<1x128x128xbf16> to vector<128x128xbf16>
    %254 = arith.truncf %251 : vector<16x128xf32> to vector<16x128xbf16>
    %cst_88 = arith.constant dense<0.000000e+00> : vector<16x128xf32>
    %255 = tpu.matmul %254, %253, %cst_88 {dimension_numbers = #tpu.dot_dimension_numbers<[1], [0], [0], [1], [0, 0, 1, 1], [], []>} : vector<16x128xbf16>, vector<128x128xbf16>, vector<16x128xf32> -> vector<16x128xf32>
    %c3_89 = arith.constant 3 : index
    %c0_90 = arith.constant 0 : index
    %256 = vector.load %arg5[%c3_89, %c0_90] : memref<7x128xf32, #tpu.memory_space<vmem>>, vector<1x128xf32>
    %257 = vector.broadcast %256 : vector<1x128xf32> to vector<16x128xf32>
    %258 = arith.addf %255, %257 : vector<16x128xf32>
    %cst_91 = arith.constant 0.000000e+00 : f32
    %259 = vector.broadcast %cst_91 : f32 to vector<16x128xf32>
    %260 = arith.maximumf %258, %259 : vector<16x128xf32>
    %c5 = arith.constant 5 : index
    %c0_92 = arith.constant 0 : index
    %c0_93 = arith.constant 0 : index
    %261 = vector.load %arg3[%c5, %c0_92, %c0_93] : memref<8x128x128xbf16, #tpu.memory_space<vmem>>, vector<1x128x128xbf16>
    %262 = vector.shape_cast %261 : vector<1x128x128xbf16> to vector<128x128xbf16>
    %263 = arith.truncf %260 : vector<16x128xf32> to vector<16x128xbf16>
    %cst_94 = arith.constant dense<0.000000e+00> : vector<16x128xf32>
    %264 = tpu.matmul %263, %262, %cst_94 {dimension_numbers = #tpu.dot_dimension_numbers<[1], [0], [0], [1], [0, 0, 1, 1], [], []>} : vector<16x128xbf16>, vector<128x128xbf16>, vector<16x128xf32> -> vector<16x128xf32>
    %c4_95 = arith.constant 4 : index
    %c0_96 = arith.constant 0 : index
    %265 = vector.load %arg5[%c4_95, %c0_96] : memref<7x128xf32, #tpu.memory_space<vmem>>, vector<1x128xf32>
    %266 = vector.broadcast %265 : vector<1x128xf32> to vector<16x128xf32>
    %267 = arith.addf %264, %266 : vector<16x128xf32>
    %cst_97 = arith.constant 0.000000e+00 : f32
    %268 = vector.broadcast %cst_97 : f32 to vector<16x128xf32>
    %269 = arith.maximumf %267, %268 : vector<16x128xf32>
    %c6_98 = arith.constant 6 : index
    %c0_99 = arith.constant 0 : index
    %c0_100 = arith.constant 0 : index
    %270 = vector.load %arg3[%c6_98, %c0_99, %c0_100] : memref<8x128x128xbf16, #tpu.memory_space<vmem>>, vector<1x128x128xbf16>
    %271 = vector.shape_cast %270 : vector<1x128x128xbf16> to vector<128x128xbf16>
    %272 = arith.truncf %269 : vector<16x128xf32> to vector<16x128xbf16>
    %cst_101 = arith.constant dense<0.000000e+00> : vector<16x128xf32>
    %273 = tpu.matmul %272, %271, %cst_101 {dimension_numbers = #tpu.dot_dimension_numbers<[1], [0], [0], [1], [0, 0, 1, 1], [], []>} : vector<16x128xbf16>, vector<128x128xbf16>, vector<16x128xf32> -> vector<16x128xf32>
    %c5_102 = arith.constant 5 : index
    %c0_103 = arith.constant 0 : index
    %274 = vector.load %arg5[%c5_102, %c0_103] : memref<7x128xf32, #tpu.memory_space<vmem>>, vector<1x128xf32>
    %275 = vector.broadcast %274 : vector<1x128xf32> to vector<16x128xf32>
    %276 = arith.addf %273, %275 : vector<16x128xf32>
    %cst_104 = arith.constant 0.000000e+00 : f32
    %277 = vector.broadcast %cst_104 : f32 to vector<16x128xf32>
    %278 = arith.maximumf %276, %277 : vector<16x128xf32>
    %c7 = arith.constant 7 : index
    %c0_105 = arith.constant 0 : index
    %c0_106 = arith.constant 0 : index
    %279 = vector.load %arg3[%c7, %c0_105, %c0_106] : memref<8x128x128xbf16, #tpu.memory_space<vmem>>, vector<1x128x128xbf16>
    %280 = vector.shape_cast %279 : vector<1x128x128xbf16> to vector<128x128xbf16>
    %281 = arith.truncf %278 : vector<16x128xf32> to vector<16x128xbf16>
    %cst_107 = arith.constant dense<0.000000e+00> : vector<16x128xf32>
    %282 = tpu.matmul %281, %280, %cst_107 {dimension_numbers = #tpu.dot_dimension_numbers<[1], [0], [0], [1], [0, 0, 1, 1], [], []>} : vector<16x128xbf16>, vector<128x128xbf16>, vector<16x128xf32> -> vector<16x128xf32>
    %c6_108 = arith.constant 6 : index
    %c0_109 = arith.constant 0 : index
    %283 = vector.load %arg5[%c6_108, %c0_109] : memref<7x128xf32, #tpu.memory_space<vmem>>, vector<1x128xf32>
    %284 = vector.broadcast %283 : vector<1x128xf32> to vector<16x128xf32>
    %285 = arith.addf %282, %284 : vector<16x128xf32>
    %c0_110 = arith.constant 0 : index
    %c0_111 = arith.constant 0 : index
    %286 = vector.load %arg6[%c0_110, %c0_111] : memref<16x128xf32, #tpu.memory_space<vmem>>, vector<16x128xf32>
    tpu.vector_store %arg6[%c0_110, %c0_111], %285 {strides = array<i32>} : memref<16x128xf32, #tpu.memory_space<vmem>>, vector<16x128xf32>,
    return
  }
}

</mosaic_0001>

<llo_original>
// kernel: attention_network_forward.1
$region0: #{attention_network_forward.1}
  #allocation0 [shape = 'u32[]', space=smem, size = 0x4, offset = 0x4, fixed_abs, tag = 'smem constant byte address 0x4 - core index']
  #allocation1 [shape = 'u32[144,128]{1,0:T(1,128)}', space=vmem, size = 0x12000, scoped, tag = 'internal scratch']
  #allocation2 [shape = 'f32[16,128]{1,0:T(8,128)}', space=vmem, size = 0x2000, scoped, tag = 'scratch operand']
  %s0 = inlined_call_operand.vmem [shape: f32[16,128], index: 0, kind: input, shape index: {}]
  %s1 = inlined_call_operand.vmem [shape: f32[2,8], index: 1, kind: input, shape index: {}]
  %s2 = inlined_call_operand.vmem [shape: f32[16,16], index: 2, kind: input, shape index: {}]
  %s3 = inlined_call_operand.vmem [shape: bf16[8,128,128], index: 3, kind: input, shape index: {}]
  %s4 = inlined_call_operand.vmem [shape: bf16[128,384], index: 4, kind: input, shape index: {}]
  %s5 = inlined_call_operand.vmem [shape: f32[7,128], index: 5, kind: input, shape index: {}]
  %s6 = inlined_call_operand.vmem [shape: f32[16,128], index: 6, kind: output, shape index: {}]
  %s7 = sld [smem:[#allocation0]]
  $region34: #{attention_network_forward.1} parent=0
    _
  %s9 = ssub.s32 1, %s7
  %s10 = scalar_select 0, %s9, %s7
  // Predicated region
  $region2: #{attention_network_forward.1} parent=0 // pred_check
    _
  $region3: #{attention_network_forward.1} parent=0 // pred_check_branch
    %12 = sbr.rel (0) target = $region5
  $region4: #{attention_network_forward.1} parent=0 // pred_region
    _
  $region5: #{attention_network_forward.1} parent=0 // pred_fallthru
    _
  // Predicated region
  $region6: #{attention_network_forward.1} parent=0 // pred_check
    _
  $region7: #{attention_network_forward.1} parent=0 // pred_check_branch
    %14 = sbr.rel (0) target = $region9
  $region8: #{attention_network_forward.1} parent=0 // pred_region
    _
  $region9: #{attention_network_forward.1} parent=0 // pred_fallthru
    _
  // Predicated region
  $region10: #{attention_network_forward.1} parent=0 // pred_check
    _
  $region11: #{attention_network_forward.1} parent=0 // pred_check_branch
    %16 = sbr.rel (0) target = $region13
  $region12: #{attention_network_forward.1} parent=0 // pred_region
    _
  $region13: #{attention_network_forward.1} parent=0 // pred_fallthru
    _
  // Predicated region
  $region14: #{attention_network_forward.1} parent=0 // pred_check
    _
  $region15: #{attention_network_forward.1} parent=0 // pred_check_branch
    %18 = sbr.rel (0) target = $region17
  $region16: #{attention_network_forward.1} parent=0 // pred_region
    _
  $region17: #{attention_network_forward.1} parent=0 // pred_fallthru
    _
  // Predicated region
  $region18: #{attention_network_forward.1} parent=0 // pred_check
    _
  $region19: #{attention_network_forward.1} parent=0 // pred_check_branch
    %20 = sbr.rel (0) target = $region21
  $region20: #{attention_network_forward.1} parent=0 // pred_region
    _
  $region21: #{attention_network_forward.1} parent=0 // pred_fallthru
    _
  // Predicated region
  $region22: #{attention_network_forward.1} parent=0 // pred_check
    _
  $region23: #{attention_network_forward.1} parent=0 // pred_check_branch
    %22 = sbr.rel (0) target = $region25
  $region24: #{attention_network_forward.1} parent=0 // pred_region
    _
  $region25: #{attention_network_forward.1} parent=0 // pred_fallthru
    _
  %v24 = vld [vmem:[%s0] sm:$0xff]
  %v25 = vld [vmem:[%s0 + $0x8] sm:$0xff]
  %v26 = vld [vmem:[%s3] sm:$0xf]
  %v27 = vld [vmem:[%s3 + $0x4] sm:$0xf]
  %v28 = vld [vmem:[%s3 + $0x8] sm:$0xf]
  %v29 = vld [vmem:[%s3 + $0xc] sm:$0xf]
  %v30 = vld [vmem:[%s3 + $0x10] sm:$0xf]
  %v31 = vld [vmem:[%s3 + $0x14] sm:$0xf]
  %v32 = vld [vmem:[%s3 + $0x18] sm:$0xf]
  %v33 = vld [vmem:[%s3 + $0x1c] sm:$0xf]
  %v34 = vld [vmem:[%s3 + $0x20] sm:$0xf]
  %v35 = vld [vmem:[%s3 + $0x24] sm:$0xf]
  %v36 = vld [vmem:[%s3 + $0x28] sm:$0xf]
  %v37 = vld [vmem:[%s3 + $0x2c] sm:$0xf]
  %v38 = vld [vmem:[%s3 + $0x30] sm:$0xf]
  %v39 = vld [vmem:[%s3 + $0x34] sm:$0xf]
  %v40 = vld [vmem:[%s3 + $0x38] sm:$0xf]
  %v41 = vld [vmem:[%s3 + $0x3c] sm:$0xf]
  %v42 = vpack.c.bf16 %v25, %v24
  %v43 = vld [vmem:[%s5] sm:$0x1]
  %v44 = vlaneseq
  %v45 = vshrl.u32 %v44, 7
  %v46 = vsub.s32 0, %v45
  %v47 = vrot.slane %v43, %v46
  %v64 = vunpack.c.l.b16 %v26
  %v65 = vunpack.c.l.b16 %v27
  %v66 = vunpack.c.l.b16 %v28
  %v67 = vunpack.c.l.b16 %v29
  %v68 = vunpack.c.l.b16 %v30
  %v69 = vunpack.c.l.b16 %v31
  %v70 = vunpack.c.l.b16 %v32
  %v71 = vunpack.c.l.b16 %v33
  %v72 = vunpack.c.l.b16 %v34
  %v73 = vunpack.c.l.b16 %v35
  %v74 = vunpack.c.l.b16 %v36
  %v75 = vunpack.c.l.b16 %v37
  %v76 = vunpack.c.l.b16 %v38
  %v77 = vunpack.c.l.b16 %v39
  %v78 = vunpack.c.l.b16 %v40
  %v79 = vunpack.c.l.b16 %v41
  %v80 = vpack.c.b16 %v65, %v64
  %v81 = vpack.c.b16 %v67, %v66
  %v82 = vpack.c.b16 %v69, %v68
  %v83 = vpack.c.b16 %v71, %v70
  %v84 = vpack.c.b16 %v73, %v72
  %v85 = vpack.c.b16 %v75, %v74
  %v86 = vpack.c.b16 %v77, %v76
  %v87 = vpack.c.b16 %v79, %v78
  %96 = vmatprep.subr.bf16.mxu0 0
  %97 = vmatpush1.bf16.msra.mxu0 %v87
  %98 = vmatprep.subr.bf16.mxu0 0
  %99 = vmatpush1.bf16.msra.mxu0 %v86
  %100 = vmatprep.subr.bf16.mxu0 0
  %101 = vmatpush1.bf16.msra.mxu0 %v85
  %102 = vmatprep.subr.bf16.mxu0 0
  %103 = vmatpush1.bf16.msra.mxu0 %v84
  %104 = vmatprep.subr.bf16.mxu0 0
  %105 = vmatpush1.bf16.msra.mxu0 %v83
  %106 = vmatprep.subr.bf16.mxu0 0
  %107 = vmatpush1.bf16.msra.mxu0 %v82
  %108 = vmatprep.subr.bf16.mxu0 0
  %109 = vmatpush1.bf16.msra.mxu0 %v81
  %110 = vmatprep.subr.bf16.mxu0 0
  %111 = vmatpush1.bf16.msra.mxu0 %v80
  %112 = vmatprep.subr.bf16.mxu0 0
  %113 = vmatpush2.bf16.msra.mxu0 0
  %114 = vmatprep.subr.bf16.mxu0 0
  %115 = vmatpush2.bf16.msra.mxu0 0
  %116 = vmatprep.subr.bf16.mxu0 0
  %117 = vmatpush2.bf16.msra.mxu0 0
  %118 = vmatprep.subr.bf16.mxu0 0
  %119 = vmatpush2.bf16.msra.mxu0 0
  %120 = vmatprep.subr.bf16.mxu0 0
  %121 = vmatpush2.bf16.msra.mxu0 0
  %122 = vmatprep.subr.bf16.mxu0 0
  %123 = vmatpush2.bf16.msra.mxu0 0
  %124 = vmatprep.subr.bf16.mxu0 0
  %125 = vmatpush2.bf16.msra.mxu0 0
  %126 = vmatprep.subr.bf16.mxu0 0
  %127 = vmatpush2.bf16.msra.mxu0 0
  %128 = vmatprep.mubr.bf16.mxu0 0
  %129 = vmatmul.mubr.bf16.gmra.mxu0 %v42
  %v130 = vpop.f32.mrf.mxu0
  %v131 = vadd.f32 %v47, %v130
  %v132 = vpop.f32.mrf.mxu0
  %v133 = vpop.f32.mrf.mxu0
  %v134 = vadd.f32 %v47, %v133
  %v135 = vpop.f32.mrf.mxu0
  %136 = vdwg.mxu0
  %v137 = vmax.f32 %v131, 0.0
  %v138 = vmax.f32 %v134, 0.0
  %s139 = scalar_lea.vmem %s3, 64
  %v140 = vld [vmem:[%s139] sm:$0xf]
  %v141 = vld [vmem:[%s139 + $0x4] sm:$0xf]
  %v142 = vld [vmem:[%s139 + $0x8] sm:$0xf]
  %v143 = vld [vmem:[%s139 + $0xc] sm:$0xf]
  %v144 = vld [vmem:[%s139 + $0x10] sm:$0xf]
  %v145 = vld [vmem:[%s139 + $0x14] sm:$0xf]
  %v146 = vld [vmem:[%s139 + $0x18] sm:$0xf]
  %v147 = vld [vmem:[%s139 + $0x1c] sm:$0xf]
  %v148 = vld [vmem:[%s139 + $0x20] sm:$0xf]
  %v149 = vld [vmem:[%s139 + $0x24] sm:$0xf]
  %v150 = vld [vmem:[%s139 + $0x28] sm:$0xf]
  %v151 = vld [vmem:[%s139 + $0x2c] sm:$0xf]
  %v152 = vld [vmem:[%s139 + $0x30] sm:$0xf]
  %v153 = vld [vmem:[%s139 + $0x34] sm:$0xf]
  %v154 = vld [vmem:[%s139 + $0x38] sm:$0xf]
  %v155 = vld [vmem:[%s139 + $0x3c] sm:$0xf]
  %v156 = vpack.c.bf16 %v138, %v137
  %v157 = vld [vmem:[%s5 + $0x1] sm:$0x1]
  %v158 = vlaneseq
  %v159 = vshrl.u32 %v158, 7
  %v160 = vsub.s32 0, %v159
  %v161 = vrot.slane %v157, %v160
  %v178 = vunpack.c.l.b16 %v140
  %v179 = vunpack.c.l.b16 %v141
  %v180 = vunpack.c.l.b16 %v142
  %v181 = vunpack.c.l.b16 %v143
  %v182 = vunpack.c.l.b16 %v144
  %v183 = vunpack.c.l.b16 %v145
  %v184 = vunpack.c.l.b16 %v146
  %v185 = vunpack.c.l.b16 %v147
  %v186 = vunpack.c.l.b16 %v148
  %v187 = vunpack.c.l.b16 %v149
  %v188 = vunpack.c.l.b16 %v150
  %v189 = vunpack.c.l.b16 %v151
  %v190 = vunpack.c.l.b16 %v152
  %v191 = vunpack.c.l.b16 %v153
  %v192 = vunpack.c.l.b16 %v154
  %v193 = vunpack.c.l.b16 %v155
  %v194 = vpack.c.b16 %v179, %v178
  %v195 = vpack.c.b16 %v181, %v180
  %v196 = vpack.c.b16 %v183, %v182
  %v197 = vpack.c.b16 %v185, %v184
  %v198 = vpack.c.b16 %v187, %v186
  %v199 = vpack.c.b16 %v189, %v188
  %v200 = vpack.c.b16 %v191, %v190
  %v201 = vpack.c.b16 %v193, %v192
  %210 = vmatprep.subr.bf16.mxu0 0
  %211 = vmatpush1.bf16.msra.mxu0 %v201
  %212 = vmatprep.subr.bf16.mxu0 0
  %213 = vmatpush1.bf16.msra.mxu0 %v200
  %214 = vmatprep.subr.bf16.mxu0 0
  %215 = vmatpush1.bf16.msra.mxu0 %v199
  %216 = vmatprep.subr.bf16.mxu0 0
  %217 = vmatpush1.bf16.msra.mxu0 %v198
  %218 = vmatprep.subr.bf16.mxu0 0
  %219 = vmatpush1.bf16.msra.mxu0 %v197
  %220 = vmatprep.subr.bf16.mxu0 0
  %221 = vmatpush1.bf16.msra.mxu0 %v196
  %222 = vmatprep.subr.bf16.mxu0 0
  %223 = vmatpush1.bf16.msra.mxu0 %v195
  %224 = vmatprep.subr.bf16.mxu0 0
  %225 = vmatpush1.bf16.msra.mxu0 %v194
  %226 = vmatprep.subr.bf16.mxu0 0
  %227 = vmatpush2.bf16.msra.mxu0 0
  %228 = vmatprep.subr.bf16.mxu0 0
  %229 = vmatpush2.bf16.msra.mxu0 0
  %230 = vmatprep.subr.bf16.mxu0 0
  %231 = vmatpush2.bf16.msra.mxu0 0
  %232 = vmatprep.subr.bf16.mxu0 0
  %233 = vmatpush2.bf16.msra.mxu0 0
  %234 = vmatprep.subr.bf16.mxu0 0
  %235 = vmatpush2.bf16.msra.mxu0 0
  %236 = vmatprep.subr.bf16.mxu0 0
  %237 = vmatpush2.bf16.msra.mxu0 0
  %238 = vmatprep.subr.bf16.mxu0 0
  %239 = vmatpush2.bf16.msra.mxu0 0
  %240 = vmatprep.subr.bf16.mxu0 0
  %241 = vmatpush2.bf16.msra.mxu0 0
  %242 = vmatprep.mubr.bf16.mxu0 0
  %243 = vmatmul.mubr.bf16.gmra.mxu0 %v156
  %v244 = vpop.f32.mrf.mxu0
  %v245 = vadd.f32 %v161, %v244
  %v246 = vpop.f32.mrf.mxu0
  %v247 = vpop.f32.mrf.mxu0
  %v248 = vadd.f32 %v161, %v247
  %v249 = vpop.f32.mrf.mxu0
  %250 = vdwg.mxu0
  %v251 = vmax.f32 %v245, 0.0
  %v252 = vmax.f32 %v248, 0.0
  %s253 = scalar_lea.vmem %s3, 128
  %v254 = vld [vmem:[%s253] sm:$0xf]
  %v255 = vld [vmem:[%s253 + $0x4] sm:$0xf]
  %v256 = vld [vmem:[%s253 + $0x8] sm:$0xf]
  %v257 = vld [vmem:[%s253 + $0xc] sm:$0xf]
  %v258 = vld [vmem:[%s253 + $0x10] sm:$0xf]
  %v259 = vld [vmem:[%s253 + $0x14] sm:$0xf]
  %v260 = vld [vmem:[%s253 + $0x18] sm:$0xf]
  %v261 = vld [vmem:[%s253 + $0x1c] sm:$0xf]
  %v262 = vld [vmem:[%s253 + $0x20] sm:$0xf]
  %v263 = vld [vmem:[%s253 + $0x24] sm:$0xf]
  %v264 = vld [vmem:[%s253 + $0x28] sm:$0xf]
  %v265 = vld [vmem:[%s253 + $0x2c] sm:$0xf]
  %v266 = vld [vmem:[%s253 + $0x30] sm:$0xf]
  %v267 = vld [vmem:[%s253 + $0x34] sm:$0xf]
  %v268 = vld [vmem:[%s253 + $0x38] sm:$0xf]
  %v269 = vld [vmem:[%s253 + $0x3c] sm:$0xf]
  %v270 = vpack.c.bf16 %v252, %v251
  %v271 = vld [vmem:[%s5 + $0x2] sm:$0x1]
  %v272 = vlaneseq
  %v273 = vshrl.u32 %v272, 7
  %v274 = vsub.s32 0, %v273
  %v275 = vrot.slane %v271, %v274
  %v292 = vunpack.c.l.b16 %v254
  %v293 = vunpack.c.l.b16 %v255
  %v294 = vunpack.c.l.b16 %v256
  %v295 = vunpack.c.l.b16 %v257
  %v296 = vunpack.c.l.b16 %v258
  %v297 = vunpack.c.l.b16 %v259
  %v298 = vunpack.c.l.b16 %v260
  %v299 = vunpack.c.l.b16 %v261
  %v300 = vunpack.c.l.b16 %v262
  %v301 = vunpack.c.l.b16 %v263
  %v302 = vunpack.c.l.b16 %v264
  %v303 = vunpack.c.l.b16 %v265
  %v304 = vunpack.c.l.b16 %v266
  %v305 = vunpack.c.l.b16 %v267
  %v306 = vunpack.c.l.b16 %v268
  %v307 = vunpack.c.l.b16 %v269
  %v308 = vpack.c.b16 %v293, %v292
  %v309 = vpack.c.b16 %v295, %v294
  %v310 = vpack.c.b16 %v297, %v296
  %v311 = vpack.c.b16 %v299, %v298
  %v312 = vpack.c.b16 %v301, %v300
  %v313 = vpack.c.b16 %v303, %v302
  %v314 = vpack.c.b16 %v305, %v304
  %v315 = vpack.c.b16 %v307, %v306
  %324 = vmatprep.subr.bf16.mxu0 0
  %325 = vmatpush1.bf16.msra.mxu0 %v315
  %326 = vmatprep.subr.bf16.mxu0 0
  %327 = vmatpush1.bf16.msra.mxu0 %v314
  %328 = vmatprep.subr.bf16.mxu0 0
  %329 = vmatpush1.bf16.msra.mxu0 %v313
  %330 = vmatprep.subr.bf16.mxu0 0
  %331 = vmatpush1.bf16.msra.mxu0 %v312
  %332 = vmatprep.subr.bf16.mxu0 0
  %333 = vmatpush1.bf16.msra.mxu0 %v311
  %334 = vmatprep.subr.bf16.mxu0 0
  %335 = vmatpush1.bf16.msra.mxu0 %v310
  %336 = vmatprep.subr.bf16.mxu0 0
  %337 = vmatpush1.bf16.msra.mxu0 %v309
  %338 = vmatprep.subr.bf16.mxu0 0
  %339 = vmatpush1.bf16.msra.mxu0 %v308
  %340 = vmatprep.subr.bf16.mxu0 0
  %341 = vmatpush2.bf16.msra.mxu0 0
  %342 = vmatprep.subr.bf16.mxu0 0
  %343 = vmatpush2.bf16.msra.mxu0 0
  %344 = vmatprep.subr.bf16.mxu0 0
  %345 = vmatpush2.bf16.msra.mxu0 0
  %346 = vmatprep.subr.bf16.mxu0 0
  %347 = vmatpush2.bf16.msra.mxu0 0
  %348 = vmatprep.subr.bf16.mxu0 0
  %349 = vmatpush2.bf16.msra.mxu0 0
  %350 = vmatprep.subr.bf16.mxu0 0
  %351 = vmatpush2.bf16.msra.mxu0 0
  %352 = vmatprep.subr.bf16.mxu0 0
  %353 = vmatpush2.bf16.msra.mxu0 0
  %354 = vmatprep.subr.bf16.mxu0 0
  %355 = vmatpush2.bf16.msra.mxu0 0
  %356 = vmatprep.mubr.bf16.mxu0 0
  %357 = vmatmul.mubr.bf16.gmra.mxu0 %v270
  %v358 = vpop.f32.mrf.mxu0
  %v359 = vadd.f32 %v275, %v358
  %v360 = vpop.f32.mrf.mxu0
  %v361 = vpop.f32.mrf.mxu0
  %v362 = vadd.f32 %v275, %v361
  %v363 = vpop.f32.mrf.mxu0
  %364 = vdwg.mxu0
  %v365 = vmax.f32 %v359, 0.0
  %v366 = vmax.f32 %v362, 0.0
  %v367 = vld [vmem:[%s4] sm:$0xff]
  %v368 = vld [vmem:[%s4 + $0x8] sm:$0xf]
  %v369 = vld [vmem:[%s4 + $0xc] sm:$0xff]
  %v370 = vld [vmem:[%s4 + $0x14] sm:$0xf]
  %v371 = vld [vmem:[%s4 + $0x18] sm:$0xff]
  %v372 = vld [vmem:[%s4 + $0x20] sm:$0xf]
  %v373 = vld [vmem:[%s4 + $0x24] sm:$0xff]
  %v374 = vld [vmem:[%s4 + $0x2c] sm:$0xf]
  %v375 = vld [vmem:[%s4 + $0x30] sm:$0xff]
  %v376 = vld [vmem:[%s4 + $0x38] sm:$0xf]
  %v377 = vld [vmem:[%s4 + $0x3c] sm:$0xff]
  %v378 = vld [vmem:[%s4 + $0x44] sm:$0xf]
  %v379 = vld [vmem:[%s4 + $0x48] sm:$0xff]
  %v380 = vld [vmem:[%s4 + $0x50] sm:$0xf]
  %v381 = vld [vmem:[%s4 + $0x54] sm:$0xff]
  %v382 = vld [vmem:[%s4 + $0x5c] sm:$0xf]
  %v383 = vld [vmem:[%s4 + $0x60] sm:$0xff]
  %v384 = vld [vmem:[%s4 + $0x68] sm:$0xf]
  %v385 = vld [vmem:[%s4 + $0x6c] sm:$0xff]
  %v386 = vld [vmem:[%s4 + $0x74] sm:$0xf]
  %v387 = vld [vmem:[%s4 + $0x78] sm:$0xff]
  %v388 = vld [vmem:[%s4 + $0x80] sm:$0xf]
  %v389 = vld [vmem:[%s4 + $0x84] sm:$0xff]
  %v390 = vld [vmem:[%s4 + $0x8c] sm:$0xf]
  %v391 = vld [vmem:[%s4 + $0x90] sm:$0xff]
  %v392 = vld [vmem:[%s4 + $0x98] sm:$0xf]
  %v393 = vld [vmem:[%s4 + $0x9c] sm:$0xff]
  %v394 = vld [vmem:[%s4 + $0xa4] sm:$0xf]
  %v395 = vld [vmem:[%s4 + $0xa8] sm:$0xff]
  %v396 = vld [vmem:[%s4 + $0xb0] sm:$0xf]
  %v397 = vld [vmem:[%s4 + $0xb4] sm:$0xff]
  %v398 = vld [vmem:[%s4 + $0xbc] sm:$0xf]
  %v399 = vpack.c.bf16 %v366, %v365
  %v432 = vunpack.c.l.b16 %v367
  %v433 = vunpack.c.h.b16 %v367
  %v434 = vunpack.c.l.b16 %v368
  %v435 = vunpack.c.l.b16 %v369
  %v436 = vunpack.c.h.b16 %v369
  %v437 = vunpack.c.l.b16 %v370
  %v438 = vunpack.c.l.b16 %v371
  %v439 = vunpack.c.h.b16 %v371
  %v440 = vunpack.c.l.b16 %v372
  %v441 = vunpack.c.l.b16 %v373
  %v442 = vunpack.c.h.b16 %v373
  %v443 = vunpack.c.l.b16 %v374
  %v444 = vunpack.c.l.b16 %v375
  %v445 = vunpack.c.h.b16 %v375
  %v446 = vunpack.c.l.b16 %v376
  %v447 = vunpack.c.l.b16 %v377
  %v448 = vunpack.c.h.b16 %v377
  %v449 = vunpack.c.l.b16 %v378
  %v450 = vunpack.c.l.b16 %v379
  %v451 = vunpack.c.h.b16 %v379
  %v452 = vunpack.c.l.b16 %v380
  %v453 = vunpack.c.l.b16 %v381
  %v454 = vunpack.c.h.b16 %v381
  %v455 = vunpack.c.l.b16 %v382
  %v456 = vunpack.c.l.b16 %v383
  %v457 = vunpack.c.h.b16 %v383
  %v458 = vunpack.c.l.b16 %v384
  %v459 = vunpack.c.l.b16 %v385
  %v460 = vunpack.c.h.b16 %v385
  %v461 = vunpack.c.l.b16 %v386
  %v462 = vunpack.c.l.b16 %v387
  %v463 = vunpack.c.h.b16 %v387
  %v464 = vunpack.c.l.b16 %v388
  %v465 = vunpack.c.l.b16 %v389
  %v466 = vunpack.c.h.b16 %v389
  %v467 = vunpack.c.l.b16 %v390
  %v468 = vunpack.c.l.b16 %v391
  %v469 = vunpack.c.h.b16 %v391
  %v470 = vunpack.c.l.b16 %v392
  %v471 = vunpack.c.l.b16 %v393
  %v472 = vunpack.c.h.b16 %v393
  %v473 = vunpack.c.l.b16 %v394
  %v474 = vunpack.c.l.b16 %v395
  %v475 = vunpack.c.h.b16 %v395
  %v476 = vunpack.c.l.b16 %v396
  %v477 = vunpack.c.l.b16 %v397
  %v478 = vunpack.c.h.b16 %v397
  %v479 = vunpack.c.l.b16 %v398
  %v480 = vpack.c.b16 %v435, %v432
  %v481 = vpack.c.b16 %v436, %v433
  %v482 = vpack.c.b16 %v437, %v434
  %v483 = vpack.c.b16 %v441, %v438
  %v484 = vpack.c.b16 %v442, %v439
  %v485 = vpack.c.b16 %v443, %v440
  %v486 = vpack.c.b16 %v447, %v444
  %v487 = vpack.c.b16 %v448, %v445
  %v488 = vpack.c.b16 %v449, %v446
  %v489 = vpack.c.b16 %v453, %v450
  %v490 = vpack.c.b16 %v454, %v451
  %v491 = vpack.c.b16 %v455, %v452
  %v492 = vpack.c.b16 %v459, %v456
  %v493 = vpack.c.b16 %v460, %v457
  %v494 = vpack.c.b16 %v461, %v458
  %v495 = vpack.c.b16 %v465, %v462
  %v496 = vpack.c.b16 %v466, %v463
  %v497 = vpack.c.b16 %v467, %v464
  %v498 = vpack.c.b16 %v471, %v468
  %v499 = vpack.c.b16 %v472, %v469
  %v500 = vpack.c.b16 %v473, %v470
  %v501 = vpack.c.b16 %v477, %v474
  %v502 = vpack.c.b16 %v478, %v475
  %v503 = vpack.c.b16 %v479, %v476
  %528 = vmatprep.subr.bf16.mxu0 %v502
  %529 = vmatpush1.bf16.msra.mxu0 %v501
  %530 = vmatprep.subr.bf16.mxu0 %v499
  %531 = vmatpush1.bf16.msra.mxu0 %v498
  %532 = vmatprep.subr.bf16.mxu0 %v496
  %533 = vmatpush1.bf16.msra.mxu0 %v495
  %534 = vmatprep.subr.bf16.mxu0 %v493
  %535 = vmatpush1.bf16.msra.mxu0 %v492
  %536 = vmatprep.subr.bf16.mxu0 %v490
  %537 = vmatpush1.bf16.msra.mxu0 %v489
  %538 = vmatprep.subr.bf16.mxu0 %v487
  %539 = vmatpush1.bf16.msra.mxu0 %v486
  %540 = vmatprep.subr.bf16.mxu0 %v484
  %541 = vmatpush1.bf16.msra.mxu0 %v483
  %542 = vmatprep.subr.bf16.mxu0 %v481
  %543 = vmatpush1.bf16.msra.mxu0 %v480
  %544 = vmatprep.subr.bf16.mxu0 0
  %545 = vmatpush2.bf16.msra.mxu0 0
  %546 = vmatprep.subr.bf16.mxu0 0
  %547 = vmatpush2.bf16.msra.mxu0 0
  %548 = vmatprep.subr.bf16.mxu0 0
  %549 = vmatpush2.bf16.msra.mxu0 0
  %550 = vmatprep.subr.bf16.mxu0 0
  %551 = vmatpush2.bf16.msra.mxu0 0
  %552 = vmatprep.subr.bf16.mxu0 0
  %553 = vmatpush2.bf16.msra.mxu0 0
  %554 = vmatprep.subr.bf16.mxu0 0
  %555 = vmatpush2.bf16.msra.mxu0 0
  %556 = vmatprep.subr.bf16.mxu0 0
  %557 = vmatpush2.bf16.msra.mxu0 0
  %558 = vmatprep.subr.bf16.mxu0 0
  %559 = vmatpush2.bf16.msra.mxu0 0
  %560 = vmatprep.mubr.bf16.mxu0 0
  %561 = vmatmul.mubr.bf16.gmra.mxu0 %v399
  %v562 = vpop.f32.mrf.mxu0
  %v563 = vadd.f32 0.0, %v562
  %v564 = vpop.f32.mrf.mxu0
  %v565 = vadd.f32 0.0, %v564
  %v566 = vpop.f32.mrf.mxu0
  %v567 = vadd.f32 0.0, %v566
  %v568 = vpop.f32.mrf.mxu0
  %v569 = vadd.f32 0.0, %v568
  %570 = vdwg.mxu0
  %571 = vmatprep.subr.bf16.mxu0 0
  %572 = vmatpush1.bf16.msra.mxu0 %v503
  %573 = vmatprep.subr.bf16.mxu0 0
  %574 = vmatpush1.bf16.msra.mxu0 %v500
  %575 = vmatprep.subr.bf16.mxu0 0
  %576 = vmatpush1.bf16.msra.mxu0 %v497
  %577 = vmatprep.subr.bf16.mxu0 0
  %578 = vmatpush1.bf16.msra.mxu0 %v494
  %579 = vmatprep.subr.bf16.mxu0 0
  %580 = vmatpush1.bf16.msra.mxu0 %v491
  %581 = vmatprep.subr.bf16.mxu0 0
  %582 = vmatpush1.bf16.msra.mxu0 %v488
  %583 = vmatprep.subr.bf16.mxu0 0
  %584 = vmatpush1.bf16.msra.mxu0 %v485
  %585 = vmatprep.subr.bf16.mxu0 0
  %586 = vmatpush1.bf16.msra.mxu0 %v482
  %587 = vmatprep.subr.bf16.mxu0 0
  %588 = vmatpush2.bf16.msra.mxu0 0
  %589 = vmatprep.subr.bf16.mxu0 0
  %590 = vmatpush2.bf16.msra.mxu0 0
  %591 = vmatprep.subr.bf16.mxu0 0
  %592 = vmatpush2.bf16.msra.mxu0 0
  %593 = vmatprep.subr.bf16.mxu0 0
  %594 = vmatpush2.bf16.msra.mxu0 0
  %595 = vmatprep.subr.bf16.mxu0 0
  %596 = vmatpush2.bf16.msra.mxu0 0
  %597 = vmatprep.subr.bf16.mxu0 0
  %598 = vmatpush2.bf16.msra.mxu0 0
  %599 = vmatprep.subr.bf16.mxu0 0
  %600 = vmatpush2.bf16.msra.mxu0 0
  %601 = vmatprep.subr.bf16.mxu0 0
  %602 = vmatpush2.bf16.msra.mxu0 0
  %603 = vmatprep.mubr.bf16.mxu0 0
  %604 = vmatmul.mubr.bf16.gmra.mxu0 %v399
  %v605 = vpop.f32.mrf.mxu0
  %v606 = vadd.f32 0.0, %v605
  %v607 = vpop.f32.mrf.mxu0
  %v608 = vpop.f32.mrf.mxu0
  %v609 = vadd.f32 0.0, %v608
  %v610 = vpop.f32.mrf.mxu0
  %611 = vdwg.mxu0
  %v612 = vld [vmem:[%s2] sm:$0xff]
  %v613 = vld [vmem:[%s2 + $0x8] sm:$0xff]
  %vm614 = vcmask 130048
  %v616 = vsel %vm614, %v612, 0
  %v619 = vsel %vm614, %v613, 0
  %621 = vmatprep.subr.mxu0 0.0
  %622 = vmatpush1.msra.mxu0 0.0
  %623 = vmatprep.subr.mxu0 0.0
  %624 = vmatpush1.msra.mxu0 0.0
  %625 = vmatprep.subr.mxu0 0.0
  %626 = vmatpush1.msra.mxu0 0.0
  %627 = vmatprep.subr.mxu0 0.0
  %628 = vmatpush1.msra.mxu0 0.0
  %629 = vmatprep.subr.mxu0 0.0
  %630 = vmatpush1.msra.mxu0 0.0
  %631 = vmatprep.subr.mxu0 0.0
  %632 = vmatpush1.msra.mxu0 0.0
  %633 = vmatprep.subr.mxu0 0.0
  %634 = vmatpush1.msra.mxu0 0.0
  %635 = vmatprep.subr.mxu0 0.0
  %636 = vmatpush1.msra.mxu0 0.0
  %637 = vmatprep.subr.mxu0 0.0
  %638 = vmatpush1.msra.mxu0 0.0
  %639 = vmatprep.subr.mxu0 0.0
  %640 = vmatpush1.msra.mxu0 0.0
  %641 = vmatprep.subr.mxu0 0.0
  %642 = vmatpush1.msra.mxu0 0.0
  %643 = vmatprep.subr.mxu0 0.0
  %644 = vmatpush1.msra.mxu0 0.0
  %645 = vmatprep.subr.mxu0 0.0
  %646 = vmatpush1.msra.mxu0 0.0
  %647 = vmatprep.subr.mxu0 0.0
  %648 = vmatpush1.msra.mxu0 0.0
  %649 = vmatprep.subr.mxu0 0.0
  %650 = vmatpush1.msra.mxu0 %v567
  %651 = vmatprep.subr.mxu0 0.0
  %652 = vmatpush1.msra.mxu0 %v563
  %653 = vmatprep.subr.mxu0 0.0
  %654 = vmatpush2.msra.mxu0 0.0
  %655 = vmatprep.subr.mxu0 0.0
  %656 = vmatpush2.msra.mxu0 0.0
  %657 = vmatprep.subr.mxu0 0.0
  %658 = vmatpush2.msra.mxu0 0.0
  %659 = vmatprep.subr.mxu0 0.0
  %660 = vmatpush2.msra.mxu0 0.0
  %661 = vmatprep.subr.mxu0 0.0
  %662 = vmatpush2.msra.mxu0 0.0
  %663 = vmatprep.subr.mxu0 0.0
  %664 = vmatpush2.msra.mxu0 0.0
  %665 = vmatprep.subr.mxu0 0.0
  %666 = vmatpush2.msra.mxu0 0.0
  %667 = vmatprep.subr.mxu0 0.0
  %668 = vmatpush2.msra.mxu0 0.0
  %669 = vmatprep.subr.mxu0 0.0
  %670 = vmatpush2.msra.mxu0 0.0
  %671 = vmatprep.subr.mxu0 0.0
  %672 = vmatpush2.msra.mxu0 0.0
  %673 = vmatprep.subr.mxu0 0.0
  %674 = vmatpush2.msra.mxu0 0.0
  %675 = vmatprep.subr.mxu0 0.0
  %676 = vmatpush2.msra.mxu0 0.0
  %677 = vmatprep.subr.mxu0 0.0
  %678 = vmatpush2.msra.mxu0 0.0
  %679 = vmatprep.subr.mxu0 0.0
  %680 = vmatpush2.msra.mxu0 0.0
  %681 = vmatprep.subr.mxu0 0.0
  %682 = vmatpush2.msra.mxu0 0.0
  %683 = vmatprep.subr.mxu0 0.0
  %684 = vmatpush2.msra.mxu0 0.0
  %685 = vmatprep.mubr.f32.mxu0 0.0
  %686 = vmatmul.mubr.f32.gmra.mxu0 %v616
  %v687 = vpop.f32.mrf.mxu0
  %v688 = vadd.f32 0.0, %v687
  %v689 = vpop.f32.mrf.mxu0
  %690 = vmatprep.mubr.f32.mxu0 0.0
  %691 = vmatmul.mubr.f32.gmra.mxu0 %v619
  %v692 = vpop.f32.mrf.mxu0
  %v693 = vadd.f32 0.0, %v692
  %v694 = vpop.f32.mrf.mxu0
  %695 = vdwg.mxu0
  %v696 = vld [vmem:[%s1] sm:$0x1]
  %vm697 = vcmask 261120
  %v699 = vsel %vm697, %v688, 0
  %v702 = vsel %vm697, %v565, 0
  %704 = vmatprep.subr.mxu0 0.0
  %705 = vmatpush1.xpose.msra.mxu0 0.0
  %706 = vmatprep.subr.mxu0 0.0
  %707 = vmatpush1.xpose.msra.mxu0 0.0
  %708 = vmatprep.subr.mxu0 0.0
  %709 = vmatpush1.xpose.msra.mxu0 0.0
  %710 = vmatprep.subr.mxu0 0.0
  %711 = vmatpush1.xpose.msra.mxu0 0.0
  %712 = vmatprep.subr.mxu0 0.0
  %713 = vmatpush1.xpose.msra.mxu0 0.0
  %714 = vmatprep.subr.mxu0 0.0
  %715 = vmatpush1.xpose.msra.mxu0 0.0
  %716 = vmatprep.subr.mxu0 0.0
  %717 = vmatpush1.xpose.msra.mxu0 0.0
  %718 = vmatprep.subr.mxu0 0.0
  %719 = vmatpush1.xpose.msra.mxu0 0.0
  %720 = vmatprep.subr.mxu0 0.0
  %721 = vmatpush1.xpose.msra.mxu0 0.0
  %722 = vmatprep.subr.mxu0 0.0
  %723 = vmatpush1.xpose.msra.mxu0 0.0
  %724 = vmatprep.subr.mxu0 0.0
  %725 = vmatpush1.xpose.msra.mxu0 0.0
  %726 = vmatprep.subr.mxu0 0.0
  %727 = vmatpush1.xpose.msra.mxu0 0.0
  %728 = vmatprep.subr.mxu0 0.0
  %729 = vmatpush1.xpose.msra.mxu0 0.0
  %730 = vmatprep.subr.mxu0 0.0
  %731 = vmatpush1.xpose.msra.mxu0 0.0
  %732 = vmatprep.subr.mxu0 0.0
  %733 = vmatpush1.xpose.msra.mxu0 0.0
  %734 = vmatprep.subr.mxu0 0.0
  %735 = vmatpush1.xpose.msra.mxu0 %v702
  %736 = vmatprep.subr.mxu0 0.0
  %737 = vmatpush2.xpose.msra.mxu0 0.0
  %738 = vmatprep.subr.mxu0 0.0
  %739 = vmatpush2.xpose.msra.mxu0 0.0
  %740 = vmatprep.subr.mxu0 0.0
  %741 = vmatpush2.xpose.msra.mxu0 0.0
  %742 = vmatprep.subr.mxu0 0.0
  %743 = vmatpush2.xpose.msra.mxu0 0.0
  %744 = vmatprep.subr.mxu0 0.0
  %745 = vmatpush2.xpose.msra.mxu0 0.0
  %746 = vmatprep.subr.mxu0 0.0
  %747 = vmatpush2.xpose.msra.mxu0 0.0
  %748 = vmatprep.subr.mxu0 0.0
  %749 = vmatpush2.xpose.msra.mxu0 0.0
  %750 = vmatprep.subr.mxu0 0.0
  %751 = vmatpush2.xpose.msra.mxu0 0.0
  %752 = vmatprep.subr.mxu0 0.0
  %753 = vmatpush2.xpose.msra.mxu0 0.0
  %754 = vmatprep.subr.mxu0 0.0
  %755 = vmatpush2.xpose.msra.mxu0 0.0
  %756 = vmatprep.subr.mxu0 0.0
  %757 = vmatpush2.xpose.msra.mxu0 0.0
  %758 = vmatprep.subr.mxu0 0.0
  %759 = vmatpush2.xpose.msra.mxu0 0.0
  %760 = vmatprep.subr.mxu0 0.0
  %761 = vmatpush2.xpose.msra.mxu0 0.0
  %762 = vmatprep.subr.mxu0 0.0
  %763 = vmatpush2.xpose.msra.mxu0 0.0
  %764 = vmatprep.subr.mxu0 0.0
  %765 = vmatpush2.xpose.msra.mxu0 0.0
  %766 = vmatprep.subr.mxu0 0.0
  %767 = vmatpush2.xpose.msra.mxu0 0.0
  %768 = vmatprep.mubr.f32.mxu0 0.0
  %769 = vmatmul.mubr.f32.gmra.mxu0 %v699
  %v770 = vpop.f32.mrf.mxu0
  %v771 = vadd.f32 0.0, %v770
  %v772 = vpop.f32.mrf.mxu0
  %773 = vdwg.mxu0
  %v774 = vmul.f32 %v771, 0.17677669
  %v775 = vlaneseq
  %v776 = vshrl.u32 %v775, 7
  %v777 = vsub.s32 0, %v776
  %v778 = vrot.slane %v696, %v777
  %v779 = vadd.f32 %v774, %v778
  %vm780 = vcmask 64512
  %v781 = vsel %vm780, %v779, -inf
  %782 = vmax.xlane.f32.xlu0 %v781
  %v783 = vpop.xlane.xlu0 %782
  %v784 = vsub.f32 %v779, %v783
  %v785 = vmul.f32 %v784, 1.442695
  %v786 = vpow.pop %v785
  %v787 = vsel %vm780, %v786, 0.0
  %788 = vadd.xlane.f32.xlu0 %v787
  %v789 = vpop.xlane.xlu0 %788
  %v790 = vrcp.pop %v789
  %v791 = vmul.f32 %v786, %v790
  %v793 = vsel %vm780, %v791, 0
  %795 = vmatprep.subr.mxu0 0.0
  %796 = vmatpush1.msra.mxu0 0.0
  %797 = vmatprep.subr.mxu0 0.0
  %798 = vmatpush1.msra.mxu0 0.0
  %799 = vmatprep.subr.mxu0 0.0
  %800 = vmatpush1.msra.mxu0 0.0
  %801 = vmatprep.subr.mxu0 0.0
  %802 = vmatpush1.msra.mxu0 0.0
  %803 = vmatprep.subr.mxu0 0.0
  %804 = vmatpush1.msra.mxu0 0.0
  %805 = vmatprep.subr.mxu0 0.0
  %806 = vmatpush1.msra.mxu0 0.0
  %807 = vmatprep.subr.mxu0 0.0
  %808 = vmatpush1.msra.mxu0 0.0
  %809 = vmatprep.subr.mxu0 0.0
  %810 = vmatpush1.msra.mxu0 0.0
  %811 = vmatprep.subr.mxu0 0.0
  %812 = vmatpush1.msra.mxu0 0.0
  %813 = vmatprep.subr.mxu0 0.0
  %814 = vmatpush1.msra.mxu0 0.0
  %815 = vmatprep.subr.mxu0 0.0
  %816 = vmatpush1.msra.mxu0 0.0
  %817 = vmatprep.subr.mxu0 0.0
  %818 = vmatpush1.msra.mxu0 0.0
  %819 = vmatprep.subr.mxu0 0.0
  %820 = vmatpush1.msra.mxu0 0.0
  %821 = vmatprep.subr.mxu0 0.0
  %822 = vmatpush1.msra.mxu0 0.0
  %823 = vmatprep.subr.mxu0 0.0
  %824 = vmatpush1.msra.mxu0 0.0
  %825 = vmatprep.subr.mxu0 0.0
  %826 = vmatpush1.msra.mxu0 %v606
  %827 = vmatprep.subr.mxu0 0.0
  %828 = vmatpush2.msra.mxu0 0.0
  %829 = vmatprep.subr.mxu0 0.0
  %830 = vmatpush2.msra.mxu0 0.0
  %831 = vmatprep.subr.mxu0 0.0
  %832 = vmatpush2.msra.mxu0 0.0
  %833 = vmatprep.subr.mxu0 0.0
  %834 = vmatpush2.msra.mxu0 0.0
  %835 = vmatprep.subr.mxu0 0.0
  %836 = vmatpush2.msra.mxu0 0.0
  %837 = vmatprep.subr.mxu0 0.0
  %838 = vmatpush2.msra.mxu0 0.0
  %839 = vmatprep.subr.mxu0 0.0
  %840 = vmatpush2.msra.mxu0 0.0
  %841 = vmatprep.subr.mxu0 0.0
  %842 = vmatpush2.msra.mxu0 0.0
  %843 = vmatprep.subr.mxu0 0.0
  %844 = vmatpush2.msra.mxu0 0.0
  %845 = vmatprep.subr.mxu0 0.0
  %846 = vmatpush2.msra.mxu0 0.0
  %847 = vmatprep.subr.mxu0 0.0
  %848 = vmatpush2.msra.mxu0 0.0
  %849 = vmatprep.subr.mxu0 0.0
  %850 = vmatpush2.msra.mxu0 0.0
  %851 = vmatprep.subr.mxu0 0.0
  %852 = vmatpush2.msra.mxu0 0.0
  %853 = vmatprep.subr.mxu0 0.0
  %854 = vmatpush2.msra.mxu0 0.0
  %855 = vmatprep.subr.mxu0 0.0
  %856 = vmatpush2.msra.mxu0 0.0
  %857 = vmatprep.subr.mxu0 0.0
  %858 = vmatpush2.msra.mxu0 0.0
  %859 = vmatprep.mubr.f32.mxu0 0.0
  %860 = vmatmul.mubr.f32.gmra.mxu0 %v793
  %v861 = vpop.f32.mrf.mxu0
  %v862 = vadd.f32 0.0, %v861
  %v863 = vpop.f32.mrf.mxu0
  %864 = vdwg.mxu0
  %v866 = vrot.slane %v862, 2
  %867 = vrot.lane.b32.xlu0 %v866, 32
  %v868 = vpop.permute.xlu0 %867
  %v870 = vrot.slane %v862, 4
  %871 = vrot.lane.b32.xlu0 %v870, 64
  %v872 = vpop.permute.xlu0 %871
  %v874 = vrot.slane %v862, 6
  %875 = vrot.lane.b32.xlu0 %v874, 96
  %v876 = vpop.permute.xlu0 %875
  %v878 = vsel %vm697, %v862, %v868
  %vm879 = vcmask 523264
  %v880 = vsel %vm879, %v878, %v872
  %vm881 = vcmask 785408
  %v882 = vsel %vm881, %v880, %v876
  %883 = vst [vmem:[#allocation2] sm:$0x3] %v882
  %884 = vrot.lane.b32.xlu0 %v688, 96
  %v885 = vpop.permute.xlu0 %884
  %886 = vrot.lane.b32.xlu0 %v565, 96
  %v887 = vpop.permute.xlu0 %886
  %v888 = vsel %vm697, %v885, 0
  %v890 = vsel %vm697, %v887, 0
  %892 = vmatprep.subr.mxu0 0.0
  %893 = vmatpush1.xpose.msra.mxu0 0.0
  %894 = vmatprep.subr.mxu0 0.0
  %895 = vmatpush1.xpose.msra.mxu0 0.0
  %896 = vmatprep.subr.mxu0 0.0
  %897 = vmatpush1.xpose.msra.mxu0 0.0
  %898 = vmatprep.subr.mxu0 0.0
  %899 = vmatpush1.xpose.msra.mxu0 0.0
  %900 = vmatprep.subr.mxu0 0.0
  %901 = vmatpush1.xpose.msra.mxu0 0.0
  %902 = vmatprep.subr.mxu0 0.0
  %903 = vmatpush1.xpose.msra.mxu0 0.0
  %904 = vmatprep.subr.mxu0 0.0
  %905 = vmatpush1.xpose.msra.mxu0 0.0
  %906 = vmatprep.subr.mxu0 0.0
  %907 = vmatpush1.xpose.msra.mxu0 0.0
  %908 = vmatprep.subr.mxu0 0.0
  %909 = vmatpush1.xpose.msra.mxu0 0.0
  %910 = vmatprep.subr.mxu0 0.0
  %911 = vmatpush1.xpose.msra.mxu0 0.0
  %912 = vmatprep.subr.mxu0 0.0
  %913 = vmatpush1.xpose.msra.mxu0 0.0
  %914 = vmatprep.subr.mxu0 0.0
  %915 = vmatpush1.xpose.msra.mxu0 0.0
  %916 = vmatprep.subr.mxu0 0.0
  %917 = vmatpush1.xpose.msra.mxu0 0.0
  %918 = vmatprep.subr.mxu0 0.0
  %919 = vmatpush1.xpose.msra.mxu0 0.0
  %920 = vmatprep.subr.mxu0 0.0
  %921 = vmatpush1.xpose.msra.mxu0 0.0
  %922 = vmatprep.subr.mxu0 0.0
  %923 = vmatpush1.xpose.msra.mxu0 %v890
  %924 = vmatprep.subr.mxu0 0.0
  %925 = vmatpush2.xpose.msra.mxu0 0.0
  %926 = vmatprep.subr.mxu0 0.0
  %927 = vmatpush2.xpose.msra.mxu0 0.0
  %928 = vmatprep.subr.mxu0 0.0
  %929 = vmatpush2.xpose.msra.mxu0 0.0
  %930 = vmatprep.subr.mxu0 0.0
  %931 = vmatpush2.xpose.msra.mxu0 0.0
  %932 = vmatprep.subr.mxu0 0.0
  %933 = vmatpush2.xpose.msra.mxu0 0.0
  %934 = vmatprep.subr.mxu0 0.0
  %935 = vmatpush2.xpose.msra.mxu0 0.0
  %936 = vmatprep.subr.mxu0 0.0
  %937 = vmatpush2.xpose.msra.mxu0 0.0
  %938 = vmatprep.subr.mxu0 0.0
  %939 = vmatpush2.xpose.msra.mxu0 0.0
  %940 = vmatprep.subr.mxu0 0.0
  %941 = vmatpush2.xpose.msra.mxu0 0.0
  %942 = vmatprep.subr.mxu0 0.0
  %943 = vmatpush2.xpose.msra.mxu0 0.0
  %944 = vmatprep.subr.mxu0 0.0
  %945 = vmatpush2.xpose.msra.mxu0 0.0
  %946 = vmatprep.subr.mxu0 0.0
  %947 = vmatpush2.xpose.msra.mxu0 0.0
  %948 = vmatprep.subr.mxu0 0.0
  %949 = vmatpush2.xpose.msra.mxu0 0.0
  %950 = vmatprep.subr.mxu0 0.0
  %951 = vmatpush2.xpose.msra.mxu0 0.0
  %952 = vmatprep.subr.mxu0 0.0
  %953 = vmatpush2.xpose.msra.mxu0 0.0
  %954 = vmatprep.subr.mxu0 0.0
  %955 = vmatpush2.xpose.msra.mxu0 0.0
  %956 = vmatprep.mubr.f32.mxu0 0.0
  %957 = vmatmul.mubr.f32.gmra.mxu0 %v888
  %v958 = vpop.f32.mrf.mxu0
  %v959 = vadd.f32 0.0, %v958
  %v960 = vpop.f32.mrf.mxu0
  %961 = vdwg.mxu0
  %v962 = vmul.f32 %v959, 0.17677669
  %v963 = vadd.f32 %v962, %v778
  %v964 = vsel %vm780, %v963, -inf
  %965 = vmax.xlane.f32.xlu0 %v964
  %v966 = vpop.xlane.xlu0 %965
  %v967 = vsub.f32 %v963, %v966
  %v968 = vmul.f32 %v967, 1.442695
  %v969 = vpow.pop %v968
  %v970 = vsel %vm780, %v969, 0.0
  %971 = vadd.xlane.f32.xlu0 %v970
  %v972 = vpop.xlane.xlu0 %971
  %v973 = vrcp.pop %v972
  %v974 = vmul.f32 %v969, %v973
  %976 = vrot.lane.b32.xlu0 %v606, 96
  %v977 = vpop.permute.xlu0 %976
  %v980 = vsel %vm780, %v974, 0
  %982 = vmatprep.subr.mxu0 0.0
  %983 = vmatpush1.msra.mxu0 0.0
  %984 = vmatprep.subr.mxu0 0.0
  %985 = vmatpush1.msra.mxu0 0.0
  %986 = vmatprep.subr.mxu0 0.0
  %987 = vmatpush1.msra.mxu0 0.0
  %988 = vmatprep.subr.mxu0 0.0
  %989 = vmatpush1.msra.mxu0 0.0
  %990 = vmatprep.subr.mxu0 0.0
  %991 = vmatpush1.msra.mxu0 0.0
  %992 = vmatprep.subr.mxu0 0.0
  %993 = vmatpush1.msra.mxu0 0.0
  %994 = vmatprep.subr.mxu0 0.0
  %995 = vmatpush1.msra.mxu0 0.0
  %996 = vmatprep.subr.mxu0 0.0
  %997 = vmatpush1.msra.mxu0 0.0
  %998 = vmatprep.subr.mxu0 0.0
  %999 = vmatpush1.msra.mxu0 0.0
  %1000 = vmatprep.subr.mxu0 0.0
  %1001 = vmatpush1.msra.mxu0 0.0
  %1002 = vmatprep.subr.mxu0 0.0
  %1003 = vmatpush1.msra.mxu0 0.0
  %1004 = vmatprep.subr.mxu0 0.0
  %1005 = vmatpush1.msra.mxu0 0.0
  %1006 = vmatprep.subr.mxu0 0.0
  %1007 = vmatpush1.msra.mxu0 0.0
  %1008 = vmatprep.subr.mxu0 0.0
  %1009 = vmatpush1.msra.mxu0 0.0
  %1010 = vmatprep.subr.mxu0 0.0
  %1011 = vmatpush1.msra.mxu0 0.0
  %1012 = vmatprep.subr.mxu0 0.0
  %1013 = vmatpush1.msra.mxu0 %v977
  %1014 = vmatprep.subr.mxu0 0.0
  %1015 = vmatpush2.msra.mxu0 0.0
  %1016 = vmatprep.subr.mxu0 0.0
  %1017 = vmatpush2.msra.mxu0 0.0
  %1018 = vmatprep.subr.mxu0 0.0
  %1019 = vmatpush2.msra.mxu0 0.0
  %1020 = vmatprep.subr.mxu0 0.0
  %1021 = vmatpush2.msra.mxu0 0.0
  %1022 = vmatprep.subr.mxu0 0.0
  %1023 = vmatpush2.msra.mxu0 0.0
  %1024 = vmatprep.subr.mxu0 0.0
  %1025 = vmatpush2.msra.mxu0 0.0
  %1026 = vmatprep.subr.mxu0 0.0
  %1027 = vmatpush2.msra.mxu0 0.0
  %1028 = vmatprep.subr.mxu0 0.0
  %1029 = vmatpush2.msra.mxu0 0.0
  %1030 = vmatprep.subr.mxu0 0.0
  %1031 = vmatpush2.msra.mxu0 0.0
  %1032 = vmatprep.subr.mxu0 0.0
  %1033 = vmatpush2.msra.mxu0 0.0
  %1034 = vmatprep.subr.mxu0 0.0
  %1035 = vmatpush2.msra.mxu0 0.0
  %1036 = vmatprep.subr.mxu0 0.0
  %1037 = vmatpush2.msra.mxu0 0.0
  %1038 = vmatprep.subr.mxu0 0.0
  %1039 = vmatpush2.msra.mxu0 0.0
  %1040 = vmatprep.subr.mxu0 0.0
  %1041 = vmatpush2.msra.mxu0 0.0
  %1042 = vmatprep.subr.mxu0 0.0
  %1043 = vmatpush2.msra.mxu0 0.0
  %1044 = vmatprep.subr.mxu0 0.0
  %1045 = vmatpush2.msra.mxu0 0.0
  %1046 = vmatprep.mubr.f32.mxu0 0.0
  %1047 = vmatmul.mubr.f32.gmra.mxu0 %v980
  %v1048 = vpop.f32.mrf.mxu0
  %v1049 = vadd.f32 0.0, %v1048
  %v1050 = vpop.f32.mrf.mxu0
  %1051 = vdwg.mxu0
  %v1053 = vrot.slane %v1049, 2
  %1054 = vrot.lane.b32.xlu0 %v1053, 32
  %v1055 = vpop.permute.xlu0 %1054
  %v1057 = vrot.slane %v1049, 4
  %1058 = vrot.lane.b32.xlu0 %v1057, 64
  %v1059 = vpop.permute.xlu0 %1058
  %v1061 = vrot.slane %v1049, 6
  %1062 = vrot.lane.b32.xlu0 %v1061, 96
  %v1063 = vpop.permute.xlu0 %1062
  %v1065 = vsel %vm697, %v1049, %v1055
  %v1066 = vsel %vm879, %v1065, %v1059
  %v1067 = vsel %vm881, %v1066, %v1063
  %1068 = vst [vmem:[#allocation2 + $0x2] sm:$0x3] %v1067
  %1069 = vrot.lane.b32.xlu0 %v688, 64
  %v1070 = vpop.permute.xlu0 %1069
  %1071 = vrot.lane.b32.xlu0 %v565, 64
  %v1072 = vpop.permute.xlu0 %1071
  %v1073 = vsel %vm697, %v1070, 0
  %v1075 = vsel %vm697, %v1072, 0
  %1077 = vmatprep.subr.mxu0 0.0
  %1078 = vmatpush1.xpose.msra.mxu0 0.0
  %1079 = vmatprep.subr.mxu0 0.0
  %1080 = vmatpush1.xpose.msra.mxu0 0.0
  %1081 = vmatprep.subr.mxu0 0.0
  %1082 = vmatpush1.xpose.msra.mxu0 0.0
  %1083 = vmatprep.subr.mxu0 0.0
  %1084 = vmatpush1.xpose.msra.mxu0 0.0
  %1085 = vmatprep.subr.mxu0 0.0
  %1086 = vmatpush1.xpose.msra.mxu0 0.0
  %1087 = vmatprep.subr.mxu0 0.0
  %1088 = vmatpush1.xpose.msra.mxu0 0.0
  %1089 = vmatprep.subr.mxu0 0.0
  %1090 = vmatpush1.xpose.msra.mxu0 0.0
  %1091 = vmatprep.subr.mxu0 0.0
  %1092 = vmatpush1.xpose.msra.mxu0 0.0
  %1093 = vmatprep.subr.mxu0 0.0
  %1094 = vmatpush1.xpose.msra.mxu0 0.0
  %1095 = vmatprep.subr.mxu0 0.0
  %1096 = vmatpush1.xpose.msra.mxu0 0.0
  %1097 = vmatprep.subr.mxu0 0.0
  %1098 = vmatpush1.xpose.msra.mxu0 0.0
  %1099 = vmatprep.subr.mxu0 0.0
  %1100 = vmatpush1.xpose.msra.mxu0 0.0
  %1101 = vmatprep.subr.mxu0 0.0
  %1102 = vmatpush1.xpose.msra.mxu0 0.0
  %1103 = vmatprep.subr.mxu0 0.0
  %1104 = vmatpush1.xpose.msra.mxu0 0.0
  %1105 = vmatprep.subr.mxu0 0.0
  %1106 = vmatpush1.xpose.msra.mxu0 0.0
  %1107 = vmatprep.subr.mxu0 0.0
  %1108 = vmatpush1.xpose.msra.mxu0 %v1075
  %1109 = vmatprep.subr.mxu0 0.0
  %1110 = vmatpush2.xpose.msra.mxu0 0.0
  %1111 = vmatprep.subr.mxu0 0.0
  %1112 = vmatpush2.xpose.msra.mxu0 0.0
  %1113 = vmatprep.subr.mxu0 0.0
  %1114 = vmatpush2.xpose.msra.mxu0 0.0
  %1115 = vmatprep.subr.mxu0 0.0
  %1116 = vmatpush2.xpose.msra.mxu0 0.0
  %1117 = vmatprep.subr.mxu0 0.0
  %1118 = vmatpush2.xpose.msra.mxu0 0.0
  %1119 = vmatprep.subr.mxu0 0.0
  %1120 = vmatpush2.xpose.msra.mxu0 0.0
  %1121 = vmatprep.subr.mxu0 0.0
  %1122 = vmatpush2.xpose.msra.mxu0 0.0
  %1123 = vmatprep.subr.mxu0 0.0
  %1124 = vmatpush2.xpose.msra.mxu0 0.0
  %1125 = vmatprep.subr.mxu0 0.0
  %1126 = vmatpush2.xpose.msra.mxu0 0.0
  %1127 = vmatprep.subr.mxu0 0.0
  %1128 = vmatpush2.xpose.msra.mxu0 0.0
  %1129 = vmatprep.subr.mxu0 0.0
  %1130 = vmatpush2.xpose.msra.mxu0 0.0
  %1131 = vmatprep.subr.mxu0 0.0
  %1132 = vmatpush2.xpose.msra.mxu0 0.0
  %1133 = vmatprep.subr.mxu0 0.0
  %1134 = vmatpush2.xpose.msra.mxu0 0.0
  %1135 = vmatprep.subr.mxu0 0.0
  %1136 = vmatpush2.xpose.msra.mxu0 0.0
  %1137 = vmatprep.subr.mxu0 0.0
  %1138 = vmatpush2.xpose.msra.mxu0 0.0
  %1139 = vmatprep.subr.mxu0 0.0
  %1140 = vmatpush2.xpose.msra.mxu0 0.0
  %1141 = vmatprep.mubr.f32.mxu0 0.0
  %1142 = vmatmul.mubr.f32.gmra.mxu0 %v1073
  %v1143 = vpop.f32.mrf.mxu0
  %v1144 = vadd.f32 0.0, %v1143
  %v1145 = vpop.f32.mrf.mxu0
  %1146 = vdwg.mxu0
  %v1147 = vmul.f32 %v1144, 0.17677669
  %v1148 = vadd.f32 %v1147, %v778
  %v1149 = vsel %vm780, %v1148, -inf
  %1150 = vmax.xlane.f32.xlu0 %v1149
  %v1151 = vpop.xlane.xlu0 %1150
  %v1152 = vsub.f32 %v1148, %v1151
  %v1153 = vmul.f32 %v1152, 1.442695
  %v1154 = vpow.pop %v1153
  %v1155 = vsel %vm780, %v1154, 0.0
  %1156 = vadd.xlane.f32.xlu0 %v1155
  %v1157 = vpop.xlane.xlu0 %1156
  %v1158 = vrcp.pop %v1157
  %v1159 = vmul.f32 %v1154, %v1158
  %1160 = vrot.lane.b32.xlu0 %v606, 64
  %v1161 = vpop.permute.xlu0 %1160
  %v1164 = vsel %vm780, %v1159, 0
  %1166 = vmatprep.subr.mxu0 0.0
  %1167 = vmatpush1.msra.mxu0 0.0
  %1168 = vmatprep.subr.mxu0 0.0
  %1169 = vmatpush1.msra.mxu0 0.0
  %1170 = vmatprep.subr.mxu0 0.0
  %1171 = vmatpush1.msra.mxu0 0.0
  %1172 = vmatprep.subr.mxu0 0.0
  %1173 = vmatpush1.msra.mxu0 0.0
  %1174 = vmatprep.subr.mxu0 0.0
  %1175 = vmatpush1.msra.mxu0 0.0
  %1176 = vmatprep.subr.mxu0 0.0
  %1177 = vmatpush1.msra.mxu0 0.0
  %1178 = vmatprep.subr.mxu0 0.0
  %1179 = vmatpush1.msra.mxu0 0.0
  %1180 = vmatprep.subr.mxu0 0.0
  %1181 = vmatpush1.msra.mxu0 0.0
  %1182 = vmatprep.subr.mxu0 0.0
  %1183 = vmatpush1.msra.mxu0 0.0
  %1184 = vmatprep.subr.mxu0 0.0
  %1185 = vmatpush1.msra.mxu0 0.0
  %1186 = vmatprep.subr.mxu0 0.0
  %1187 = vmatpush1.msra.mxu0 0.0
  %1188 = vmatprep.subr.mxu0 0.0
  %1189 = vmatpush1.msra.mxu0 0.0
  %1190 = vmatprep.subr.mxu0 0.0
  %1191 = vmatpush1.msra.mxu0 0.0
  %1192 = vmatprep.subr.mxu0 0.0
  %1193 = vmatpush1.msra.mxu0 0.0
  %1194 = vmatprep.subr.mxu0 0.0
  %1195 = vmatpush1.msra.mxu0 0.0
  %1196 = vmatprep.subr.mxu0 0.0
  %1197 = vmatpush1.msra.mxu0 %v1161
  %1198 = vmatprep.subr.mxu0 0.0
  %1199 = vmatpush2.msra.mxu0 0.0
  %1200 = vmatprep.subr.mxu0 0.0
  %1201 = vmatpush2.msra.mxu0 0.0
  %1202 = vmatprep.subr.mxu0 0.0
  %1203 = vmatpush2.msra.mxu0 0.0
  %1204 = vmatprep.subr.mxu0 0.0
  %1205 = vmatpush2.msra.mxu0 0.0
  %1206 = vmatprep.subr.mxu0 0.0
  %1207 = vmatpush2.msra.mxu0 0.0
  %1208 = vmatprep.subr.mxu0 0.0
  %1209 = vmatpush2.msra.mxu0 0.0
  %1210 = vmatprep.subr.mxu0 0.0
  %1211 = vmatpush2.msra.mxu0 0.0
  %1212 = vmatprep.subr.mxu0 0.0
  %1213 = vmatpush2.msra.mxu0 0.0
  %1214 = vmatprep.subr.mxu0 0.0
  %1215 = vmatpush2.msra.mxu0 0.0
  %1216 = vmatprep.subr.mxu0 0.0
  %1217 = vmatpush2.msra.mxu0 0.0
  %1218 = vmatprep.subr.mxu0 0.0
  %1219 = vmatpush2.msra.mxu0 0.0
  %1220 = vmatprep.subr.mxu0 0.0
  %1221 = vmatpush2.msra.mxu0 0.0
  %1222 = vmatprep.subr.mxu0 0.0
  %1223 = vmatpush2.msra.mxu0 0.0
  %1224 = vmatprep.subr.mxu0 0.0
  %1225 = vmatpush2.msra.mxu0 0.0
  %1226 = vmatprep.subr.mxu0 0.0
  %1227 = vmatpush2.msra.mxu0 0.0
  %1228 = vmatprep.subr.mxu0 0.0
  %1229 = vmatpush2.msra.mxu0 0.0
  %1230 = vmatprep.mubr.f32.mxu0 0.0
  %1231 = vmatmul.mubr.f32.gmra.mxu0 %v1164
  %v1232 = vpop.f32.mrf.mxu0
  %v1233 = vadd.f32 0.0, %v1232
  %v1234 = vpop.f32.mrf.mxu0
  %1235 = vdwg.mxu0
  %v1237 = vrot.slane %v1233, 2
  %1238 = vrot.lane.b32.xlu0 %v1237, 32
  %v1239 = vpop.permute.xlu0 %1238
  %v1241 = vrot.slane %v1233, 4
  %1242 = vrot.lane.b32.xlu0 %v1241, 64
  %v1243 = vpop.permute.xlu0 %1242
  %v1245 = vrot.slane %v1233, 6
  %1246 = vrot.lane.b32.xlu0 %v1245, 96
  %v1247 = vpop.permute.xlu0 %1246
  %v1249 = vsel %vm697, %v1233, %v1239
  %v1250 = vsel %vm879, %v1249, %v1243
  %v1251 = vsel %vm881, %v1250, %v1247
  %1252 = vst [vmem:[#allocation2 + $0x4] sm:$0x3] %v1251
  %1253 = vrot.lane.b32.xlu0 %v688, 32
  %v1254 = vpop.permute.xlu0 %1253
  %1255 = vrot.lane.b32.xlu0 %v565, 32
  %v1256 = vpop.permute.xlu0 %1255
  %v1257 = vsel %vm697, %v1254, 0
  %v1259 = vsel %vm697, %v1256, 0
  %1261 = vmatprep.subr.mxu0 0.0
  %1262 = vmatpush1.xpose.msra.mxu0 0.0
  %1263 = vmatprep.subr.mxu0 0.0
  %1264 = vmatpush1.xpose.msra.mxu0 0.0
  %1265 = vmatprep.subr.mxu0 0.0
  %1266 = vmatpush1.xpose.msra.mxu0 0.0
  %1267 = vmatprep.subr.mxu0 0.0
  %1268 = vmatpush1.xpose.msra.mxu0 0.0
  %1269 = vmatprep.subr.mxu0 0.0
  %1270 = vmatpush1.xpose.msra.mxu0 0.0
  %1271 = vmatprep.subr.mxu0 0.0
  %1272 = vmatpush1.xpose.msra.mxu0 0.0
  %1273 = vmatprep.subr.mxu0 0.0
  %1274 = vmatpush1.xpose.msra.mxu0 0.0
  %1275 = vmatprep.subr.mxu0 0.0
  %1276 = vmatpush1.xpose.msra.mxu0 0.0
  %1277 = vmatprep.subr.mxu0 0.0
  %1278 = vmatpush1.xpose.msra.mxu0 0.0
  %1279 = vmatprep.subr.mxu0 0.0
  %1280 = vmatpush1.xpose.msra.mxu0 0.0
  %1281 = vmatprep.subr.mxu0 0.0
  %1282 = vmatpush1.xpose.msra.mxu0 0.0
  %1283 = vmatprep.subr.mxu0 0.0
  %1284 = vmatpush1.xpose.msra.mxu0 0.0
  %1285 = vmatprep.subr.mxu0 0.0
  %1286 = vmatpush1.xpose.msra.mxu0 0.0
  %1287 = vmatprep.subr.mxu0 0.0
  %1288 = vmatpush1.xpose.msra.mxu0 0.0
  %1289 = vmatprep.subr.mxu0 0.0
  %1290 = vmatpush1.xpose.msra.mxu0 0.0
  %1291 = vmatprep.subr.mxu0 0.0
  %1292 = vmatpush1.xpose.msra.mxu0 %v1259
  %1293 = vmatprep.subr.mxu0 0.0
  %1294 = vmatpush2.xpose.msra.mxu0 0.0
  %1295 = vmatprep.subr.mxu0 0.0
  %1296 = vmatpush2.xpose.msra.mxu0 0.0
  %1297 = vmatprep.subr.mxu0 0.0
  %1298 = vmatpush2.xpose.msra.mxu0 0.0
  %1299 = vmatprep.subr.mxu0 0.0
  %1300 = vmatpush2.xpose.msra.mxu0 0.0
  %1301 = vmatprep.subr.mxu0 0.0
  %1302 = vmatpush2.xpose.msra.mxu0 0.0
  %1303 = vmatprep.subr.mxu0 0.0
  %1304 = vmatpush2.xpose.msra.mxu0 0.0
  %1305 = vmatprep.subr.mxu0 0.0
  %1306 = vmatpush2.xpose.msra.mxu0 0.0
  %1307 = vmatprep.subr.mxu0 0.0
  %1308 = vmatpush2.xpose.msra.mxu0 0.0
  %1309 = vmatprep.subr.mxu0 0.0
  %1310 = vmatpush2.xpose.msra.mxu0 0.0
  %1311 = vmatprep.subr.mxu0 0.0
  %1312 = vmatpush2.xpose.msra.mxu0 0.0
  %1313 = vmatprep.subr.mxu0 0.0
  %1314 = vmatpush2.xpose.msra.mxu0 0.0
  %1315 = vmatprep.subr.mxu0 0.0
  %1316 = vmatpush2.xpose.msra.mxu0 0.0
  %1317 = vmatprep.subr.mxu0 0.0
  %1318 = vmatpush2.xpose.msra.mxu0 0.0
  %1319 = vmatprep.subr.mxu0 0.0
  %1320 = vmatpush2.xpose.msra.mxu0 0.0
  %1321 = vmatprep.subr.mxu0 0.0
  %1322 = vmatpush2.xpose.msra.mxu0 0.0
  %1323 = vmatprep.subr.mxu0 0.0
  %1324 = vmatpush2.xpose.msra.mxu0 0.0
  %1325 = vmatprep.mubr.f32.mxu0 0.0
  %1326 = vmatmul.mubr.f32.gmra.mxu0 %v1257
  %v1327 = vpop.f32.mrf.mxu0
  %v1328 = vadd.f32 0.0, %v1327
  %v1329 = vpop.f32.mrf.mxu0
  %1330 = vdwg.mxu0
  %v1331 = vmul.f32 %v1328, 0.17677669
  %v1332 = vadd.f32 %v1331, %v778
  %v1333 = vsel %vm780, %v1332, -inf
  %1334 = vmax.xlane.f32.xlu0 %v1333
  %v1335 = vpop.xlane.xlu0 %1334
  %v1336 = vsub.f32 %v1332, %v1335
  %v1337 = vmul.f32 %v1336, 1.442695
  %v1338 = vpow.pop %v1337
  %v1339 = vsel %vm780, %v1338, 0.0
  %1340 = vadd.xlane.f32.xlu0 %v1339
  %v1341 = vpop.xlane.xlu0 %1340
  %v1342 = vrcp.pop %v1341
  %v1343 = vmul.f32 %v1338, %v1342
  %1344 = vrot.lane.b32.xlu0 %v606, 32
  %v1345 = vpop.permute.xlu0 %1344
  %v1348 = vsel %vm780, %v1343, 0
  %1350 = vmatprep.subr.mxu0 0.0
  %1351 = vmatpush1.msra.mxu0 0.0
  %1352 = vmatprep.subr.mxu0 0.0
  %1353 = vmatpush1.msra.mxu0 0.0
  %1354 = vmatprep.subr.mxu0 0.0
  %1355 = vmatpush1.msra.mxu0 0.0
  %1356 = vmatprep.subr.mxu0 0.0
  %1357 = vmatpush1.msra.mxu0 0.0
  %1358 = vmatprep.subr.mxu0 0.0
  %1359 = vmatpush1.msra.mxu0 0.0
  %1360 = vmatprep.subr.mxu0 0.0
  %1361 = vmatpush1.msra.mxu0 0.0
  %1362 = vmatprep.subr.mxu0 0.0
  %1363 = vmatpush1.msra.mxu0 0.0
  %1364 = vmatprep.subr.mxu0 0.0
  %1365 = vmatpush1.msra.mxu0 0.0
  %1366 = vmatprep.subr.mxu0 0.0
  %1367 = vmatpush1.msra.mxu0 0.0
  %1368 = vmatprep.subr.mxu0 0.0
  %1369 = vmatpush1.msra.mxu0 0.0
  %1370 = vmatprep.subr.mxu0 0.0
  %1371 = vmatpush1.msra.mxu0 0.0
  %1372 = vmatprep.subr.mxu0 0.0
  %1373 = vmatpush1.msra.mxu0 0.0
  %1374 = vmatprep.subr.mxu0 0.0
  %1375 = vmatpush1.msra.mxu0 0.0
  %1376 = vmatprep.subr.mxu0 0.0
  %1377 = vmatpush1.msra.mxu0 0.0
  %1378 = vmatprep.subr.mxu0 0.0
  %1379 = vmatpush1.msra.mxu0 0.0
  %1380 = vmatprep.subr.mxu0 0.0
  %1381 = vmatpush1.msra.mxu0 %v1345
  %1382 = vmatprep.subr.mxu0 0.0
  %1383 = vmatpush2.msra.mxu0 0.0
  %1384 = vmatprep.subr.mxu0 0.0
  %1385 = vmatpush2.msra.mxu0 0.0
  %1386 = vmatprep.subr.mxu0 0.0
  %1387 = vmatpush2.msra.mxu0 0.0
  %1388 = vmatprep.subr.mxu0 0.0
  %1389 = vmatpush2.msra.mxu0 0.0
  %1390 = vmatprep.subr.mxu0 0.0
  %1391 = vmatpush2.msra.mxu0 0.0
  %1392 = vmatprep.subr.mxu0 0.0
  %1393 = vmatpush2.msra.mxu0 0.0
  %1394 = vmatprep.subr.mxu0 0.0
  %1395 = vmatpush2.msra.mxu0 0.0
  %1396 = vmatprep.subr.mxu0 0.0
  %1397 = vmatpush2.msra.mxu0 0.0
  %1398 = vmatprep.subr.mxu0 0.0
  %1399 = vmatpush2.msra.mxu0 0.0
  %1400 = vmatprep.subr.mxu0 0.0
  %1401 = vmatpush2.msra.mxu0 0.0
  %1402 = vmatprep.subr.mxu0 0.0
  %1403 = vmatpush2.msra.mxu0 0.0
  %1404 = vmatprep.subr.mxu0 0.0
  %1405 = vmatpush2.msra.mxu0 0.0
  %1406 = vmatprep.subr.mxu0 0.0
  %1407 = vmatpush2.msra.mxu0 0.0
  %1408 = vmatprep.subr.mxu0 0.0
  %1409 = vmatpush2.msra.mxu0 0.0
  %1410 = vmatprep.subr.mxu0 0.0
  %1411 = vmatpush2.msra.mxu0 0.0
  %1412 = vmatprep.subr.mxu0 0.0
  %1413 = vmatpush2.msra.mxu0 0.0
  %1414 = vmatprep.mubr.f32.mxu0 0.0
  %1415 = vmatmul.mubr.f32.gmra.mxu0 %v1348
  %v1416 = vpop.f32.mrf.mxu0
  %v1417 = vadd.f32 0.0, %v1416
  %v1418 = vpop.f32.mrf.mxu0
  %1419 = vdwg.mxu0
  %v1421 = vrot.slane %v1417, 2
  %1422 = vrot.lane.b32.xlu0 %v1421, 32
  %v1423 = vpop.permute.xlu0 %1422
  %v1425 = vrot.slane %v1417, 4
  %1426 = vrot.lane.b32.xlu0 %v1425, 64
  %v1427 = vpop.permute.xlu0 %1426
  %v1429 = vrot.slane %v1417, 6
  %1430 = vrot.lane.b32.xlu0 %v1429, 96
  %v1431 = vpop.permute.xlu0 %1430
  %v1433 = vsel %vm697, %v1417, %v1423
  %v1434 = vsel %vm879, %v1433, %v1427
  %v1435 = vsel %vm881, %v1434, %v1431
  %1436 = vst [vmem:[#allocation2 + $0x6] sm:$0x3] %v1435
  %v1437 = vld [vmem:[%s1 + $0x1] sm:$0x1]
  %v1439 = vsel %vm697, %v693, 0
  %v1442 = vsel %vm697, %v569, 0
  %1444 = vmatprep.subr.mxu0 0.0
  %1445 = vmatpush1.xpose.msra.mxu0 0.0
  %1446 = vmatprep.subr.mxu0 0.0
  %1447 = vmatpush1.xpose.msra.mxu0 0.0
  %1448 = vmatprep.subr.mxu0 0.0
  %1449 = vmatpush1.xpose.msra.mxu0 0.0
  %1450 = vmatprep.subr.mxu0 0.0
  %1451 = vmatpush1.xpose.msra.mxu0 0.0
  %1452 = vmatprep.subr.mxu0 0.0
  %1453 = vmatpush1.xpose.msra.mxu0 0.0
  %1454 = vmatprep.subr.mxu0 0.0
  %1455 = vmatpush1.xpose.msra.mxu0 0.0
  %1456 = vmatprep.subr.mxu0 0.0
  %1457 = vmatpush1.xpose.msra.mxu0 0.0
  %1458 = vmatprep.subr.mxu0 0.0
  %1459 = vmatpush1.xpose.msra.mxu0 0.0
  %1460 = vmatprep.subr.mxu0 0.0
  %1461 = vmatpush1.xpose.msra.mxu0 0.0
  %1462 = vmatprep.subr.mxu0 0.0
  %1463 = vmatpush1.xpose.msra.mxu0 0.0
  %1464 = vmatprep.subr.mxu0 0.0
  %1465 = vmatpush1.xpose.msra.mxu0 0.0
  %1466 = vmatprep.subr.mxu0 0.0
  %1467 = vmatpush1.xpose.msra.mxu0 0.0
  %1468 = vmatprep.subr.mxu0 0.0
  %1469 = vmatpush1.xpose.msra.mxu0 0.0
  %1470 = vmatprep.subr.mxu0 0.0
  %1471 = vmatpush1.xpose.msra.mxu0 0.0
  %1472 = vmatprep.subr.mxu0 0.0
  %1473 = vmatpush1.xpose.msra.mxu0 0.0
  %1474 = vmatprep.subr.mxu0 0.0
  %1475 = vmatpush1.xpose.msra.mxu0 %v1442
  %1476 = vmatprep.subr.mxu0 0.0
  %1477 = vmatpush2.xpose.msra.mxu0 0.0
  %1478 = vmatprep.subr.mxu0 0.0
  %1479 = vmatpush2.xpose.msra.mxu0 0.0
  %1480 = vmatprep.subr.mxu0 0.0
  %1481 = vmatpush2.xpose.msra.mxu0 0.0
  %1482 = vmatprep.subr.mxu0 0.0
  %1483 = vmatpush2.xpose.msra.mxu0 0.0
  %1484 = vmatprep.subr.mxu0 0.0
  %1485 = vmatpush2.xpose.msra.mxu0 0.0
  %1486 = vmatprep.subr.mxu0 0.0
  %1487 = vmatpush2.xpose.msra.mxu0 0.0
  %1488 = vmatprep.subr.mxu0 0.0
  %1489 = vmatpush2.xpose.msra.mxu0 0.0
  %1490 = vmatprep.subr.mxu0 0.0
  %1491 = vmatpush2.xpose.msra.mxu0 0.0
  %1492 = vmatprep.subr.mxu0 0.0
  %1493 = vmatpush2.xpose.msra.mxu0 0.0
  %1494 = vmatprep.subr.mxu0 0.0
  %1495 = vmatpush2.xpose.msra.mxu0 0.0
  %1496 = vmatprep.subr.mxu0 0.0
  %1497 = vmatpush2.xpose.msra.mxu0 0.0
  %1498 = vmatprep.subr.mxu0 0.0
  %1499 = vmatpush2.xpose.msra.mxu0 0.0
  %1500 = vmatprep.subr.mxu0 0.0
  %1501 = vmatpush2.xpose.msra.mxu0 0.0
  %1502 = vmatprep.subr.mxu0 0.0
  %1503 = vmatpush2.xpose.msra.mxu0 0.0
  %1504 = vmatprep.subr.mxu0 0.0
  %1505 = vmatpush2.xpose.msra.mxu0 0.0
  %1506 = vmatprep.subr.mxu0 0.0
  %1507 = vmatpush2.xpose.msra.mxu0 0.0
  %1508 = vmatprep.mubr.f32.mxu0 0.0
  %1509 = vmatmul.mubr.f32.gmra.mxu0 %v1439
  %v1510 = vpop.f32.mrf.mxu0
  %v1511 = vadd.f32 0.0, %v1510
  %v1512 = vpop.f32.mrf.mxu0
  %1513 = vdwg.mxu0
  %v1514 = vmul.f32 %v1511, 0.17677669
  %v1515 = vlaneseq
  %v1516 = vshrl.u32 %v1515, 7
  %v1517 = vsub.s32 0, %v1516
  %v1518 = vrot.slane %v1437, %v1517
  %v1519 = vadd.f32 %v1514, %v1518
  %v1520 = vsel %vm780, %v1519, -inf
  %1521 = vmax.xlane.f32.xlu0 %v1520
  %v1522 = vpop.xlane.xlu0 %1521
  %v1523 = vsub.f32 %v1519, %v1522
  %v1524 = vmul.f32 %v1523, 1.442695
  %v1525 = vpow.pop %v1524
  %v1526 = vsel %vm780, %v1525, 0.0
  %1527 = vadd.xlane.f32.xlu0 %v1526
  %v1528 = vpop.xlane.xlu0 %1527
  %v1529 = vrcp.pop %v1528
  %v1530 = vmul.f32 %v1525, %v1529
  %v1532 = vsel %vm780, %v1530, 0
  %1534 = vmatprep.subr.mxu0 0.0
  %1535 = vmatpush1.msra.mxu0 0.0
  %1536 = vmatprep.subr.mxu0 0.0
  %1537 = vmatpush1.msra.mxu0 0.0
  %1538 = vmatprep.subr.mxu0 0.0
  %1539 = vmatpush1.msra.mxu0 0.0
  %1540 = vmatprep.subr.mxu0 0.0
  %1541 = vmatpush1.msra.mxu0 0.0
  %1542 = vmatprep.subr.mxu0 0.0
  %1543 = vmatpush1.msra.mxu0 0.0
  %1544 = vmatprep.subr.mxu0 0.0
  %1545 = vmatpush1.msra.mxu0 0.0
  %1546 = vmatprep.subr.mxu0 0.0
  %1547 = vmatpush1.msra.mxu0 0.0
  %1548 = vmatprep.subr.mxu0 0.0
  %1549 = vmatpush1.msra.mxu0 0.0
  %1550 = vmatprep.subr.mxu0 0.0
  %1551 = vmatpush1.msra.mxu0 0.0
  %1552 = vmatprep.subr.mxu0 0.0
  %1553 = vmatpush1.msra.mxu0 0.0
  %1554 = vmatprep.subr.mxu0 0.0
  %1555 = vmatpush1.msra.mxu0 0.0
  %1556 = vmatprep.subr.mxu0 0.0
  %1557 = vmatpush1.msra.mxu0 0.0
  %1558 = vmatprep.subr.mxu0 0.0
  %1559 = vmatpush1.msra.mxu0 0.0
  %1560 = vmatprep.subr.mxu0 0.0
  %1561 = vmatpush1.msra.mxu0 0.0
  %1562 = vmatprep.subr.mxu0 0.0
  %1563 = vmatpush1.msra.mxu0 0.0
  %1564 = vmatprep.subr.mxu0 0.0
  %1565 = vmatpush1.msra.mxu0 %v609
  %1566 = vmatprep.subr.mxu0 0.0
  %1567 = vmatpush2.msra.mxu0 0.0
  %1568 = vmatprep.subr.mxu0 0.0
  %1569 = vmatpush2.msra.mxu0 0.0
  %1570 = vmatprep.subr.mxu0 0.0
  %1571 = vmatpush2.msra.mxu0 0.0
  %1572 = vmatprep.subr.mxu0 0.0
  %1573 = vmatpush2.msra.mxu0 0.0
  %1574 = vmatprep.subr.mxu0 0.0
  %1575 = vmatpush2.msra.mxu0 0.0
  %1576 = vmatprep.subr.mxu0 0.0
  %1577 = vmatpush2.msra.mxu0 0.0
  %1578 = vmatprep.subr.mxu0 0.0
  %1579 = vmatpush2.msra.mxu0 0.0
  %1580 = vmatprep.subr.mxu0 0.0
  %1581 = vmatpush2.msra.mxu0 0.0
  %1582 = vmatprep.subr.mxu0 0.0
  %1583 = vmatpush2.msra.mxu0 0.0
  %1584 = vmatprep.subr.mxu0 0.0
  %1585 = vmatpush2.msra.mxu0 0.0
  %1586 = vmatprep.subr.mxu0 0.0
  %1587 = vmatpush2.msra.mxu0 0.0
  %1588 = vmatprep.subr.mxu0 0.0
  %1589 = vmatpush2.msra.mxu0 0.0
  %1590 = vmatprep.subr.mxu0 0.0
  %1591 = vmatpush2.msra.mxu0 0.0
  %1592 = vmatprep.subr.mxu0 0.0
  %1593 = vmatpush2.msra.mxu0 0.0
  %1594 = vmatprep.subr.mxu0 0.0
  %1595 = vmatpush2.msra.mxu0 0.0
  %1596 = vmatprep.subr.mxu0 0.0
  %1597 = vmatpush2.msra.mxu0 0.0
  %1598 = vmatprep.mubr.f32.mxu0 0.0
  %1599 = vmatmul.mubr.f32.gmra.mxu0 %v1532
  %v1600 = vpop.f32.mrf.mxu0
  %v1601 = vadd.f32 0.0, %v1600
  %v1602 = vpop.f32.mrf.mxu0
  %1603 = vdwg.mxu0
  %v1605 = vrot.slane %v1601, 2
  %1606 = vrot.lane.b32.xlu0 %v1605, 32
  %v1607 = vpop.permute.xlu0 %1606
  %v1609 = vrot.slane %v1601, 4
  %1610 = vrot.lane.b32.xlu0 %v1609, 64
  %v1611 = vpop.permute.xlu0 %1610
  %v1613 = vrot.slane %v1601, 6
  %1614 = vrot.lane.b32.xlu0 %v1613, 96
  %v1615 = vpop.permute.xlu0 %1614
  %v1617 = vsel %vm697, %v1601, %v1607
  %v1618 = vsel %vm879, %v1617, %v1611
  %v1619 = vsel %vm881, %v1618, %v1615
  %1620 = vst [vmem:[#allocation2 + $0x8] sm:$0x3] %v1619
  %1621 = vrot.lane.b32.xlu0 %v693, 96
  %v1622 = vpop.permute.xlu0 %1621
  %1623 = vrot.lane.b32.xlu0 %v569, 96
  %v1624 = vpop.permute.xlu0 %1623
  %v1625 = vsel %vm697, %v1622, 0
  %v1627 = vsel %vm697, %v1624, 0
  %1629 = vmatprep.subr.mxu0 0.0
  %1630 = vmatpush1.xpose.msra.mxu0 0.0
  %1631 = vmatprep.subr.mxu0 0.0
  %1632 = vmatpush1.xpose.msra.mxu0 0.0
  %1633 = vmatprep.subr.mxu0 0.0
  %1634 = vmatpush1.xpose.msra.mxu0 0.0
  %1635 = vmatprep.subr.mxu0 0.0
  %1636 = vmatpush1.xpose.msra.mxu0 0.0
  %1637 = vmatprep.subr.mxu0 0.0
  %1638 = vmatpush1.xpose.msra.mxu0 0.0
  %1639 = vmatprep.subr.mxu0 0.0
  %1640 = vmatpush1.xpose.msra.mxu0 0.0
  %1641 = vmatprep.subr.mxu0 0.0
  %1642 = vmatpush1.xpose.msra.mxu0 0.0
  %1643 = vmatprep.subr.mxu0 0.0
  %1644 = vmatpush1.xpose.msra.mxu0 0.0
  %1645 = vmatprep.subr.mxu0 0.0
  %1646 = vmatpush1.xpose.msra.mxu0 0.0
  %1647 = vmatprep.subr.mxu0 0.0
  %1648 = vmatpush1.xpose.msra.mxu0 0.0
  %1649 = vmatprep.subr.mxu0 0.0
  %1650 = vmatpush1.xpose.msra.mxu0 0.0
  %1651 = vmatprep.subr.mxu0 0.0
  %1652 = vmatpush1.xpose.msra.mxu0 0.0
  %1653 = vmatprep.subr.mxu0 0.0
  %1654 = vmatpush1.xpose.msra.mxu0 0.0
  %1655 = vmatprep.subr.mxu0 0.0
  %1656 = vmatpush1.xpose.msra.mxu0 0.0
  %1657 = vmatprep.subr.mxu0 0.0
  %1658 = vmatpush1.xpose.msra.mxu0 0.0
  %1659 = vmatprep.subr.mxu0 0.0
  %1660 = vmatpush1.xpose.msra.mxu0 %v1627
  %1661 = vmatprep.subr.mxu0 0.0
  %1662 = vmatpush2.xpose.msra.mxu0 0.0
  %1663 = vmatprep.subr.mxu0 0.0
  %1664 = vmatpush2.xpose.msra.mxu0 0.0
  %1665 = vmatprep.subr.mxu0 0.0
  %1666 = vmatpush2.xpose.msra.mxu0 0.0
  %1667 = vmatprep.subr.mxu0 0.0
  %1668 = vmatpush2.xpose.msra.mxu0 0.0
  %1669 = vmatprep.subr.mxu0 0.0
  %1670 = vmatpush2.xpose.msra.mxu0 0.0
  %1671 = vmatprep.subr.mxu0 0.0
  %1672 = vmatpush2.xpose.msra.mxu0 0.0
  %1673 = vmatprep.subr.mxu0 0.0
  %1674 = vmatpush2.xpose.msra.mxu0 0.0
  %1675 = vmatprep.subr.mxu0 0.0
  %1676 = vmatpush2.xpose.msra.mxu0 0.0
  %1677 = vmatprep.subr.mxu0 0.0
  %1678 = vmatpush2.xpose.msra.mxu0 0.0
  %1679 = vmatprep.subr.mxu0 0.0
  %1680 = vmatpush2.xpose.msra.mxu0 0.0
  %1681 = vmatprep.subr.mxu0 0.0
  %1682 = vmatpush2.xpose.msra.mxu0 0.0
  %1683 = vmatprep.subr.mxu0 0.0
  %1684 = vmatpush2.xpose.msra.mxu0 0.0
  %1685 = vmatprep.subr.mxu0 0.0
  %1686 = vmatpush2.xpose.msra.mxu0 0.0
  %1687 = vmatprep.subr.mxu0 0.0
  %1688 = vmatpush2.xpose.msra.mxu0 0.0
  %1689 = vmatprep.subr.mxu0 0.0
  %1690 = vmatpush2.xpose.msra.mxu0 0.0
  %1691 = vmatprep.subr.mxu0 0.0
  %1692 = vmatpush2.xpose.msra.mxu0 0.0
  %1693 = vmatprep.mubr.f32.mxu0 0.0
  %1694 = vmatmul.mubr.f32.gmra.mxu0 %v1625
  %v1695 = vpop.f32.mrf.mxu0
  %v1696 = vadd.f32 0.0, %v1695
  %v1697 = vpop.f32.mrf.mxu0
  %1698 = vdwg.mxu0
  %v1699 = vmul.f32 %v1696, 0.17677669
  %v1700 = vadd.f32 %v1699, %v1518
  %v1701 = vsel %vm780, %v1700, -inf
  %1702 = vmax.xlane.f32.xlu0 %v1701
  %v1703 = vpop.xlane.xlu0 %1702
  %v1704 = vsub.f32 %v1700, %v1703
  %v1705 = vmul.f32 %v1704, 1.442695
  %v1706 = vpow.pop %v1705
  %v1707 = vsel %vm780, %v1706, 0.0
  %1708 = vadd.xlane.f32.xlu0 %v1707
  %v1709 = vpop.xlane.xlu0 %1708
  %v1710 = vrcp.pop %v1709
  %v1711 = vmul.f32 %v1706, %v1710
  %1713 = vrot.lane.b32.xlu0 %v609, 96
  %v1714 = vpop.permute.xlu0 %1713
  %v1717 = vsel %vm780, %v1711, 0
  %1719 = vmatprep.subr.mxu0 0.0
  %1720 = vmatpush1.msra.mxu0 0.0
  %1721 = vmatprep.subr.mxu0 0.0
  %1722 = vmatpush1.msra.mxu0 0.0
  %1723 = vmatprep.subr.mxu0 0.0
  %1724 = vmatpush1.msra.mxu0 0.0
  %1725 = vmatprep.subr.mxu0 0.0
  %1726 = vmatpush1.msra.mxu0 0.0
  %1727 = vmatprep.subr.mxu0 0.0
  %1728 = vmatpush1.msra.mxu0 0.0
  %1729 = vmatprep.subr.mxu0 0.0
  %1730 = vmatpush1.msra.mxu0 0.0
  %1731 = vmatprep.subr.mxu0 0.0
  %1732 = vmatpush1.msra.mxu0 0.0
  %1733 = vmatprep.subr.mxu0 0.0
  %1734 = vmatpush1.msra.mxu0 0.0
  %1735 = vmatprep.subr.mxu0 0.0
  %1736 = vmatpush1.msra.mxu0 0.0
  %1737 = vmatprep.subr.mxu0 0.0
  %1738 = vmatpush1.msra.mxu0 0.0
  %1739 = vmatprep.subr.mxu0 0.0
  %1740 = vmatpush1.msra.mxu0 0.0
  %1741 = vmatprep.subr.mxu0 0.0
  %1742 = vmatpush1.msra.mxu0 0.0
  %1743 = vmatprep.subr.mxu0 0.0
  %1744 = vmatpush1.msra.mxu0 0.0
  %1745 = vmatprep.subr.mxu0 0.0
  %1746 = vmatpush1.msra.mxu0 0.0
  %1747 = vmatprep.subr.mxu0 0.0
  %1748 = vmatpush1.msra.mxu0 0.0
  %1749 = vmatprep.subr.mxu0 0.0
  %1750 = vmatpush1.msra.mxu0 %v1714
  %1751 = vmatprep.subr.mxu0 0.0
  %1752 = vmatpush2.msra.mxu0 0.0
  %1753 = vmatprep.subr.mxu0 0.0
  %1754 = vmatpush2.msra.mxu0 0.0
  %1755 = vmatprep.subr.mxu0 0.0
  %1756 = vmatpush2.msra.mxu0 0.0
  %1757 = vmatprep.subr.mxu0 0.0
  %1758 = vmatpush2.msra.mxu0 0.0
  %1759 = vmatprep.subr.mxu0 0.0
  %1760 = vmatpush2.msra.mxu0 0.0
  %1761 = vmatprep.subr.mxu0 0.0
  %1762 = vmatpush2.msra.mxu0 0.0
  %1763 = vmatprep.subr.mxu0 0.0
  %1764 = vmatpush2.msra.mxu0 0.0
  %1765 = vmatprep.subr.mxu0 0.0
  %1766 = vmatpush2.msra.mxu0 0.0
  %1767 = vmatprep.subr.mxu0 0.0
  %1768 = vmatpush2.msra.mxu0 0.0
  %1769 = vmatprep.subr.mxu0 0.0
  %1770 = vmatpush2.msra.mxu0 0.0
  %1771 = vmatprep.subr.mxu0 0.0
  %1772 = vmatpush2.msra.mxu0 0.0
  %1773 = vmatprep.subr.mxu0 0.0
  %1774 = vmatpush2.msra.mxu0 0.0
  %1775 = vmatprep.subr.mxu0 0.0
  %1776 = vmatpush2.msra.mxu0 0.0
  %1777 = vmatprep.subr.mxu0 0.0
  %1778 = vmatpush2.msra.mxu0 0.0
  %1779 = vmatprep.subr.mxu0 0.0
  %1780 = vmatpush2.msra.mxu0 0.0
  %1781 = vmatprep.subr.mxu0 0.0
  %1782 = vmatpush2.msra.mxu0 0.0
  %1783 = vmatprep.mubr.f32.mxu0 0.0
  %1784 = vmatmul.mubr.f32.gmra.mxu0 %v1717
  %v1785 = vpop.f32.mrf.mxu0
  %v1786 = vadd.f32 0.0, %v1785
  %v1787 = vpop.f32.mrf.mxu0
  %1788 = vdwg.mxu0
  %v1790 = vrot.slane %v1786, 2
  %1791 = vrot.lane.b32.xlu0 %v1790, 32
  %v1792 = vpop.permute.xlu0 %1791
  %v1794 = vrot.slane %v1786, 4
  %1795 = vrot.lane.b32.xlu0 %v1794, 64
  %v1796 = vpop.permute.xlu0 %1795
  %v1798 = vrot.slane %v1786, 6
  %1799 = vrot.lane.b32.xlu0 %v1798, 96
  %v1800 = vpop.permute.xlu0 %1799
  %v1802 = vsel %vm697, %v1786, %v1792
  %v1803 = vsel %vm879, %v1802, %v1796
  %v1804 = vsel %vm881, %v1803, %v1800
  %1805 = vst [vmem:[#allocation2 + $0xa] sm:$0x3] %v1804
  %1806 = vrot.lane.b32.xlu0 %v693, 64
  %v1807 = vpop.permute.xlu0 %1806
  %1808 = vrot.lane.b32.xlu0 %v569, 64
  %v1809 = vpop.permute.xlu0 %1808
  %v1810 = vsel %vm697, %v1807, 0
  %v1812 = vsel %vm697, %v1809, 0
  %1814 = vmatprep.subr.mxu0 0.0
  %1815 = vmatpush1.xpose.msra.mxu0 0.0
  %1816 = vmatprep.subr.mxu0 0.0
  %1817 = vmatpush1.xpose.msra.mxu0 0.0
  %1818 = vmatprep.subr.mxu0 0.0
  %1819 = vmatpush1.xpose.msra.mxu0 0.0
  %1820 = vmatprep.subr.mxu0 0.0
  %1821 = vmatpush1.xpose.msra.mxu0 0.0
  %1822 = vmatprep.subr.mxu0 0.0
  %1823 = vmatpush1.xpose.msra.mxu0 0.0
  %1824 = vmatprep.subr.mxu0 0.0
  %1825 = vmatpush1.xpose.msra.mxu0 0.0
  %1826 = vmatprep.subr.mxu0 0.0
  %1827 = vmatpush1.xpose.msra.mxu0 0.0
  %1828 = vmatprep.subr.mxu0 0.0
  %1829 = vmatpush1.xpose.msra.mxu0 0.0
  %1830 = vmatprep.subr.mxu0 0.0
  %1831 = vmatpush1.xpose.msra.mxu0 0.0
  %1832 = vmatprep.subr.mxu0 0.0
  %1833 = vmatpush1.xpose.msra.mxu0 0.0
  %1834 = vmatprep.subr.mxu0 0.0
  %1835 = vmatpush1.xpose.msra.mxu0 0.0
  %1836 = vmatprep.subr.mxu0 0.0
  %1837 = vmatpush1.xpose.msra.mxu0 0.0
  %1838 = vmatprep.subr.mxu0 0.0
  %1839 = vmatpush1.xpose.msra.mxu0 0.0
  %1840 = vmatprep.subr.mxu0 0.0
  %1841 = vmatpush1.xpose.msra.mxu0 0.0
  %1842 = vmatprep.subr.mxu0 0.0
  %1843 = vmatpush1.xpose.msra.mxu0 0.0
  %1844 = vmatprep.subr.mxu0 0.0
  %1845 = vmatpush1.xpose.msra.mxu0 %v1812
  %1846 = vmatprep.subr.mxu0 0.0
  %1847 = vmatpush2.xpose.msra.mxu0 0.0
  %1848 = vmatprep.subr.mxu0 0.0
  %1849 = vmatpush2.xpose.msra.mxu0 0.0
  %1850 = vmatprep.subr.mxu0 0.0
  %1851 = vmatpush2.xpose.msra.mxu0 0.0
  %1852 = vmatprep.subr.mxu0 0.0
  %1853 = vmatpush2.xpose.msra.mxu0 0.0
  %1854 = vmatprep.subr.mxu0 0.0
  %1855 = vmatpush2.xpose.msra.mxu0 0.0
  %1856 = vmatprep.subr.mxu0 0.0
  %1857 = vmatpush2.xpose.msra.mxu0 0.0
  %1858 = vmatprep.subr.mxu0 0.0
  %1859 = vmatpush2.xpose.msra.mxu0 0.0
  %1860 = vmatprep.subr.mxu0 0.0
  %1861 = vmatpush2.xpose.msra.mxu0 0.0
  %1862 = vmatprep.subr.mxu0 0.0
  %1863 = vmatpush2.xpose.msra.mxu0 0.0
  %1864 = vmatprep.subr.mxu0 0.0
  %1865 = vmatpush2.xpose.msra.mxu0 0.0
  %1866 = vmatprep.subr.mxu0 0.0
  %1867 = vmatpush2.xpose.msra.mxu0 0.0
  %1868 = vmatprep.subr.mxu0 0.0
  %1869 = vmatpush2.xpose.msra.mxu0 0.0
  %1870 = vmatprep.subr.mxu0 0.0
  %1871 = vmatpush2.xpose.msra.mxu0 0.0
  %1872 = vmatprep.subr.mxu0 0.0
  %1873 = vmatpush2.xpose.msra.mxu0 0.0
  %1874 = vmatprep.subr.mxu0 0.0
  %1875 = vmatpush2.xpose.msra.mxu0 0.0
  %1876 = vmatprep.subr.mxu0 0.0
  %1877 = vmatpush2.xpose.msra.mxu0 0.0
  %1878 = vmatprep.mubr.f32.mxu0 0.0
  %1879 = vmatmul.mubr.f32.gmra.mxu0 %v1810
  %v1880 = vpop.f32.mrf.mxu0
  %v1881 = vadd.f32 0.0, %v1880
  %v1882 = vpop.f32.mrf.mxu0
  %1883 = vdwg.mxu0
  %v1884 = vmul.f32 %v1881, 0.17677669
  %v1885 = vadd.f32 %v1884, %v1518
  %v1886 = vsel %vm780, %v1885, -inf
  %1887 = vmax.xlane.f32.xlu0 %v1886
  %v1888 = vpop.xlane.xlu0 %1887
  %v1889 = vsub.f32 %v1885, %v1888
  %v1890 = vmul.f32 %v1889, 1.442695
  %v1891 = vpow.pop %v1890
  %v1892 = vsel %vm780, %v1891, 0.0
  %1893 = vadd.xlane.f32.xlu0 %v1892
  %v1894 = vpop.xlane.xlu0 %1893
  %v1895 = vrcp.pop %v1894
  %v1896 = vmul.f32 %v1891, %v1895
  %1897 = vrot.lane.b32.xlu0 %v609, 64
  %v1898 = vpop.permute.xlu0 %1897
  %v1901 = vsel %vm780, %v1896, 0
  %1903 = vmatprep.subr.mxu0 0.0
  %1904 = vmatpush1.msra.mxu0 0.0
  %1905 = vmatprep.subr.mxu0 0.0
  %1906 = vmatpush1.msra.mxu0 0.0
  %1907 = vmatprep.subr.mxu0 0.0
  %1908 = vmatpush1.msra.mxu0 0.0
  %1909 = vmatprep.subr.mxu0 0.0
  %1910 = vmatpush1.msra.mxu0 0.0
  %1911 = vmatprep.subr.mxu0 0.0
  %1912 = vmatpush1.msra.mxu0 0.0
  %1913 = vmatprep.subr.mxu0 0.0
  %1914 = vmatpush1.msra.mxu0 0.0
  %1915 = vmatprep.subr.mxu0 0.0
  %1916 = vmatpush1.msra.mxu0 0.0
  %1917 = vmatprep.subr.mxu0 0.0
  %1918 = vmatpush1.msra.mxu0 0.0
  %1919 = vmatprep.subr.mxu0 0.0
  %1920 = vmatpush1.msra.mxu0 0.0
  %1921 = vmatprep.subr.mxu0 0.0
  %1922 = vmatpush1.msra.mxu0 0.0
  %1923 = vmatprep.subr.mxu0 0.0
  %1924 = vmatpush1.msra.mxu0 0.0
  %1925 = vmatprep.subr.mxu0 0.0
  %1926 = vmatpush1.msra.mxu0 0.0
  %1927 = vmatprep.subr.mxu0 0.0
  %1928 = vmatpush1.msra.mxu0 0.0
  %1929 = vmatprep.subr.mxu0 0.0
  %1930 = vmatpush1.msra.mxu0 0.0
  %1931 = vmatprep.subr.mxu0 0.0
  %1932 = vmatpush1.msra.mxu0 0.0
  %1933 = vmatprep.subr.mxu0 0.0
  %1934 = vmatpush1.msra.mxu0 %v1898
  %1935 = vmatprep.subr.mxu0 0.0
  %1936 = vmatpush2.msra.mxu0 0.0
  %1937 = vmatprep.subr.mxu0 0.0
  %1938 = vmatpush2.msra.mxu0 0.0
  %1939 = vmatprep.subr.mxu0 0.0
  %1940 = vmatpush2.msra.mxu0 0.0
  %1941 = vmatprep.subr.mxu0 0.0
  %1942 = vmatpush2.msra.mxu0 0.0
  %1943 = vmatprep.subr.mxu0 0.0
  %1944 = vmatpush2.msra.mxu0 0.0
  %1945 = vmatprep.subr.mxu0 0.0
  %1946 = vmatpush2.msra.mxu0 0.0
  %1947 = vmatprep.subr.mxu0 0.0
  %1948 = vmatpush2.msra.mxu0 0.0
  %1949 = vmatprep.subr.mxu0 0.0
  %1950 = vmatpush2.msra.mxu0 0.0
  %1951 = vmatprep.subr.mxu0 0.0
  %1952 = vmatpush2.msra.mxu0 0.0
  %1953 = vmatprep.subr.mxu0 0.0
  %1954 = vmatpush2.msra.mxu0 0.0
  %1955 = vmatprep.subr.mxu0 0.0
  %1956 = vmatpush2.msra.mxu0 0.0
  %1957 = vmatprep.subr.mxu0 0.0
  %1958 = vmatpush2.msra.mxu0 0.0
  %1959 = vmatprep.subr.mxu0 0.0
  %1960 = vmatpush2.msra.mxu0 0.0
  %1961 = vmatprep.subr.mxu0 0.0
  %1962 = vmatpush2.msra.mxu0 0.0
  %1963 = vmatprep.subr.mxu0 0.0
  %1964 = vmatpush2.msra.mxu0 0.0
  %1965 = vmatprep.subr.mxu0 0.0
  %1966 = vmatpush2.msra.mxu0 0.0
  %1967 = vmatprep.mubr.f32.mxu0 0.0
  %1968 = vmatmul.mubr.f32.gmra.mxu0 %v1901
  %v1969 = vpop.f32.mrf.mxu0
  %v1970 = vadd.f32 0.0, %v1969
  %v1971 = vpop.f32.mrf.mxu0
  %1972 = vdwg.mxu0
  %v1974 = vrot.slane %v1970, 2
  %1975 = vrot.lane.b32.xlu0 %v1974, 32
  %v1976 = vpop.permute.xlu0 %1975
  %v1978 = vrot.slane %v1970, 4
  %1979 = vrot.lane.b32.xlu0 %v1978, 64
  %v1980 = vpop.permute.xlu0 %1979
  %v1982 = vrot.slane %v1970, 6
  %1983 = vrot.lane.b32.xlu0 %v1982, 96
  %v1984 = vpop.permute.xlu0 %1983
  %v1986 = vsel %vm697, %v1970, %v1976
  %v1987 = vsel %vm879, %v1986, %v1980
  %v1988 = vsel %vm881, %v1987, %v1984
  %1989 = vst [vmem:[#allocation2 + $0xc] sm:$0x3] %v1988
  %1990 = vrot.lane.b32.xlu0 %v693, 32
  %v1991 = vpop.permute.xlu0 %1990
  %1992 = vrot.lane.b32.xlu0 %v569, 32
  %v1993 = vpop.permute.xlu0 %1992
  %v1994 = vsel %vm697, %v1991, 0
  %v1996 = vsel %vm697, %v1993, 0
  %1998 = vmatprep.subr.mxu0 0.0
  %1999 = vmatpush1.xpose.msra.mxu0 0.0
  %2000 = vmatprep.subr.mxu0 0.0
  %2001 = vmatpush1.xpose.msra.mxu0 0.0
  %2002 = vmatprep.subr.mxu0 0.0
  %2003 = vmatpush1.xpose.msra.mxu0 0.0
  %2004 = vmatprep.subr.mxu0 0.0
  %2005 = vmatpush1.xpose.msra.mxu0 0.0
  %2006 = vmatprep.subr.mxu0 0.0
  %2007 = vmatpush1.xpose.msra.mxu0 0.0
  %2008 = vmatprep.subr.mxu0 0.0
  %2009 = vmatpush1.xpose.msra.mxu0 0.0
  %2010 = vmatprep.subr.mxu0 0.0
  %2011 = vmatpush1.xpose.msra.mxu0 0.0
  %2012 = vmatprep.subr.mxu0 0.0
  %2013 = vmatpush1.xpose.msra.mxu0 0.0
  %2014 = vmatprep.subr.mxu0 0.0
  %2015 = vmatpush1.xpose.msra.mxu0 0.0
  %2016 = vmatprep.subr.mxu0 0.0
  %2017 = vmatpush1.xpose.msra.mxu0 0.0
  %2018 = vmatprep.subr.mxu0 0.0
  %2019 = vmatpush1.xpose.msra.mxu0 0.0
  %2020 = vmatprep.subr.mxu0 0.0
  %2021 = vmatpush1.xpose.msra.mxu0 0.0
  %2022 = vmatprep.subr.mxu0 0.0
  %2023 = vmatpush1.xpose.msra.mxu0 0.0
  %2024 = vmatprep.subr.mxu0 0.0
  %2025 = vmatpush1.xpose.msra.mxu0 0.0
  %2026 = vmatprep.subr.mxu0 0.0
  %2027 = vmatpush1.xpose.msra.mxu0 0.0
  %2028 = vmatprep.subr.mxu0 0.0
  %2029 = vmatpush1.xpose.msra.mxu0 %v1996
  %2030 = vmatprep.subr.mxu0 0.0
  %2031 = vmatpush2.xpose.msra.mxu0 0.0
  %2032 = vmatprep.subr.mxu0 0.0
  %2033 = vmatpush2.xpose.msra.mxu0 0.0
  %2034 = vmatprep.subr.mxu0 0.0
  %2035 = vmatpush2.xpose.msra.mxu0 0.0
  %2036 = vmatprep.subr.mxu0 0.0
  %2037 = vmatpush2.xpose.msra.mxu0 0.0
  %2038 = vmatprep.subr.mxu0 0.0
  %2039 = vmatpush2.xpose.msra.mxu0 0.0
  %2040 = vmatprep.subr.mxu0 0.0
  %2041 = vmatpush2.xpose.msra.mxu0 0.0
  %2042 = vmatprep.subr.mxu0 0.0
  %2043 = vmatpush2.xpose.msra.mxu0 0.0
  %2044 = vmatprep.subr.mxu0 0.0
  %2045 = vmatpush2.xpose.msra.mxu0 0.0
  %2046 = vmatprep.subr.mxu0 0.0
  %2047 = vmatpush2.xpose.msra.mxu0 0.0
  %2048 = vmatprep.subr.mxu0 0.0
  %2049 = vmatpush2.xpose.msra.mxu0 0.0
  %2050 = vmatprep.subr.mxu0 0.0
  %2051 = vmatpush2.xpose.msra.mxu0 0.0
  %2052 = vmatprep.subr.mxu0 0.0
  %2053 = vmatpush2.xpose.msra.mxu0 0.0
  %2054 = vmatprep.subr.mxu0 0.0
  %2055 = vmatpush2.xpose.msra.mxu0 0.0
  %2056 = vmatprep.subr.mxu0 0.0
  %2057 = vmatpush2.xpose.msra.mxu0 0.0
  %2058 = vmatprep.subr.mxu0 0.0
  %2059 = vmatpush2.xpose.msra.mxu0 0.0
  %2060 = vmatprep.subr.mxu0 0.0
  %2061 = vmatpush2.xpose.msra.mxu0 0.0
  %2062 = vmatprep.mubr.f32.mxu0 0.0
  %2063 = vmatmul.mubr.f32.gmra.mxu0 %v1994
  %v2064 = vpop.f32.mrf.mxu0
  %v2065 = vadd.f32 0.0, %v2064
  %v2066 = vpop.f32.mrf.mxu0
  %2067 = vdwg.mxu0
  %v2068 = vmul.f32 %v2065, 0.17677669
  %v2069 = vadd.f32 %v2068, %v1518
  %v2070 = vsel %vm780, %v2069, -inf
  %2071 = vmax.xlane.f32.xlu0 %v2070
  %v2072 = vpop.xlane.xlu0 %2071
  %v2073 = vsub.f32 %v2069, %v2072
  %v2074 = vmul.f32 %v2073, 1.442695
  %v2075 = vpow.pop %v2074
  %v2076 = vsel %vm780, %v2075, 0.0
  %2077 = vadd.xlane.f32.xlu0 %v2076
  %v2078 = vpop.xlane.xlu0 %2077
  %v2079 = vrcp.pop %v2078
  %v2080 = vmul.f32 %v2075, %v2079
  %2081 = vrot.lane.b32.xlu0 %v609, 32
  %v2082 = vpop.permute.xlu0 %2081
  %v2085 = vsel %vm780, %v2080, 0
  %2087 = vmatprep.subr.mxu0 0.0
  %2088 = vmatpush1.msra.mxu0 0.0
  %2089 = vmatprep.subr.mxu0 0.0
  %2090 = vmatpush1.msra.mxu0 0.0
  %2091 = vmatprep.subr.mxu0 0.0
  %2092 = vmatpush1.msra.mxu0 0.0
  %2093 = vmatprep.subr.mxu0 0.0
  %2094 = vmatpush1.msra.mxu0 0.0
  %2095 = vmatprep.subr.mxu0 0.0
  %2096 = vmatpush1.msra.mxu0 0.0
  %2097 = vmatprep.subr.mxu0 0.0
  %2098 = vmatpush1.msra.mxu0 0.0
  %2099 = vmatprep.subr.mxu0 0.0
  %2100 = vmatpush1.msra.mxu0 0.0
  %2101 = vmatprep.subr.mxu0 0.0
  %2102 = vmatpush1.msra.mxu0 0.0
  %2103 = vmatprep.subr.mxu0 0.0
  %2104 = vmatpush1.msra.mxu0 0.0
  %2105 = vmatprep.subr.mxu0 0.0
  %2106 = vmatpush1.msra.mxu0 0.0
  %2107 = vmatprep.subr.mxu0 0.0
  %2108 = vmatpush1.msra.mxu0 0.0
  %2109 = vmatprep.subr.mxu0 0.0
  %2110 = vmatpush1.msra.mxu0 0.0
  %2111 = vmatprep.subr.mxu0 0.0
  %2112 = vmatpush1.msra.mxu0 0.0
  %2113 = vmatprep.subr.mxu0 0.0
  %2114 = vmatpush1.msra.mxu0 0.0
  %2115 = vmatprep.subr.mxu0 0.0
  %2116 = vmatpush1.msra.mxu0 0.0
  %2117 = vmatprep.subr.mxu0 0.0
  %2118 = vmatpush1.msra.mxu0 %v2082
  %2119 = vmatprep.subr.mxu0 0.0
  %2120 = vmatpush2.msra.mxu0 0.0
  %2121 = vmatprep.subr.mxu0 0.0
  %2122 = vmatpush2.msra.mxu0 0.0
  %2123 = vmatprep.subr.mxu0 0.0
  %2124 = vmatpush2.msra.mxu0 0.0
  %2125 = vmatprep.subr.mxu0 0.0
  %2126 = vmatpush2.msra.mxu0 0.0
  %2127 = vmatprep.subr.mxu0 0.0
  %2128 = vmatpush2.msra.mxu0 0.0
  %2129 = vmatprep.subr.mxu0 0.0
  %2130 = vmatpush2.msra.mxu0 0.0
  %2131 = vmatprep.subr.mxu0 0.0
  %2132 = vmatpush2.msra.mxu0 0.0
  %2133 = vmatprep.subr.mxu0 0.0
  %2134 = vmatpush2.msra.mxu0 0.0
  %2135 = vmatprep.subr.mxu0 0.0
  %2136 = vmatpush2.msra.mxu0 0.0
  %2137 = vmatprep.subr.mxu0 0.0
  %2138 = vmatpush2.msra.mxu0 0.0
  %2139 = vmatprep.subr.mxu0 0.0
  %2140 = vmatpush2.msra.mxu0 0.0
  %2141 = vmatprep.subr.mxu0 0.0
  %2142 = vmatpush2.msra.mxu0 0.0
  %2143 = vmatprep.subr.mxu0 0.0
  %2144 = vmatpush2.msra.mxu0 0.0
  %2145 = vmatprep.subr.mxu0 0.0
  %2146 = vmatpush2.msra.mxu0 0.0
  %2147 = vmatprep.subr.mxu0 0.0
  %2148 = vmatpush2.msra.mxu0 0.0
  %2149 = vmatprep.subr.mxu0 0.0
  %2150 = vmatpush2.msra.mxu0 0.0
  %2151 = vmatprep.mubr.f32.mxu0 0.0
  %2152 = vmatmul.mubr.f32.gmra.mxu0 %v2085
  %v2153 = vpop.f32.mrf.mxu0
  %v2154 = vadd.f32 0.0, %v2153
  %v2155 = vpop.f32.mrf.mxu0
  %2156 = vdwg.mxu0
  %v2158 = vrot.slane %v2154, 2
  %2159 = vrot.lane.b32.xlu0 %v2158, 32
  %v2160 = vpop.permute.xlu0 %2159
  %v2162 = vrot.slane %v2154, 4
  %2163 = vrot.lane.b32.xlu0 %v2162, 64
  %v2164 = vpop.permute.xlu0 %2163
  %v2166 = vrot.slane %v2154, 6
  %2167 = vrot.lane.b32.xlu0 %v2166, 96
  %v2168 = vpop.permute.xlu0 %2167
  %v2170 = vsel %vm697, %v2154, %v2160
  %v2171 = vsel %vm879, %v2170, %v2164
  %v2172 = vsel %vm881, %v2171, %v2168
  %2173 = vst [vmem:[#allocation2 + $0xe] sm:$0x3] %v2172
  %v2174 = vld [vmem:[#allocation2] sm:$0xff]
  %v2175 = vld [vmem:[#allocation2 + $0x8] sm:$0xff]
  %s2176 = scalar_lea.vmem %s3, 192
  %v2177 = vld [vmem:[%s2176] sm:$0xf]
  %v2178 = vld [vmem:[%s2176 + $0x4] sm:$0xf]
  %v2179 = vld [vmem:[%s2176 + $0x8] sm:$0xf]
  %v2180 = vld [vmem:[%s2176 + $0xc] sm:$0xf]
  %v2181 = vld [vmem:[%s2176 + $0x10] sm:$0xf]
  %v2182 = vld [vmem:[%s2176 + $0x14] sm:$0xf]
  %v2183 = vld [vmem:[%s2176 + $0x18] sm:$0xf]
  %v2184 = vld [vmem:[%s2176 + $0x1c] sm:$0xf]
  %v2185 = vld [vmem:[%s2176 + $0x20] sm:$0xf]
  %v2186 = vld [vmem:[%s2176 + $0x24] sm:$0xf]
  %v2187 = vld [vmem:[%s2176 + $0x28] sm:$0xf]
  %v2188 = vld [vmem:[%s2176 + $0x2c] sm:$0xf]
  %v2189 = vld [vmem:[%s2176 + $0x30] sm:$0xf]
  %v2190 = vld [vmem:[%s2176 + $0x34] sm:$0xf]
  %v2191 = vld [vmem:[%s2176 + $0x38] sm:$0xf]
  %v2192 = vld [vmem:[%s2176 + $0x3c] sm:$0xf]
  %v2193 = vpack.c.bf16 %v2175, %v2174
  %v2210 = vunpack.c.l.b16 %v2177
  %v2211 = vunpack.c.l.b16 %v2178
  %v2212 = vunpack.c.l.b16 %v2179
  %v2213 = vunpack.c.l.b16 %v2180
  %v2214 = vunpack.c.l.b16 %v2181
  %v2215 = vunpack.c.l.b16 %v2182
  %v2216 = vunpack.c.l.b16 %v2183
  %v2217 = vunpack.c.l.b16 %v2184
  %v2218 = vunpack.c.l.b16 %v2185
  %v2219 = vunpack.c.l.b16 %v2186
  %v2220 = vunpack.c.l.b16 %v2187
  %v2221 = vunpack.c.l.b16 %v2188
  %v2222 = vunpack.c.l.b16 %v2189
  %v2223 = vunpack.c.l.b16 %v2190
  %v2224 = vunpack.c.l.b16 %v2191
  %v2225 = vunpack.c.l.b16 %v2192
  %v2226 = vpack.c.b16 %v2211, %v2210
  %v2227 = vpack.c.b16 %v2213, %v2212
  %v2228 = vpack.c.b16 %v2215, %v2214
  %v2229 = vpack.c.b16 %v2217, %v2216
  %v2230 = vpack.c.b16 %v2219, %v2218
  %v2231 = vpack.c.b16 %v2221, %v2220
  %v2232 = vpack.c.b16 %v2223, %v2222
  %v2233 = vpack.c.b16 %v2225, %v2224
  %2242 = vmatprep.subr.bf16.mxu0 0
  %2243 = vmatpush1.bf16.msra.mxu0 %v2233
  %2244 = vmatprep.subr.bf16.mxu0 0
  %2245 = vmatpush1.bf16.msra.mxu0 %v2232
  %2246 = vmatprep.subr.bf16.mxu0 0
  %2247 = vmatpush1.bf16.msra.mxu0 %v2231
  %2248 = vmatprep.subr.bf16.mxu0 0
  %2249 = vmatpush1.bf16.msra.mxu0 %v2230
  %2250 = vmatprep.subr.bf16.mxu0 0
  %2251 = vmatpush1.bf16.msra.mxu0 %v2229
  %2252 = vmatprep.subr.bf16.mxu0 0
  %2253 = vmatpush1.bf16.msra.mxu0 %v2228
  %2254 = vmatprep.subr.bf16.mxu0 0
  %2255 = vmatpush1.bf16.msra.mxu0 %v2227
  %2256 = vmatprep.subr.bf16.mxu0 0
  %2257 = vmatpush1.bf16.msra.mxu0 %v2226
  %2258 = vmatprep.subr.bf16.mxu0 0
  %2259 = vmatpush2.bf16.msra.mxu0 0
  %2260 = vmatprep.subr.bf16.mxu0 0
  %2261 = vmatpush2.bf16.msra.mxu0 0
  %2262 = vmatprep.subr.bf16.mxu0 0
  %2263 = vmatpush2.bf16.msra.mxu0 0
  %2264 = vmatprep.subr.bf16.mxu0 0
  %2265 = vmatpush2.bf16.msra.mxu0 0
  %2266 = vmatprep.subr.bf16.mxu0 0
  %2267 = vmatpush2.bf16.msra.mxu0 0
  %2268 = vmatprep.subr.bf16.mxu0 0
  %2269 = vmatpush2.bf16.msra.mxu0 0
  %2270 = vmatprep.subr.bf16.mxu0 0
  %2271 = vmatpush2.bf16.msra.mxu0 0
  %2272 = vmatprep.subr.bf16.mxu0 0
  %2273 = vmatpush2.bf16.msra.mxu0 0
  %2274 = vmatprep.mubr.bf16.mxu0 0
  %2275 = vmatmul.mubr.bf16.gmra.mxu0 %v2193
  %v2276 = vpop.f32.mrf.mxu0
  %v2277 = vadd.f32 %v365, %v2276
  %v2278 = vpop.f32.mrf.mxu0
  %v2279 = vpop.f32.mrf.mxu0
  %v2280 = vadd.f32 %v366, %v2279
  %v2281 = vpop.f32.mrf.mxu0
  %2282 = vdwg.mxu0
  %v2283 = vmul.f32 %v2277, 0.5
  %v2284 = vmul.f32 %v2280, 0.5
  %s2285 = scalar_lea.vmem %s3, 256
  %v2286 = vld [vmem:[%s2285] sm:$0xf]
  %v2287 = vld [vmem:[%s2285 + $0x4] sm:$0xf]
  %v2288 = vld [vmem:[%s2285 + $0x8] sm:$0xf]
  %v2289 = vld [vmem:[%s2285 + $0xc] sm:$0xf]
  %v2290 = vld [vmem:[%s2285 + $0x10] sm:$0xf]
  %v2291 = vld [vmem:[%s2285 + $0x14] sm:$0xf]
  %v2292 = vld [vmem:[%s2285 + $0x18] sm:$0xf]
  %v2293 = vld [vmem:[%s2285 + $0x1c] sm:$0xf]
  %v2294 = vld [vmem:[%s2285 + $0x20] sm:$0xf]
  %v2295 = vld [vmem:[%s2285 + $0x24] sm:$0xf]
  %v2296 = vld [vmem:[%s2285 + $0x28] sm:$0xf]
  %v2297 = vld [vmem:[%s2285 + $0x2c] sm:$0xf]
  %v2298 = vld [vmem:[%s2285 + $0x30] sm:$0xf]
  %v2299 = vld [vmem:[%s2285 + $0x34] sm:$0xf]
  %v2300 = vld [vmem:[%s2285 + $0x38] sm:$0xf]
  %v2301 = vld [vmem:[%s2285 + $0x3c] sm:$0xf]
  %v2302 = vpack.c.bf16 %v2284, %v2283
  %v2303 = vld [vmem:[%s5 + $0x3] sm:$0x1]
  %v2304 = vlaneseq
  %v2305 = vshrl.u32 %v2304, 7
  %v2306 = vsub.s32 0, %v2305
  %v2307 = vrot.slane %v2303, %v2306
  %v2324 = vunpack.c.l.b16 %v2286
  %v2325 = vunpack.c.l.b16 %v2287
  %v2326 = vunpack.c.l.b16 %v2288
  %v2327 = vunpack.c.l.b16 %v2289
  %v2328 = vunpack.c.l.b16 %v2290
  %v2329 = vunpack.c.l.b16 %v2291
  %v2330 = vunpack.c.l.b16 %v2292
  %v2331 = vunpack.c.l.b16 %v2293
  %v2332 = vunpack.c.l.b16 %v2294
  %v2333 = vunpack.c.l.b16 %v2295
  %v2334 = vunpack.c.l.b16 %v2296
  %v2335 = vunpack.c.l.b16 %v2297
  %v2336 = vunpack.c.l.b16 %v2298
  %v2337 = vunpack.c.l.b16 %v2299
  %v2338 = vunpack.c.l.b16 %v2300
  %v2339 = vunpack.c.l.b16 %v2301
  %v2340 = vpack.c.b16 %v2325, %v2324
  %v2341 = vpack.c.b16 %v2327, %v2326
  %v2342 = vpack.c.b16 %v2329, %v2328
  %v2343 = vpack.c.b16 %v2331, %v2330
  %v2344 = vpack.c.b16 %v2333, %v2332
  %v2345 = vpack.c.b16 %v2335, %v2334
  %v2346 = vpack.c.b16 %v2337, %v2336
  %v2347 = vpack.c.b16 %v2339, %v2338
  %2356 = vmatprep.subr.bf16.mxu0 0
  %2357 = vmatpush1.bf16.msra.mxu0 %v2347
  %2358 = vmatprep.subr.bf16.mxu0 0
  %2359 = vmatpush1.bf16.msra.mxu0 %v2346
  %2360 = vmatprep.subr.bf16.mxu0 0
  %2361 = vmatpush1.bf16.msra.mxu0 %v2345
  %2362 = vmatprep.subr.bf16.mxu0 0
  %2363 = vmatpush1.bf16.msra.mxu0 %v2344
  %2364 = vmatprep.subr.bf16.mxu0 0
  %2365 = vmatpush1.bf16.msra.mxu0 %v2343
  %2366 = vmatprep.subr.bf16.mxu0 0
  %2367 = vmatpush1.bf16.msra.mxu0 %v2342
  %2368 = vmatprep.subr.bf16.mxu0 0
  %2369 = vmatpush1.bf16.msra.mxu0 %v2341
  %2370 = vmatprep.subr.bf16.mxu0 0
  %2371 = vmatpush1.bf16.msra.mxu0 %v2340
  %2372 = vmatprep.subr.bf16.mxu0 0
  %2373 = vmatpush2.bf16.msra.mxu0 0
  %2374 = vmatprep.subr.bf16.mxu0 0
  %2375 = vmatpush2.bf16.msra.mxu0 0
  %2376 = vmatprep.subr.bf16.mxu0 0
  %2377 = vmatpush2.bf16.msra.mxu0 0
  %2378 = vmatprep.subr.bf16.mxu0 0
  %2379 = vmatpush2.bf16.msra.mxu0 0
  %2380 = vmatprep.subr.bf16.mxu0 0
  %2381 = vmatpush2.bf16.msra.mxu0 0
  %2382 = vmatprep.subr.bf16.mxu0 0
  %2383 = vmatpush2.bf16.msra.mxu0 0
  %2384 = vmatprep.subr.bf16.mxu0 0
  %2385 = vmatpush2.bf16.msra.mxu0 0
  %2386 = vmatprep.subr.bf16.mxu0 0
  %2387 = vmatpush2.bf16.msra.mxu0 0
  %2388 = vmatprep.mubr.bf16.mxu0 0
  %2389 = vmatmul.mubr.bf16.gmra.mxu0 %v2302
  %v2390 = vpop.f32.mrf.mxu0
  %v2391 = vadd.f32 %v2307, %v2390
  %v2392 = vpop.f32.mrf.mxu0
  %v2393 = vpop.f32.mrf.mxu0
  %v2394 = vadd.f32 %v2307, %v2393
  %v2395 = vpop.f32.mrf.mxu0
  %2396 = vdwg.mxu0
  %v2397 = vmax.f32 %v2391, 0.0
  %v2398 = vmax.f32 %v2394, 0.0
  %s2399 = scalar_lea.vmem %s3, 320
  %v2400 = vld [vmem:[%s2399] sm:$0xf]
  %v2401 = vld [vmem:[%s2399 + $0x4] sm:$0xf]
  %v2402 = vld [vmem:[%s2399 + $0x8] sm:$0xf]
  %v2403 = vld [vmem:[%s2399 + $0xc] sm:$0xf]
  %v2404 = vld [vmem:[%s2399 + $0x10] sm:$0xf]
  %v2405 = vld [vmem:[%s2399 + $0x14] sm:$0xf]
  %v2406 = vld [vmem:[%s2399 + $0x18] sm:$0xf]
  %v2407 = vld [vmem:[%s2399 + $0x1c] sm:$0xf]
  %v2408 = vld [vmem:[%s2399 + $0x20] sm:$0xf]
  %v2409 = vld [vmem:[%s2399 + $0x24] sm:$0xf]
  %v2410 = vld [vmem:[%s2399 + $0x28] sm:$0xf]
  %v2411 = vld [vmem:[%s2399 + $0x2c] sm:$0xf]
  %v2412 = vld [vmem:[%s2399 + $0x30] sm:$0xf]
  %v2413 = vld [vmem:[%s2399 + $0x34] sm:$0xf]
  %v2414 = vld [vmem:[%s2399 + $0x38] sm:$0xf]
  %v2415 = vld [vmem:[%s2399 + $0x3c] sm:$0xf]
  %v2416 = vpack.c.bf16 %v2398, %v2397
  %v2417 = vld [vmem:[%s5 + $0x4] sm:$0x1]
  %v2418 = vlaneseq
  %v2419 = vshrl.u32 %v2418, 7
  %v2420 = vsub.s32 0, %v2419
  %v2421 = vrot.slane %v2417, %v2420
  %v2438 = vunpack.c.l.b16 %v2400
  %v2439 = vunpack.c.l.b16 %v2401
  %v2440 = vunpack.c.l.b16 %v2402
  %v2441 = vunpack.c.l.b16 %v2403
  %v2442 = vunpack.c.l.b16 %v2404
  %v2443 = vunpack.c.l.b16 %v2405
  %v2444 = vunpack.c.l.b16 %v2406
  %v2445 = vunpack.c.l.b16 %v2407
  %v2446 = vunpack.c.l.b16 %v2408
  %v2447 = vunpack.c.l.b16 %v2409
  %v2448 = vunpack.c.l.b16 %v2410
  %v2449 = vunpack.c.l.b16 %v2411
  %v2450 = vunpack.c.l.b16 %v2412
  %v2451 = vunpack.c.l.b16 %v2413
  %v2452 = vunpack.c.l.b16 %v2414
  %v2453 = vunpack.c.l.b16 %v2415
  %v2454 = vpack.c.b16 %v2439, %v2438
  %v2455 = vpack.c.b16 %v2441, %v2440
  %v2456 = vpack.c.b16 %v2443, %v2442
  %v2457 = vpack.c.b16 %v2445, %v2444
  %v2458 = vpack.c.b16 %v2447, %v2446
  %v2459 = vpack.c.b16 %v2449, %v2448
  %v2460 = vpack.c.b16 %v2451, %v2450
  %v2461 = vpack.c.b16 %v2453, %v2452
  %2470 = vmatprep.subr.bf16.mxu0 0
  %2471 = vmatpush1.bf16.msra.mxu0 %v2461
  %2472 = vmatprep.subr.bf16.mxu0 0
  %2473 = vmatpush1.bf16.msra.mxu0 %v2460
  %2474 = vmatprep.subr.bf16.mxu0 0
  %2475 = vmatpush1.bf16.msra.mxu0 %v2459
  %2476 = vmatprep.subr.bf16.mxu0 0
  %2477 = vmatpush1.bf16.msra.mxu0 %v2458
  %2478 = vmatprep.subr.bf16.mxu0 0
  %2479 = vmatpush1.bf16.msra.mxu0 %v2457
  %2480 = vmatprep.subr.bf16.mxu0 0
  %2481 = vmatpush1.bf16.msra.mxu0 %v2456
  %2482 = vmatprep.subr.bf16.mxu0 0
  %2483 = vmatpush1.bf16.msra.mxu0 %v2455
  %2484 = vmatprep.subr.bf16.mxu0 0
  %2485 = vmatpush1.bf16.msra.mxu0 %v2454
  %2486 = vmatprep.subr.bf16.mxu0 0
  %2487 = vmatpush2.bf16.msra.mxu0 0
  %2488 = vmatprep.subr.bf16.mxu0 0
  %2489 = vmatpush2.bf16.msra.mxu0 0
  %2490 = vmatprep.subr.bf16.mxu0 0
  %2491 = vmatpush2.bf16.msra.mxu0 0
  %2492 = vmatprep.subr.bf16.mxu0 0
  %2493 = vmatpush2.bf16.msra.mxu0 0
  %2494 = vmatprep.subr.bf16.mxu0 0
  %2495 = vmatpush2.bf16.msra.mxu0 0
  %2496 = vmatprep.subr.bf16.mxu0 0
  %2497 = vmatpush2.bf16.msra.mxu0 0
  %2498 = vmatprep.subr.bf16.mxu0 0
  %2499 = vmatpush2.bf16.msra.mxu0 0
  %2500 = vmatprep.subr.bf16.mxu0 0
  %2501 = vmatpush2.bf16.msra.mxu0 0
  %2502 = vmatprep.mubr.bf16.mxu0 0
  %2503 = vmatmul.mubr.bf16.gmra.mxu0 %v2416
  %v2504 = vpop.f32.mrf.mxu0
  %v2505 = vadd.f32 %v2421, %v2504
  %v2506 = vpop.f32.mrf.mxu0
  %v2507 = vpop.f32.mrf.mxu0
  %v2508 = vadd.f32 %v2421, %v2507
  %v2509 = vpop.f32.mrf.mxu0
  %2510 = vdwg.mxu0
  %v2511 = vmax.f32 %v2505, 0.0
  %v2512 = vmax.f32 %v2508, 0.0
  %s2513 = scalar_lea.vmem %s3, 384
  %v2514 = vld [vmem:[%s2513] sm:$0xf]
  %v2515 = vld [vmem:[%s2513 + $0x4] sm:$0xf]
  %v2516 = vld [vmem:[%s2513 + $0x8] sm:$0xf]
  %v2517 = vld [vmem:[%s2513 + $0xc] sm:$0xf]
  %v2518 = vld [vmem:[%s2513 + $0x10] sm:$0xf]
  %v2519 = vld [vmem:[%s2513 + $0x14] sm:$0xf]
  %v2520 = vld [vmem:[%s2513 + $0x18] sm:$0xf]
  %v2521 = vld [vmem:[%s2513 + $0x1c] sm:$0xf]
  %v2522 = vld [vmem:[%s2513 + $0x20] sm:$0xf]
  %v2523 = vld [vmem:[%s2513 + $0x24] sm:$0xf]
  %v2524 = vld [vmem:[%s2513 + $0x28] sm:$0xf]
  %v2525 = vld [vmem:[%s2513 + $0x2c] sm:$0xf]
  %v2526 = vld [vmem:[%s2513 + $0x30] sm:$0xf]
  %v2527 = vld [vmem:[%s2513 + $0x34] sm:$0xf]
  %v2528 = vld [vmem:[%s2513 + $0x38] sm:$0xf]
  %v2529 = vld [vmem:[%s2513 + $0x3c] sm:$0xf]
  %v2530 = vpack.c.bf16 %v2512, %v2511
  %v2531 = vld [vmem:[%s5 + $0x5] sm:$0x1]
  %v2532 = vlaneseq
  %v2533 = vshrl.u32 %v2532, 7
  %v2534 = vsub.s32 0, %v2533
  %v2535 = vrot.slane %v2531, %v2534
  %v2552 = vunpack.c.l.b16 %v2514
  %v2553 = vunpack.c.l.b16 %v2515
  %v2554 = vunpack.c.l.b16 %v2516
  %v2555 = vunpack.c.l.b16 %v2517
  %v2556 = vunpack.c.l.b16 %v2518
  %v2557 = vunpack.c.l.b16 %v2519
  %v2558 = vunpack.c.l.b16 %v2520
  %v2559 = vunpack.c.l.b16 %v2521
  %v2560 = vunpack.c.l.b16 %v2522
  %v2561 = vunpack.c.l.b16 %v2523
  %v2562 = vunpack.c.l.b16 %v2524
  %v2563 = vunpack.c.l.b16 %v2525
  %v2564 = vunpack.c.l.b16 %v2526
  %v2565 = vunpack.c.l.b16 %v2527
  %v2566 = vunpack.c.l.b16 %v2528
  %v2567 = vunpack.c.l.b16 %v2529
  %v2568 = vpack.c.b16 %v2553, %v2552
  %v2569 = vpack.c.b16 %v2555, %v2554
  %v2570 = vpack.c.b16 %v2557, %v2556
  %v2571 = vpack.c.b16 %v2559, %v2558
  %v2572 = vpack.c.b16 %v2561, %v2560
  %v2573 = vpack.c.b16 %v2563, %v2562
  %v2574 = vpack.c.b16 %v2565, %v2564
  %v2575 = vpack.c.b16 %v2567, %v2566
  %2584 = vmatprep.subr.bf16.mxu0 0
  %2585 = vmatpush1.bf16.msra.mxu0 %v2575
  %2586 = vmatprep.subr.bf16.mxu0 0
  %2587 = vmatpush1.bf16.msra.mxu0 %v2574
  %2588 = vmatprep.subr.bf16.mxu0 0
  %2589 = vmatpush1.bf16.msra.mxu0 %v2573
  %2590 = vmatprep.subr.bf16.mxu0 0
  %2591 = vmatpush1.bf16.msra.mxu0 %v2572
  %2592 = vmatprep.subr.bf16.mxu0 0
  %2593 = vmatpush1.bf16.msra.mxu0 %v2571
  %2594 = vmatprep.subr.bf16.mxu0 0
  %2595 = vmatpush1.bf16.msra.mxu0 %v2570
  %2596 = vmatprep.subr.bf16.mxu0 0
  %2597 = vmatpush1.bf16.msra.mxu0 %v2569
  %2598 = vmatprep.subr.bf16.mxu0 0
  %2599 = vmatpush1.bf16.msra.mxu0 %v2568
  %2600 = vmatprep.subr.bf16.mxu0 0
  %2601 = vmatpush2.bf16.msra.mxu0 0
  %2602 = vmatprep.subr.bf16.mxu0 0
  %2603 = vmatpush2.bf16.msra.mxu0 0
  %2604 = vmatprep.subr.bf16.mxu0 0
  %2605 = vmatpush2.bf16.msra.mxu0 0
  %2606 = vmatprep.subr.bf16.mxu0 0
  %2607 = vmatpush2.bf16.msra.mxu0 0
  %2608 = vmatprep.subr.bf16.mxu0 0
  %2609 = vmatpush2.bf16.msra.mxu0 0
  %2610 = vmatprep.subr.bf16.mxu0 0
  %2611 = vmatpush2.bf16.msra.mxu0 0
  %2612 = vmatprep.subr.bf16.mxu0 0
  %2613 = vmatpush2.bf16.msra.mxu0 0
  %2614 = vmatprep.subr.bf16.mxu0 0
  %2615 = vmatpush2.bf16.msra.mxu0 0
  %2616 = vmatprep.mubr.bf16.mxu0 0
  %2617 = vmatmul.mubr.bf16.gmra.mxu0 %v2530
  %v2618 = vpop.f32.mrf.mxu0
  %v2619 = vadd.f32 %v2535, %v2618
  %v2620 = vpop.f32.mrf.mxu0
  %v2621 = vpop.f32.mrf.mxu0
  %v2622 = vadd.f32 %v2535, %v2621
  %v2623 = vpop.f32.mrf.mxu0
  %2624 = vdwg.mxu0
  %v2625 = vmax.f32 %v2619, 0.0
  %v2626 = vmax.f32 %v2622, 0.0
  %s2627 = scalar_lea.vmem %s3, 448
  %v2628 = vld [vmem:[%s2627] sm:$0xf]
  %v2629 = vld [vmem:[%s2627 + $0x4] sm:$0xf]
  %v2630 = vld [vmem:[%s2627 + $0x8] sm:$0xf]
  %v2631 = vld [vmem:[%s2627 + $0xc] sm:$0xf]
  %v2632 = vld [vmem:[%s2627 + $0x10] sm:$0xf]
  %v2633 = vld [vmem:[%s2627 + $0x14] sm:$0xf]
  %v2634 = vld [vmem:[%s2627 + $0x18] sm:$0xf]
  %v2635 = vld [vmem:[%s2627 + $0x1c] sm:$0xf]
  %v2636 = vld [vmem:[%s2627 + $0x20] sm:$0xf]
  %v2637 = vld [vmem:[%s2627 + $0x24] sm:$0xf]
  %v2638 = vld [vmem:[%s2627 + $0x28] sm:$0xf]
  %v2639 = vld [vmem:[%s2627 + $0x2c] sm:$0xf]
  %v2640 = vld [vmem:[%s2627 + $0x30] sm:$0xf]
  %v2641 = vld [vmem:[%s2627 + $0x34] sm:$0xf]
  %v2642 = vld [vmem:[%s2627 + $0x38] sm:$0xf]
  %v2643 = vld [vmem:[%s2627 + $0x3c] sm:$0xf]
  %v2644 = vpack.c.bf16 %v2626, %v2625
  %v2645 = vld [vmem:[%s5 + $0x6] sm:$0x1]
  %v2646 = vlaneseq
  %v2647 = vshrl.u32 %v2646, 7
  %v2648 = vsub.s32 0, %v2647
  %v2649 = vrot.slane %v2645, %v2648
  %v2666 = vunpack.c.l.b16 %v2628
  %v2667 = vunpack.c.l.b16 %v2629
  %v2668 = vunpack.c.l.b16 %v2630
  %v2669 = vunpack.c.l.b16 %v2631
  %v2670 = vunpack.c.l.b16 %v2632
  %v2671 = vunpack.c.l.b16 %v2633
  %v2672 = vunpack.c.l.b16 %v2634
  %v2673 = vunpack.c.l.b16 %v2635
  %v2674 = vunpack.c.l.b16 %v2636
  %v2675 = vunpack.c.l.b16 %v2637
  %v2676 = vunpack.c.l.b16 %v2638
  %v2677 = vunpack.c.l.b16 %v2639
  %v2678 = vunpack.c.l.b16 %v2640
  %v2679 = vunpack.c.l.b16 %v2641
  %v2680 = vunpack.c.l.b16 %v2642
  %v2681 = vunpack.c.l.b16 %v2643
  %v2682 = vpack.c.b16 %v2667, %v2666
  %v2683 = vpack.c.b16 %v2669, %v2668
  %v2684 = vpack.c.b16 %v2671, %v2670
  %v2685 = vpack.c.b16 %v2673, %v2672
  %v2686 = vpack.c.b16 %v2675, %v2674
  %v2687 = vpack.c.b16 %v2677, %v2676
  %v2688 = vpack.c.b16 %v2679, %v2678
  %v2689 = vpack.c.b16 %v2681, %v2680
  %2698 = vmatprep.subr.bf16.mxu0 0
  %2699 = vmatpush1.bf16.msra.mxu0 %v2689
  %2700 = vmatprep.subr.bf16.mxu0 0
  %2701 = vmatpush1.bf16.msra.mxu0 %v2688
  %2702 = vmatprep.subr.bf16.mxu0 0
  %2703 = vmatpush1.bf16.msra.mxu0 %v2687
  %2704 = vmatprep.subr.bf16.mxu0 0
  %2705 = vmatpush1.bf16.msra.mxu0 %v2686
  %2706 = vmatprep.subr.bf16.mxu0 0
  %2707 = vmatpush1.bf16.msra.mxu0 %v2685
  %2708 = vmatprep.subr.bf16.mxu0 0
  %2709 = vmatpush1.bf16.msra.mxu0 %v2684
  %2710 = vmatprep.subr.bf16.mxu0 0
  %2711 = vmatpush1.bf16.msra.mxu0 %v2683
  %2712 = vmatprep.subr.bf16.mxu0 0
  %2713 = vmatpush1.bf16.msra.mxu0 %v2682
  %2714 = vmatprep.subr.bf16.mxu0 0
  %2715 = vmatpush2.bf16.msra.mxu0 0
  %2716 = vmatprep.subr.bf16.mxu0 0
  %2717 = vmatpush2.bf16.msra.mxu0 0
  %2718 = vmatprep.subr.bf16.mxu0 0
  %2719 = vmatpush2.bf16.msra.mxu0 0
  %2720 = vmatprep.subr.bf16.mxu0 0
  %2721 = vmatpush2.bf16.msra.mxu0 0
  %2722 = vmatprep.subr.bf16.mxu0 0
  %2723 = vmatpush2.bf16.msra.mxu0 0
  %2724 = vmatprep.subr.bf16.mxu0 0
  %2725 = vmatpush2.bf16.msra.mxu0 0
  %2726 = vmatprep.subr.bf16.mxu0 0
  %2727 = vmatpush2.bf16.msra.mxu0 0
  %2728 = vmatprep.subr.bf16.mxu0 0
  %2729 = vmatpush2.bf16.msra.mxu0 0
  %2730 = vmatprep.mubr.bf16.mxu0 0
  %2731 = vmatmul.mubr.bf16.gmra.mxu0 %v2644
  %v2732 = vpop.f32.mrf.mxu0
  %v2733 = vadd.f32 %v2649, %v2732
  %v2734 = vpop.f32.mrf.mxu0
  %v2735 = vpop.f32.mrf.mxu0
  %v2736 = vadd.f32 %v2649, %v2735
  %v2737 = vpop.f32.mrf.mxu0
  %2738 = vdwg.mxu0
  %2739 = vst [vmem:[%s6] sm:$0xff] %v2733
  %2740 = vst [vmem:[%s6 + $0x8] sm:$0xff] %v2736
  // Predicated region
  $region26: #{attention_network_forward.1} parent=0 // pred_check
    _
  $region27: #{attention_network_forward.1} parent=0 // pred_check_branch
    %2742 = sbr.rel (0) target = $region29
  $region28: #{attention_network_forward.1} parent=0 // pred_region
    _
  $region29: #{attention_network_forward.1} parent=0 // pred_fallthru
    _
  // Predicated region
  $region30: #{attention_network_forward.1} parent=0 // pred_check
    _
  $region31: #{attention_network_forward.1} parent=0 // pred_check_branch
    %2744 = sbr.rel (0) target = $region33
  $region32: #{attention_network_forward.1} parent=0 // pred_region
    _
  $region33: #{attention_network_forward.1} parent=0 // pred_fallthru
    _

</llo_original>
